<compile_context>
chip_gen: v7x
topology: tpu7x:2x2x1
jax: 0.10.0
libtpu: 0.0.40
codegen_flags: <defaults>
</compile_context>

<pallas_src>
import math
import functools

import numpy as np
import jax
import jax.numpy as jnp
from jax import lax
from jax.experimental import pallas as pl
from jax.experimental.pallas import tpu as pltpu


# ----------------------------- in-kernel math helpers -----------------------------

def _erf_approx(x):
    # Abramowitz & Stegun 7.1.26 rational approximation, |error| < 1.5e-7.
    ax = jnp.abs(x)
    t = 1.0 / (1.0 + 0.3275911 * ax)
    poly = t * (0.254829592 + t * (-0.284496736 + t * (1.421413741
               + t * (-1.453152027 + t * 1.061405429))))
    y = 1.0 - poly * jnp.exp(-ax * ax)
    return jnp.where(x < 0.0, -y, y)


def _gelu_exact(x):
    # erf-form GELU (matches torch.nn.GELU() default to ~1e-7).
    return 0.5 * x * (1.0 + _erf_approx(x * 0.7071067811865476))


# ----------------------------- fused Pallas kernel -----------------------------

def _fused_times_conv_kernel(x_ref, w1_ref, b1_ref, w2_ref, b2_ref, mask_ref,
                             o_ref, vp1_ref, vp2_ref, *, T, length, W, K):
    """conv1 -> GELU -> conv2 on one batch element's folded image, fully in VMEM.

    x_ref    : (T, Cin)          raw input rows (time padding to `length` is done here)
    w*_ref   : (K*K, Cin, Cout)  merged Inception_Block_V1 weights, tap-major (ky*K+kx)
    b*_ref   : (1, Cout)         merged biases
    mask_ref : (K, FH, 1)        per-kx W-boundary validity masks, FH = length + 2*pad*W
    o_ref    : (T, Cout)
    vp*_ref  : (FH + 2*pad, C)   zero-padded flat-image scratch (halo + shift slack)
    """
    pad = K // 2
    FH = length + 2 * pad * W          # H-halo-padded flattened length
    lead = pad + pad * W               # rows before the first data row in vp

    def conv_same(vp_ref, data, w_ref, b_ref):
        cout = w_ref.shape[-1]
        # zero-filled flat image: [pad slack | pad*W H-halo | data | zeros | H-halo | slack]
        vp_ref[...] = jnp.zeros_like(vp_ref)
        vp_ref[pl.ds(lead, data.shape[0]), :] = data
        # one shifted + masked copy per kx tap (mask kills W-boundary wrap-around)
        shifted = [vp_ref[pl.ds(kx, FH), :] * mask_ref[kx] for kx in range(K)]
        acc = jnp.zeros((length, cout), jnp.float32)
        for ky in range(K):
            row0 = ky * W
            for kx in range(K):
                acc = acc + jnp.dot(shifted[kx][row0:row0 + length, :],
                                    w_ref[ky * K + kx],
                                    preferred_element_type=jnp.float32)
        return acc + b_ref[...]

    y = conv_same(vp1_ref, x_ref[...].astype(jnp.float32), w1_ref, b1_ref)
    y = _gelu_exact(y)                 # intermediate (length, d_ff) stays in VMEM
    y = conv_same(vp2_ref, y, w2_ref, b2_ref)
    o_ref[...] = y[:T, :].astype(o_ref.dtype)


def fused_times_conv(x, w1p, b1, w2p, b2, *, length, W, K):
    """One fused Inception(conv1) + GELU + Inception(conv2) pass for one period fold."""
    B, T, Cin = x.shape
    Cmid = w1p.shape[-1]
    Cout = w2p.shape[-1]
    pad = K // 2
    FH = length + 2 * pad * W
    FHp = FH + 2 * pad

    # Per-kx validity mask (static): flat row r is fold-column (r % W); a tap shift
    # dx = kx - pad is valid only if 0 <= (r % W) + dx < W, otherwise it would wrap
    # into the neighbouring fold row and must read the implicit zero padding.
    col = np.arange(FH) % W
    masks = np.stack(
        [((col + (kx - pad) >= 0) & (col + (kx - pad) < W)) for kx in range(K)], 0)
    masks = jnp.asarray(masks[..., None].astype(np.float32))       # (K, FH, 1)

    kern = functools.partial(_fused_times_conv_kernel,
                             T=T, length=length, W=W, K=K)
    return pl.pallas_call(
        kern,
        out_shape=jax.ShapeDtypeStruct((B, T, Cout), jnp.float32),
        grid=(B,),
        in_specs=[
            pl.BlockSpec((None, T, Cin), lambda b: (b, 0, 0)),
            pl.BlockSpec((K * K, Cin, Cmid), lambda b: (0, 0, 0)),
            pl.BlockSpec((1, Cmid), lambda b: (0, 0)),
            pl.BlockSpec((K * K, Cmid, Cout), lambda b: (0, 0, 0)),
            pl.BlockSpec((1, Cout), lambda b: (0, 0)),
            pl.BlockSpec((K, FH, 1), lambda b: (0, 0, 0)),
        ],
        out_specs=pl.BlockSpec((None, T, Cout), lambda b: (b, 0, 0)),
        scratch_shapes=[pltpu.VMEM((FHp, Cin), jnp.float32),
                        pltpu.VMEM((FHp, Cmid), jnp.float32)],
        compiler_params=pltpu.CompilerParams(
            dimension_semantics=("parallel",),          # batch steps shard across TCs (v7x)
            vmem_limit_bytes=48 * 1024 * 1024),         # explicit budget (v7x: 64 MiB phys)
    )(x, w1p, b1, w2p, b2, masks)


# ----------------------------- TimesBlock forward -----------------------------

def fft_for_period(x, k):
    """FFT_for_Period: concrete periods (np ints) and period weights (B, k)."""
    xf = jnp.fft.rfft(x, axis=1)
    amp = jnp.abs(xf)                                 # (B, F, N)
    freq = amp.mean(axis=0).mean(axis=-1)             # (F,)
    freq = freq.at[0].set(0.0)
    _, top_idx = lax.top_k(freq, k)
    # TODO(synk): data-dependent period selection forces a host sync and a fresh
    # compile per distinct period set (dynamic shapes), so it stays in plain JAX.
    top_idx = np.asarray(jax.device_get(top_idx))
    assert np.all(top_idx > 0), "top-k picked the DC bin; period undefined"
    periods = x.shape[1] // top_idx
    period_weight = amp.mean(axis=-1)[:, top_idx]     # (B, k)
    return periods, period_weight


def times_block_forward(x, periods, period_weight, conv1, conv2, seq_len, pred_len):
    B, T, N = x.shape
    total = seq_len + pred_len
    w1m, b1m = conv1                                   # merged (K,K,Cin,Cmid), (Cmid,)
    w2m, b2m = conv2
    K = w1m.shape[0]
    Cin, Cmid = w1m.shape[2], w1m.shape[3]
    Cout = w2m.shape[3]
    # tap-major packing for the kernel: (K, K, Cin, Cout) -> (K*K, Cin, Cout)
    w1p = w1m.reshape(K * K, Cin, Cmid)
    w2p = w2m.reshape(K * K, Cmid, Cout)
    b1r = b1m.reshape(1, Cmid)
    b2r = b2m.reshape(1, Cout)

    res = []
    for p in periods:
        p = int(p)
        length = ((total + p - 1) // p) * p            # time-padding handled in-kernel
        out = fused_times_conv(x, w1p, b1r, w2p, b2r, length=length, W=p, K=K)
        res.append(out)
    res = jnp.stack(res, axis=-1)                      # (B, T, N, k)
    pw = jax.nn.softmax(period_weight, axis=1)         # (B, k)
    res = jnp.sum(res * pw[:, None, None, :], axis=-1)
    return res + x


# ----------------------------- parameter init -----------------------------

def init_inception_params(key, cin, cout, num_kernels):
    """kaiming_normal_(fan_out, relu) per branch; returns merged (exact) + raw kernels."""
    K = 2 * (num_kernels - 1) + 1
    merged = np.zeros((K, K, cin, cout), np.float32)
    bias_acc = np.zeros((cout,), np.float32)
    raw = []
    for j in range(num_kernels):
        kj = 2 * j + 1
        key, sub = jax.random.split(key)
        std = math.sqrt(2.0 / (cout * kj * kj))
        wj = jax.random.normal(sub, (kj, kj, cin, cout), jnp.float32) * std
        bj = jnp.zeros((cout,), jnp.float32)           # nn.init.constant_(bias, 0)
        raw.append((wj, bj))
        off = (K - kj) // 2
        merged[off:off + kj, off:off + kj] += np.asarray(wj) / num_kernels
        bias_acc += np.asarray(bj) / num_kernels       # merged bias = mean(bias_j)
    return (jnp.asarray(merged), jnp.asarray(bias_acc)), raw, key


# ----------------------------- pure-JAX reference -----------------------------

def _ref_inception(x, kernels):
    outs = []
    for wj, bj in kernels:
        y = lax.conv_general_dilated(
            x, wj, window_strides=(1, 1), padding="SAME",
            dimension_numbers=("NHWC", "HWIO", "NHWC")) + bj
        outs.append(y)
    return jnp.mean(jnp.stack(outs, axis=-1), axis=-1)


def ref_times_block(x, periods, period_weight, kernels1, kernels2, seq_len, pred_len):
    B, T, N = x.shape
    total = seq_len + pred_len
    res = []
    for i in range(len(periods)):
        p = int(periods[i])
        if total % p != 0:
            length = (total // p + 1) * p
            out = jnp.concatenate(
                [x, jnp.zeros((B, length - total, N), x.dtype)], axis=1)
        else:
            length = total
            out = x
        out = out.reshape(B, length // p, p, N)
        out = _ref_inception(out, kernels1)
        out = jax.nn.gelu(out, approximate=False)
        out = _ref_inception(out, kernels2)
        out = out.reshape(B, length, N)[:, :total, :]
        res.append(out)
    res = jnp.stack(res, axis=-1)
    pw = jax.nn.softmax(period_weight, axis=1)
    return jnp.sum(res * pw[:, None, None, :], axis=-1) + x


# ----------------------------- main -----------------------------

if __name__ == "__main__":
    B = 2
    seq_len, pred_len = 12, 4
    d_model, d_ff = 16, 32
    top_k, num_kernels = 2, 3
    T = seq_len + pred_len

    key = jax.random.PRNGKey(0)
    key, kx = jax.random.split(key)
    x = jax.random.normal(kx, (B, T, d_model), jnp.float32)

    conv1, raw1, key = init_inception_params(key, d_model, d_ff, num_kernels)
    conv2, raw2, key = init_inception_params(key, d_ff, d_model, num_kernels)

    periods, period_weight = fft_for_period(x, top_k)

    out = times_block_forward(x, periods, period_weight, conv1, conv2,
                              seq_len, pred_len)
    out = jax.block_until_ready(out)

    ref = ref_times_block(x, periods, period_weight, raw1, raw2,
                          seq_len, pred_len)
    ref = jax.block_until_ready(ref)

    assert out.shape == (B, T, d_model)
    max_err = float(jnp.max(jnp.abs(out - ref)))
    assert bool(jnp.allclose(out, ref, rtol=5e-2, atol=5e-2)), (
        "max abs err = %g" % max_err)
    print("KERNEL_OK")
</pallas_src>

<mosaic_0001>
module attributes {stable_mosaic.version = 11 : i64} {
  func.func @_fused_times_conv_kernel(%arg0: i32, %arg1: memref<1x16x16xf32, #tpu.memory_space<vmem>>, %arg2: memref<25x16x32xf32, #tpu.memory_space<vmem>>, %arg3: memref<1x32xf32, #tpu.memory_space<vmem>>, %arg4: memref<25x32x16xf32, #tpu.memory_space<vmem>>, %arg5: memref<1x16xf32, #tpu.memory_space<vmem>>, %arg6: memref<5x80x1xf32, #tpu.memory_space<vmem>>, %arg7: memref<1x16x16xf32, #tpu.memory_space<vmem>>, %arg8: memref<84x16xf32, #tpu.memory_space<vmem>>, %arg9: memref<84x32xf32, #tpu.memory_space<vmem>>) attributes {dimension_semantics = [#tpu.dimension_semantics<parallel>], iteration_bounds = array<i64: 2>, scalar_prefetch = 0 : i64, scratch_operands = 2 : i64, tpu.core_type = #tpu.core_type<tc>, window_params = [{transform_indices = @transform_0, window_bounds = array<i64: 1, 16, 16>}, {pipeline_mode = #tpu.pipeline_mode<synchronous>, transform_indices = @transform_1, window_bounds = array<i64: 25, 16, 32>}, {pipeline_mode = #tpu.pipeline_mode<synchronous>, transform_indices = @transform_2, window_bounds = array<i64: 1, 32>}, {pipeline_mode = #tpu.pipeline_mode<synchronous>, transform_indices = @transform_3, window_bounds = array<i64: 25, 32, 16>}, {pipeline_mode = #tpu.pipeline_mode<synchronous>, transform_indices = @transform_4, window_bounds = array<i64: 1, 16>}, {pipeline_mode = #tpu.pipeline_mode<synchronous>, transform_indices = @transform_5, window_bounds = array<i64: 5, 80, 1>}, {transform_indices = @transform_6, window_bounds = array<i64: 1, 16, 16>}]} {
    %c0 = arith.constant 0 : index
    %c0_0 = arith.constant 0 : index
    %c0_1 = arith.constant 0 : index
    %0 = vector.load %arg1[%c0, %c0_0, %c0_1] : memref<1x16x16xf32, #tpu.memory_space<vmem>>, vector<1x16x16xf32>
    %1 = vector.shape_cast %0 : vector<1x16x16xf32> to vector<16x16xf32>
    %cst = arith.constant 0.000000e+00 : f32
    %2 = vector.broadcast %cst : f32 to vector<84x16xf32>
    %c0_2 = arith.constant 0 : index
    %c0_3 = arith.constant 0 : index
    %3 = vector.load %arg8[%c0_2, %c0_3] : memref<84x16xf32, #tpu.memory_space<vmem>>, vector<84x16xf32>
    tpu.vector_store %arg8[%c0_2, %c0_3], %2 {strides = array<i32>} : memref<84x16xf32, #tpu.memory_space<vmem>>, vector<84x16xf32>,
    %c34 = arith.constant 34 : index
    %c0_4 = arith.constant 0 : index
    %4 = vector.load %arg8[%c34, %c0_4] : memref<84x16xf32, #tpu.memory_space<vmem>>, vector<16x16xf32>
    tpu.vector_store %arg8[%c34, %c0_4], %1 {strides = array<i32>} : memref<84x16xf32, #tpu.memory_space<vmem>>, vector<16x16xf32>,
    %c0_5 = arith.constant 0 : index
    %c0_6 = arith.constant 0 : index
    %5 = vector.load %arg8[%c0_5, %c0_6] : memref<84x16xf32, #tpu.memory_space<vmem>>, vector<80x16xf32>
    %c0_7 = arith.constant 0 : index
    %c0_8 = arith.constant 0 : index
    %c0_9 = arith.constant 0 : index
    %6 = vector.load %arg6[%c0_7, %c0_8, %c0_9] : memref<5x80x1xf32, #tpu.memory_space<vmem>>, vector<1x80x1xf32>
    %7 = vector.shape_cast %6 : vector<1x80x1xf32> to vector<80x1xf32>
    %8 = vector.broadcast %7 : vector<80x1xf32> to vector<80x16xf32>
    %9 = arith.mulf %5, %8 : vector<80x16xf32>
    %c1 = arith.constant 1 : index
    %c0_10 = arith.constant 0 : index
    %10 = vector.load %arg8[%c1, %c0_10] : memref<84x16xf32, #tpu.memory_space<vmem>>, vector<80x16xf32>
    %c1_11 = arith.constant 1 : index
    %c0_12 = arith.constant 0 : index
    %c0_13 = arith.constant 0 : index
    %11 = vector.load %arg6[%c1_11, %c0_12, %c0_13] : memref<5x80x1xf32, #tpu.memory_space<vmem>>, vector<1x80x1xf32>
    %12 = vector.shape_cast %11 : vector<1x80x1xf32> to vector<80x1xf32>
    %13 = vector.broadcast %12 : vector<80x1xf32> to vector<80x16xf32>
    %14 = arith.mulf %10, %13 : vector<80x16xf32>
    %c2 = arith.constant 2 : index
    %c0_14 = arith.constant 0 : index
    %15 = vector.load %arg8[%c2, %c0_14] : memref<84x16xf32, #tpu.memory_space<vmem>>, vector<80x16xf32>
    %c2_15 = arith.constant 2 : index
    %c0_16 = arith.constant 0 : index
    %c0_17 = arith.constant 0 : index
    %16 = vector.load %arg6[%c2_15, %c0_16, %c0_17] : memref<5x80x1xf32, #tpu.memory_space<vmem>>, vector<1x80x1xf32>
    %17 = vector.shape_cast %16 : vector<1x80x1xf32> to vector<80x1xf32>
    %18 = vector.broadcast %17 : vector<80x1xf32> to vector<80x16xf32>
    %19 = arith.mulf %15, %18 : vector<80x16xf32>
    %c3 = arith.constant 3 : index
    %c0_18 = arith.constant 0 : index
    %20 = vector.load %arg8[%c3, %c0_18] : memref<84x16xf32, #tpu.memory_space<vmem>>, vector<80x16xf32>
    %c3_19 = arith.constant 3 : index
    %c0_20 = arith.constant 0 : index
    %c0_21 = arith.constant 0 : index
    %21 = vector.load %arg6[%c3_19, %c0_20, %c0_21] : memref<5x80x1xf32, #tpu.memory_space<vmem>>, vector<1x80x1xf32>
    %22 = vector.shape_cast %21 : vector<1x80x1xf32> to vector<80x1xf32>
    %23 = vector.broadcast %22 : vector<80x1xf32> to vector<80x16xf32>
    %24 = arith.mulf %20, %23 : vector<80x16xf32>
    %c4 = arith.constant 4 : index
    %c0_22 = arith.constant 0 : index
    %25 = vector.load %arg8[%c4, %c0_22] : memref<84x16xf32, #tpu.memory_space<vmem>>, vector<80x16xf32>
    %c4_23 = arith.constant 4 : index
    %c0_24 = arith.constant 0 : index
    %c0_25 = arith.constant 0 : index
    %26 = vector.load %arg6[%c4_23, %c0_24, %c0_25] : memref<5x80x1xf32, #tpu.memory_space<vmem>>, vector<1x80x1xf32>
    %27 = vector.shape_cast %26 : vector<1x80x1xf32> to vector<80x1xf32>
    %28 = vector.broadcast %27 : vector<80x1xf32> to vector<80x16xf32>
    %29 = arith.mulf %25, %28 : vector<80x16xf32>
    %cst_26 = arith.constant 0.000000e+00 : f32
    %30 = vector.broadcast %cst_26 : f32 to vector<16x32xf32>
    %31 = vector.extract_strided_slice %9 {offsets = [0, 0], sizes = [16, 16], strides = [1, 1]} : vector<80x16xf32> to vector<16x16xf32>
    %c0_27 = arith.constant 0 : index
    %c0_28 = arith.constant 0 : index
    %c0_29 = arith.constant 0 : index
    %32 = vector.load %arg2[%c0_27, %c0_28, %c0_29] : memref<25x16x32xf32, #tpu.memory_space<vmem>>, vector<1x16x32xf32>
    %33 = vector.shape_cast %32 : vector<1x16x32xf32> to vector<16x32xf32>
    %cst_30 = arith.constant dense<0.000000e+00> : vector<16x32xf32>
    %34 = tpu.matmul %31, %33, %cst_30 {dimension_numbers = #tpu.dot_dimension_numbers<[1], [0], [0], [1], [0, 0, 1, 1], [], []>} : vector<16x16xf32>, vector<16x32xf32>, vector<16x32xf32> -> vector<16x32xf32>
    %35 = arith.addf %30, %34 : vector<16x32xf32>
    %36 = vector.extract_strided_slice %14 {offsets = [0, 0], sizes = [16, 16], strides = [1, 1]} : vector<80x16xf32> to vector<16x16xf32>
    %c1_31 = arith.constant 1 : index
    %c0_32 = arith.constant 0 : index
    %c0_33 = arith.constant 0 : index
    %37 = vector.load %arg2[%c1_31, %c0_32, %c0_33] : memref<25x16x32xf32, #tpu.memory_space<vmem>>, vector<1x16x32xf32>
    %38 = vector.shape_cast %37 : vector<1x16x32xf32> to vector<16x32xf32>
    %cst_34 = arith.constant dense<0.000000e+00> : vector<16x32xf32>
    %39 = tpu.matmul %36, %38, %cst_34 {dimension_numbers = #tpu.dot_dimension_numbers<[1], [0], [0], [1], [0, 0, 1, 1], [], []>} : vector<16x16xf32>, vector<16x32xf32>, vector<16x32xf32> -> vector<16x32xf32>
    %40 = arith.addf %35, %39 : vector<16x32xf32>
    %41 = vector.extract_strided_slice %19 {offsets = [0, 0], sizes = [16, 16], strides = [1, 1]} : vector<80x16xf32> to vector<16x16xf32>
    %c2_35 = arith.constant 2 : index
    %c0_36 = arith.constant 0 : index
    %c0_37 = arith.constant 0 : index
    %42 = vector.load %arg2[%c2_35, %c0_36, %c0_37] : memref<25x16x32xf32, #tpu.memory_space<vmem>>, vector<1x16x32xf32>
    %43 = vector.shape_cast %42 : vector<1x16x32xf32> to vector<16x32xf32>
    %cst_38 = arith.constant dense<0.000000e+00> : vector<16x32xf32>
    %44 = tpu.matmul %41, %43, %cst_38 {dimension_numbers = #tpu.dot_dimension_numbers<[1], [0], [0], [1], [0, 0, 1, 1], [], []>} : vector<16x16xf32>, vector<16x32xf32>, vector<16x32xf32> -> vector<16x32xf32>
    %45 = arith.addf %40, %44 : vector<16x32xf32>
    %46 = vector.extract_strided_slice %24 {offsets = [0, 0], sizes = [16, 16], strides = [1, 1]} : vector<80x16xf32> to vector<16x16xf32>
    %c3_39 = arith.constant 3 : index
    %c0_40 = arith.constant 0 : index
    %c0_41 = arith.constant 0 : index
    %47 = vector.load %arg2[%c3_39, %c0_40, %c0_41] : memref<25x16x32xf32, #tpu.memory_space<vmem>>, vector<1x16x32xf32>
    %48 = vector.shape_cast %47 : vector<1x16x32xf32> to vector<16x32xf32>
    %cst_42 = arith.constant dense<0.000000e+00> : vector<16x32xf32>
    %49 = tpu.matmul %46, %48, %cst_42 {dimension_numbers = #tpu.dot_dimension_numbers<[1], [0], [0], [1], [0, 0, 1, 1], [], []>} : vector<16x16xf32>, vector<16x32xf32>, vector<16x32xf32> -> vector<16x32xf32>
    %50 = arith.addf %45, %49 : vector<16x32xf32>
    %51 = vector.extract_strided_slice %29 {offsets = [0, 0], sizes = [16, 16], strides = [1, 1]} : vector<80x16xf32> to vector<16x16xf32>
    %c4_43 = arith.constant 4 : index
    %c0_44 = arith.constant 0 : index
    %c0_45 = arith.constant 0 : index
    %52 = vector.load %arg2[%c4_43, %c0_44, %c0_45] : memref<25x16x32xf32, #tpu.memory_space<vmem>>, vector<1x16x32xf32>
    %53 = vector.shape_cast %52 : vector<1x16x32xf32> to vector<16x32xf32>
    %cst_46 = arith.constant dense<0.000000e+00> : vector<16x32xf32>
    %54 = tpu.matmul %51, %53, %cst_46 {dimension_numbers = #tpu.dot_dimension_numbers<[1], [0], [0], [1], [0, 0, 1, 1], [], []>} : vector<16x16xf32>, vector<16x32xf32>, vector<16x32xf32> -> vector<16x32xf32>
    %55 = arith.addf %50, %54 : vector<16x32xf32>
    %56 = vector.extract_strided_slice %9 {offsets = [16, 0], sizes = [16, 16], strides = [1, 1]} : vector<80x16xf32> to vector<16x16xf32>
    %c5 = arith.constant 5 : index
    %c0_47 = arith.constant 0 : index
    %c0_48 = arith.constant 0 : index
    %57 = vector.load %arg2[%c5, %c0_47, %c0_48] : memref<25x16x32xf32, #tpu.memory_space<vmem>>, vector<1x16x32xf32>
    %58 = vector.shape_cast %57 : vector<1x16x32xf32> to vector<16x32xf32>
    %cst_49 = arith.constant dense<0.000000e+00> : vector<16x32xf32>
    %59 = tpu.matmul %56, %58, %cst_49 {dimension_numbers = #tpu.dot_dimension_numbers<[1], [0], [0], [1], [0, 0, 1, 1], [], []>} : vector<16x16xf32>, vector<16x32xf32>, vector<16x32xf32> -> vector<16x32xf32>
    %60 = arith.addf %55, %59 : vector<16x32xf32>
    %61 = vector.extract_strided_slice %14 {offsets = [16, 0], sizes = [16, 16], strides = [1, 1]} : vector<80x16xf32> to vector<16x16xf32>
    %c6 = arith.constant 6 : index
    %c0_50 = arith.constant 0 : index
    %c0_51 = arith.constant 0 : index
    %62 = vector.load %arg2[%c6, %c0_50, %c0_51] : memref<25x16x32xf32, #tpu.memory_space<vmem>>, vector<1x16x32xf32>
    %63 = vector.shape_cast %62 : vector<1x16x32xf32> to vector<16x32xf32>
    %cst_52 = arith.constant dense<0.000000e+00> : vector<16x32xf32>
    %64 = tpu.matmul %61, %63, %cst_52 {dimension_numbers = #tpu.dot_dimension_numbers<[1], [0], [0], [1], [0, 0, 1, 1], [], []>} : vector<16x16xf32>, vector<16x32xf32>, vector<16x32xf32> -> vector<16x32xf32>
    %65 = arith.addf %60, %64 : vector<16x32xf32>
    %66 = vector.extract_strided_slice %19 {offsets = [16, 0], sizes = [16, 16], strides = [1, 1]} : vector<80x16xf32> to vector<16x16xf32>
    %c7 = arith.constant 7 : index
    %c0_53 = arith.constant 0 : index
    %c0_54 = arith.constant 0 : index
    %67 = vector.load %arg2[%c7, %c0_53, %c0_54] : memref<25x16x32xf32, #tpu.memory_space<vmem>>, vector<1x16x32xf32>
    %68 = vector.shape_cast %67 : vector<1x16x32xf32> to vector<16x32xf32>
    %cst_55 = arith.constant dense<0.000000e+00> : vector<16x32xf32>
    %69 = tpu.matmul %66, %68, %cst_55 {dimension_numbers = #tpu.dot_dimension_numbers<[1], [0], [0], [1], [0, 0, 1, 1], [], []>} : vector<16x16xf32>, vector<16x32xf32>, vector<16x32xf32> -> vector<16x32xf32>
    %70 = arith.addf %65, %69 : vector<16x32xf32>
    %71 = vector.extract_strided_slice %24 {offsets = [16, 0], sizes = [16, 16], strides = [1, 1]} : vector<80x16xf32> to vector<16x16xf32>
    %c8 = arith.constant 8 : index
    %c0_56 = arith.constant 0 : index
    %c0_57 = arith.constant 0 : index
    %72 = vector.load %arg2[%c8, %c0_56, %c0_57] : memref<25x16x32xf32, #tpu.memory_space<vmem>>, vector<1x16x32xf32>
    %73 = vector.shape_cast %72 : vector<1x16x32xf32> to vector<16x32xf32>
    %cst_58 = arith.constant dense<0.000000e+00> : vector<16x32xf32>
    %74 = tpu.matmul %71, %73, %cst_58 {dimension_numbers = #tpu.dot_dimension_numbers<[1], [0], [0], [1], [0, 0, 1, 1], [], []>} : vector<16x16xf32>, vector<16x32xf32>, vector<16x32xf32> -> vector<16x32xf32>
    %75 = arith.addf %70, %74 : vector<16x32xf32>
    %76 = vector.extract_strided_slice %29 {offsets = [16, 0], sizes = [16, 16], strides = [1, 1]} : vector<80x16xf32> to vector<16x16xf32>
    %c9 = arith.constant 9 : index
    %c0_59 = arith.constant 0 : index
    %c0_60 = arith.constant 0 : index
    %77 = vector.load %arg2[%c9, %c0_59, %c0_60] : memref<25x16x32xf32, #tpu.memory_space<vmem>>, vector<1x16x32xf32>
    %78 = vector.shape_cast %77 : vector<1x16x32xf32> to vector<16x32xf32>
    %cst_61 = arith.constant dense<0.000000e+00> : vector<16x32xf32>
    %79 = tpu.matmul %76, %78, %cst_61 {dimension_numbers = #tpu.dot_dimension_numbers<[1], [0], [0], [1], [0, 0, 1, 1], [], []>} : vector<16x16xf32>, vector<16x32xf32>, vector<16x32xf32> -> vector<16x32xf32>
    %80 = arith.addf %75, %79 : vector<16x32xf32>
    %81 = vector.extract_strided_slice %9 {offsets = [32, 0], sizes = [16, 16], strides = [1, 1]} : vector<80x16xf32> to vector<16x16xf32>
    %c10 = arith.constant 10 : index
    %c0_62 = arith.constant 0 : index
    %c0_63 = arith.constant 0 : index
    %82 = vector.load %arg2[%c10, %c0_62, %c0_63] : memref<25x16x32xf32, #tpu.memory_space<vmem>>, vector<1x16x32xf32>
    %83 = vector.shape_cast %82 : vector<1x16x32xf32> to vector<16x32xf32>
    %cst_64 = arith.constant dense<0.000000e+00> : vector<16x32xf32>
    %84 = tpu.matmul %81, %83, %cst_64 {dimension_numbers = #tpu.dot_dimension_numbers<[1], [0], [0], [1], [0, 0, 1, 1], [], []>} : vector<16x16xf32>, vector<16x32xf32>, vector<16x32xf32> -> vector<16x32xf32>
    %85 = arith.addf %80, %84 : vector<16x32xf32>
    %86 = vector.extract_strided_slice %14 {offsets = [32, 0], sizes = [16, 16], strides = [1, 1]} : vector<80x16xf32> to vector<16x16xf32>
    %c11 = arith.constant 11 : index
    %c0_65 = arith.constant 0 : index
    %c0_66 = arith.constant 0 : index
    %87 = vector.load %arg2[%c11, %c0_65, %c0_66] : memref<25x16x32xf32, #tpu.memory_space<vmem>>, vector<1x16x32xf32>
    %88 = vector.shape_cast %87 : vector<1x16x32xf32> to vector<16x32xf32>
    %cst_67 = arith.constant dense<0.000000e+00> : vector<16x32xf32>
    %89 = tpu.matmul %86, %88, %cst_67 {dimension_numbers = #tpu.dot_dimension_numbers<[1], [0], [0], [1], [0, 0, 1, 1], [], []>} : vector<16x16xf32>, vector<16x32xf32>, vector<16x32xf32> -> vector<16x32xf32>
    %90 = arith.addf %85, %89 : vector<16x32xf32>
    %91 = vector.extract_strided_slice %19 {offsets = [32, 0], sizes = [16, 16], strides = [1, 1]} : vector<80x16xf32> to vector<16x16xf32>
    %c12 = arith.constant 12 : index
    %c0_68 = arith.constant 0 : index
    %c0_69 = arith.constant 0 : index
    %92 = vector.load %arg2[%c12, %c0_68, %c0_69] : memref<25x16x32xf32, #tpu.memory_space<vmem>>, vector<1x16x32xf32>
    %93 = vector.shape_cast %92 : vector<1x16x32xf32> to vector<16x32xf32>
    %cst_70 = arith.constant dense<0.000000e+00> : vector<16x32xf32>
    %94 = tpu.matmul %91, %93, %cst_70 {dimension_numbers = #tpu.dot_dimension_numbers<[1], [0], [0], [1], [0, 0, 1, 1], [], []>} : vector<16x16xf32>, vector<16x32xf32>, vector<16x32xf32> -> vector<16x32xf32>
    %95 = arith.addf %90, %94 : vector<16x32xf32>
    %96 = vector.extract_strided_slice %24 {offsets = [32, 0], sizes = [16, 16], strides = [1, 1]} : vector<80x16xf32> to vector<16x16xf32>
    %c13 = arith.constant 13 : index
    %c0_71 = arith.constant 0 : index
    %c0_72 = arith.constant 0 : index
    %97 = vector.load %arg2[%c13, %c0_71, %c0_72] : memref<25x16x32xf32, #tpu.memory_space<vmem>>, vector<1x16x32xf32>
    %98 = vector.shape_cast %97 : vector<1x16x32xf32> to vector<16x32xf32>
    %cst_73 = arith.constant dense<0.000000e+00> : vector<16x32xf32>
    %99 = tpu.matmul %96, %98, %cst_73 {dimension_numbers = #tpu.dot_dimension_numbers<[1], [0], [0], [1], [0, 0, 1, 1], [], []>} : vector<16x16xf32>, vector<16x32xf32>, vector<16x32xf32> -> vector<16x32xf32>
    %100 = arith.addf %95, %99 : vector<16x32xf32>
    %101 = vector.extract_strided_slice %29 {offsets = [32, 0], sizes = [16, 16], strides = [1, 1]} : vector<80x16xf32> to vector<16x16xf32>
    %c14 = arith.constant 14 : index
    %c0_74 = arith.constant 0 : index
    %c0_75 = arith.constant 0 : index
    %102 = vector.load %arg2[%c14, %c0_74, %c0_75] : memref<25x16x32xf32, #tpu.memory_space<vmem>>, vector<1x16x32xf32>
    %103 = vector.shape_cast %102 : vector<1x16x32xf32> to vector<16x32xf32>
    %cst_76 = arith.constant dense<0.000000e+00> : vector<16x32xf32>
    %104 = tpu.matmul %101, %103, %cst_76 {dimension_numbers = #tpu.dot_dimension_numbers<[1], [0], [0], [1], [0, 0, 1, 1], [], []>} : vector<16x16xf32>, vector<16x32xf32>, vector<16x32xf32> -> vector<16x32xf32>
    %105 = arith.addf %100, %104 : vector<16x32xf32>
    %106 = vector.extract_strided_slice %9 {offsets = [48, 0], sizes = [16, 16], strides = [1, 1]} : vector<80x16xf32> to vector<16x16xf32>
    %c15 = arith.constant 15 : index
    %c0_77 = arith.constant 0 : index
    %c0_78 = arith.constant 0 : index
    %107 = vector.load %arg2[%c15, %c0_77, %c0_78] : memref<25x16x32xf32, #tpu.memory_space<vmem>>, vector<1x16x32xf32>
    %108 = vector.shape_cast %107 : vector<1x16x32xf32> to vector<16x32xf32>
    %cst_79 = arith.constant dense<0.000000e+00> : vector<16x32xf32>
    %109 = tpu.matmul %106, %108, %cst_79 {dimension_numbers = #tpu.dot_dimension_numbers<[1], [0], [0], [1], [0, 0, 1, 1], [], []>} : vector<16x16xf32>, vector<16x32xf32>, vector<16x32xf32> -> vector<16x32xf32>
    %110 = arith.addf %105, %109 : vector<16x32xf32>
    %111 = vector.extract_strided_slice %14 {offsets = [48, 0], sizes = [16, 16], strides = [1, 1]} : vector<80x16xf32> to vector<16x16xf32>
    %c16 = arith.constant 16 : index
    %c0_80 = arith.constant 0 : index
    %c0_81 = arith.constant 0 : index
    %112 = vector.load %arg2[%c16, %c0_80, %c0_81] : memref<25x16x32xf32, #tpu.memory_space<vmem>>, vector<1x16x32xf32>
    %113 = vector.shape_cast %112 : vector<1x16x32xf32> to vector<16x32xf32>
    %cst_82 = arith.constant dense<0.000000e+00> : vector<16x32xf32>
    %114 = tpu.matmul %111, %113, %cst_82 {dimension_numbers = #tpu.dot_dimension_numbers<[1], [0], [0], [1], [0, 0, 1, 1], [], []>} : vector<16x16xf32>, vector<16x32xf32>, vector<16x32xf32> -> vector<16x32xf32>
    %115 = arith.addf %110, %114 : vector<16x32xf32>
    %116 = vector.extract_strided_slice %19 {offsets = [48, 0], sizes = [16, 16], strides = [1, 1]} : vector<80x16xf32> to vector<16x16xf32>
    %c17 = arith.constant 17 : index
    %c0_83 = arith.constant 0 : index
    %c0_84 = arith.constant 0 : index
    %117 = vector.load %arg2[%c17, %c0_83, %c0_84] : memref<25x16x32xf32, #tpu.memory_space<vmem>>, vector<1x16x32xf32>
    %118 = vector.shape_cast %117 : vector<1x16x32xf32> to vector<16x32xf32>
    %cst_85 = arith.constant dense<0.000000e+00> : vector<16x32xf32>
    %119 = tpu.matmul %116, %118, %cst_85 {dimension_numbers = #tpu.dot_dimension_numbers<[1], [0], [0], [1], [0, 0, 1, 1], [], []>} : vector<16x16xf32>, vector<16x32xf32>, vector<16x32xf32> -> vector<16x32xf32>
    %120 = arith.addf %115, %119 : vector<16x32xf32>
    %121 = vector.extract_strided_slice %24 {offsets = [48, 0], sizes = [16, 16], strides = [1, 1]} : vector<80x16xf32> to vector<16x16xf32>
    %c18 = arith.constant 18 : index
    %c0_86 = arith.constant 0 : index
    %c0_87 = arith.constant 0 : index
    %122 = vector.load %arg2[%c18, %c0_86, %c0_87] : memref<25x16x32xf32, #tpu.memory_space<vmem>>, vector<1x16x32xf32>
    %123 = vector.shape_cast %122 : vector<1x16x32xf32> to vector<16x32xf32>
    %cst_88 = arith.constant dense<0.000000e+00> : vector<16x32xf32>
    %124 = tpu.matmul %121, %123, %cst_88 {dimension_numbers = #tpu.dot_dimension_numbers<[1], [0], [0], [1], [0, 0, 1, 1], [], []>} : vector<16x16xf32>, vector<16x32xf32>, vector<16x32xf32> -> vector<16x32xf32>
    %125 = arith.addf %120, %124 : vector<16x32xf32>
    %126 = vector.extract_strided_slice %29 {offsets = [48, 0], sizes = [16, 16], strides = [1, 1]} : vector<80x16xf32> to vector<16x16xf32>
    %c19 = arith.constant 19 : index
    %c0_89 = arith.constant 0 : index
    %c0_90 = arith.constant 0 : index
    %127 = vector.load %arg2[%c19, %c0_89, %c0_90] : memref<25x16x32xf32, #tpu.memory_space<vmem>>, vector<1x16x32xf32>
    %128 = vector.shape_cast %127 : vector<1x16x32xf32> to vector<16x32xf32>
    %cst_91 = arith.constant dense<0.000000e+00> : vector<16x32xf32>
    %129 = tpu.matmul %126, %128, %cst_91 {dimension_numbers = #tpu.dot_dimension_numbers<[1], [0], [0], [1], [0, 0, 1, 1], [], []>} : vector<16x16xf32>, vector<16x32xf32>, vector<16x32xf32> -> vector<16x32xf32>
    %130 = arith.addf %125, %129 : vector<16x32xf32>
    %131 = vector.extract_strided_slice %9 {offsets = [64, 0], sizes = [16, 16], strides = [1, 1]} : vector<80x16xf32> to vector<16x16xf32>
    %c20 = arith.constant 20 : index
    %c0_92 = arith.constant 0 : index
    %c0_93 = arith.constant 0 : index
    %132 = vector.load %arg2[%c20, %c0_92, %c0_93] : memref<25x16x32xf32, #tpu.memory_space<vmem>>, vector<1x16x32xf32>
    %133 = vector.shape_cast %132 : vector<1x16x32xf32> to vector<16x32xf32>
    %cst_94 = arith.constant dense<0.000000e+00> : vector<16x32xf32>
    %134 = tpu.matmul %131, %133, %cst_94 {dimension_numbers = #tpu.dot_dimension_numbers<[1], [0], [0], [1], [0, 0, 1, 1], [], []>} : vector<16x16xf32>, vector<16x32xf32>, vector<16x32xf32> -> vector<16x32xf32>
    %135 = arith.addf %130, %134 : vector<16x32xf32>
    %136 = vector.extract_strided_slice %14 {offsets = [64, 0], sizes = [16, 16], strides = [1, 1]} : vector<80x16xf32> to vector<16x16xf32>
    %c21 = arith.constant 21 : index
    %c0_95 = arith.constant 0 : index
    %c0_96 = arith.constant 0 : index
    %137 = vector.load %arg2[%c21, %c0_95, %c0_96] : memref<25x16x32xf32, #tpu.memory_space<vmem>>, vector<1x16x32xf32>
    %138 = vector.shape_cast %137 : vector<1x16x32xf32> to vector<16x32xf32>
    %cst_97 = arith.constant dense<0.000000e+00> : vector<16x32xf32>
    %139 = tpu.matmul %136, %138, %cst_97 {dimension_numbers = #tpu.dot_dimension_numbers<[1], [0], [0], [1], [0, 0, 1, 1], [], []>} : vector<16x16xf32>, vector<16x32xf32>, vector<16x32xf32> -> vector<16x32xf32>
    %140 = arith.addf %135, %139 : vector<16x32xf32>
    %141 = vector.extract_strided_slice %19 {offsets = [64, 0], sizes = [16, 16], strides = [1, 1]} : vector<80x16xf32> to vector<16x16xf32>
    %c22 = arith.constant 22 : index
    %c0_98 = arith.constant 0 : index
    %c0_99 = arith.constant 0 : index
    %142 = vector.load %arg2[%c22, %c0_98, %c0_99] : memref<25x16x32xf32, #tpu.memory_space<vmem>>, vector<1x16x32xf32>
    %143 = vector.shape_cast %142 : vector<1x16x32xf32> to vector<16x32xf32>
    %cst_100 = arith.constant dense<0.000000e+00> : vector<16x32xf32>
    %144 = tpu.matmul %141, %143, %cst_100 {dimension_numbers = #tpu.dot_dimension_numbers<[1], [0], [0], [1], [0, 0, 1, 1], [], []>} : vector<16x16xf32>, vector<16x32xf32>, vector<16x32xf32> -> vector<16x32xf32>
    %145 = arith.addf %140, %144 : vector<16x32xf32>
    %146 = vector.extract_strided_slice %24 {offsets = [64, 0], sizes = [16, 16], strides = [1, 1]} : vector<80x16xf32> to vector<16x16xf32>
    %c23 = arith.constant 23 : index
    %c0_101 = arith.constant 0 : index
    %c0_102 = arith.constant 0 : index
    %147 = vector.load %arg2[%c23, %c0_101, %c0_102] : memref<25x16x32xf32, #tpu.memory_space<vmem>>, vector<1x16x32xf32>
    %148 = vector.shape_cast %147 : vector<1x16x32xf32> to vector<16x32xf32>
    %cst_103 = arith.constant dense<0.000000e+00> : vector<16x32xf32>
    %149 = tpu.matmul %146, %148, %cst_103 {dimension_numbers = #tpu.dot_dimension_numbers<[1], [0], [0], [1], [0, 0, 1, 1], [], []>} : vector<16x16xf32>, vector<16x32xf32>, vector<16x32xf32> -> vector<16x32xf32>
    %150 = arith.addf %145, %149 : vector<16x32xf32>
    %151 = vector.extract_strided_slice %29 {offsets = [64, 0], sizes = [16, 16], strides = [1, 1]} : vector<80x16xf32> to vector<16x16xf32>
    %c24 = arith.constant 24 : index
    %c0_104 = arith.constant 0 : index
    %c0_105 = arith.constant 0 : index
    %152 = vector.load %arg2[%c24, %c0_104, %c0_105] : memref<25x16x32xf32, #tpu.memory_space<vmem>>, vector<1x16x32xf32>
    %153 = vector.shape_cast %152 : vector<1x16x32xf32> to vector<16x32xf32>
    %cst_106 = arith.constant dense<0.000000e+00> : vector<16x32xf32>
    %154 = tpu.matmul %151, %153, %cst_106 {dimension_numbers = #tpu.dot_dimension_numbers<[1], [0], [0], [1], [0, 0, 1, 1], [], []>} : vector<16x16xf32>, vector<16x32xf32>, vector<16x32xf32> -> vector<16x32xf32>
    %155 = arith.addf %150, %154 : vector<16x32xf32>
    %c0_107 = arith.constant 0 : index
    %c0_108 = arith.constant 0 : index
    %156 = vector.load %arg3[%c0_107, %c0_108] : memref<1x32xf32, #tpu.memory_space<vmem>>, vector<1x32xf32>
    %157 = vector.broadcast %156 : vector<1x32xf32> to vector<16x32xf32>
    %158 = arith.addf %155, %157 : vector<16x32xf32>
    %cst_109 = arith.constant 5.000000e-01 : f32
    %159 = vector.broadcast %cst_109 : f32 to vector<16x32xf32>
    %160 = arith.mulf %159, %158 : vector<16x32xf32>
    %cst_110 = arith.constant 0.707106769 : f32
    %161 = vector.broadcast %cst_110 : f32 to vector<16x32xf32>
    %162 = arith.mulf %158, %161 : vector<16x32xf32>
    %163 = math.absf %162 : vector<16x32xf32>
    %cst_111 = arith.constant 0.327591091 : f32
    %164 = vector.broadcast %cst_111 : f32 to vector<16x32xf32>
    %165 = arith.mulf %164, %163 : vector<16x32xf32>
    %cst_112 = arith.constant 1.000000e+00 : f32
    %166 = vector.broadcast %cst_112 : f32 to vector<16x32xf32>
    %167 = arith.addf %166, %165 : vector<16x32xf32>
    %cst_113 = arith.constant 1.000000e+00 : f32
    %168 = vector.broadcast %cst_113 : f32 to vector<16x32xf32>
    %169 = arith.divf %168, %167 : vector<16x32xf32>
    %cst_114 = arith.constant 1.06140542 : f32
    %170 = vector.broadcast %cst_114 : f32 to vector<16x32xf32>
    %171 = arith.mulf %169, %170 : vector<16x32xf32>
    %cst_115 = arith.constant -1.45315206 : f32
    %172 = vector.broadcast %cst_115 : f32 to vector<16x32xf32>
    %173 = arith.addf %172, %171 : vector<16x32xf32>
    %174 = arith.mulf %169, %173 : vector<16x32xf32>
    %cst_116 = arith.constant 1.42141378 : f32
    %175 = vector.broadcast %cst_116 : f32 to vector<16x32xf32>
    %176 = arith.addf %175, %174 : vector<16x32xf32>
    %177 = arith.mulf %169, %176 : vector<16x32xf32>
    %cst_117 = arith.constant -0.284496725 : f32
    %178 = vector.broadcast %cst_117 : f32 to vector<16x32xf32>
    %179 = arith.addf %178, %177 : vector<16x32xf32>
    %180 = arith.mulf %169, %179 : vector<16x32xf32>
    %cst_118 = arith.constant 0.254829586 : f32
    %181 = vector.broadcast %cst_118 : f32 to vector<16x32xf32>
    %182 = arith.addf %181, %180 : vector<16x32xf32>
    %183 = arith.mulf %169, %182 : vector<16x32xf32>
    %cst_119 = arith.constant 0.000000e+00 : f32
    %184 = vector.broadcast %cst_119 : f32 to vector<16x32xf32>
    %185 = arith.subf %184, %163 : vector<16x32xf32>
    %186 = arith.mulf %185, %163 : vector<16x32xf32>
    %187 = math.exp %186 : vector<16x32xf32>
    %188 = arith.mulf %183, %187 : vector<16x32xf32>
    %cst_120 = arith.constant 1.000000e+00 : f32
    %189 = vector.broadcast %cst_120 : f32 to vector<16x32xf32>
    %190 = arith.subf %189, %188 : vector<16x32xf32>
    %cst_121 = arith.constant 0.000000e+00 : f32
    %191 = vector.broadcast %cst_121 : f32 to vector<16x32xf32>
    %192 = arith.cmpf olt, %162, %191 : vector<16x32xf32>
    %cst_122 = arith.constant 0.000000e+00 : f32
    %193 = vector.broadcast %cst_122 : f32 to vector<16x32xf32>
    %194 = arith.subf %193, %190 : vector<16x32xf32>
    %195 = arith.select %192, %194, %190 : vector<16x32xi1>, vector<16x32xf32>
    %cst_123 = arith.constant 1.000000e+00 : f32
    %196 = vector.broadcast %cst_123 : f32 to vector<16x32xf32>
    %197 = arith.addf %196, %195 : vector<16x32xf32>
    %198 = arith.mulf %160, %197 : vector<16x32xf32>
    %cst_124 = arith.constant 0.000000e+00 : f32
    %199 = vector.broadcast %cst_124 : f32 to vector<84x32xf32>
    %c0_125 = arith.constant 0 : index
    %c0_126 = arith.constant 0 : index
    %200 = vector.load %arg9[%c0_125, %c0_126] : memref<84x32xf32, #tpu.memory_space<vmem>>, vector<84x32xf32>
    tpu.vector_store %arg9[%c0_125, %c0_126], %199 {strides = array<i32>} : memref<84x32xf32, #tpu.memory_space<vmem>>, vector<84x32xf32>,
    %c34_127 = arith.constant 34 : index
    %c0_128 = arith.constant 0 : index
    %201 = vector.load %arg9[%c34_127, %c0_128] : memref<84x32xf32, #tpu.memory_space<vmem>>, vector<16x32xf32>
    tpu.vector_store %arg9[%c34_127, %c0_128], %198 {strides = array<i32>} : memref<84x32xf32, #tpu.memory_space<vmem>>, vector<16x32xf32>,
    %c0_129 = arith.constant 0 : index
    %c0_130 = arith.constant 0 : index
    %202 = vector.load %arg9[%c0_129, %c0_130] : memref<84x32xf32, #tpu.memory_space<vmem>>, vector<80x32xf32>
    %c0_131 = arith.constant 0 : index
    %c0_132 = arith.constant 0 : index
    %c0_133 = arith.constant 0 : index
    %203 = vector.load %arg6[%c0_131, %c0_132, %c0_133] : memref<5x80x1xf32, #tpu.memory_space<vmem>>, vector<1x80x1xf32>
    %204 = vector.shape_cast %203 : vector<1x80x1xf32> to vector<80x1xf32>
    %205 = vector.broadcast %204 : vector<80x1xf32> to vector<80x32xf32>
    %206 = arith.mulf %202, %205 : vector<80x32xf32>
    %c1_134 = arith.constant 1 : index
    %c0_135 = arith.constant 0 : index
    %207 = vector.load %arg9[%c1_134, %c0_135] : memref<84x32xf32, #tpu.memory_space<vmem>>, vector<80x32xf32>
    %c1_136 = arith.constant 1 : index
    %c0_137 = arith.constant 0 : index
    %c0_138 = arith.constant 0 : index
    %208 = vector.load %arg6[%c1_136, %c0_137, %c0_138] : memref<5x80x1xf32, #tpu.memory_space<vmem>>, vector<1x80x1xf32>
    %209 = vector.shape_cast %208 : vector<1x80x1xf32> to vector<80x1xf32>
    %210 = vector.broadcast %209 : vector<80x1xf32> to vector<80x32xf32>
    %211 = arith.mulf %207, %210 : vector<80x32xf32>
    %c2_139 = arith.constant 2 : index
    %c0_140 = arith.constant 0 : index
    %212 = vector.load %arg9[%c2_139, %c0_140] : memref<84x32xf32, #tpu.memory_space<vmem>>, vector<80x32xf32>
    %c2_141 = arith.constant 2 : index
    %c0_142 = arith.constant 0 : index
    %c0_143 = arith.constant 0 : index
    %213 = vector.load %arg6[%c2_141, %c0_142, %c0_143] : memref<5x80x1xf32, #tpu.memory_space<vmem>>, vector<1x80x1xf32>
    %214 = vector.shape_cast %213 : vector<1x80x1xf32> to vector<80x1xf32>
    %215 = vector.broadcast %214 : vector<80x1xf32> to vector<80x32xf32>
    %216 = arith.mulf %212, %215 : vector<80x32xf32>
    %c3_144 = arith.constant 3 : index
    %c0_145 = arith.constant 0 : index
    %217 = vector.load %arg9[%c3_144, %c0_145] : memref<84x32xf32, #tpu.memory_space<vmem>>, vector<80x32xf32>
    %c3_146 = arith.constant 3 : index
    %c0_147 = arith.constant 0 : index
    %c0_148 = arith.constant 0 : index
    %218 = vector.load %arg6[%c3_146, %c0_147, %c0_148] : memref<5x80x1xf32, #tpu.memory_space<vmem>>, vector<1x80x1xf32>
    %219 = vector.shape_cast %218 : vector<1x80x1xf32> to vector<80x1xf32>
    %220 = vector.broadcast %219 : vector<80x1xf32> to vector<80x32xf32>
    %221 = arith.mulf %217, %220 : vector<80x32xf32>
    %c4_149 = arith.constant 4 : index
    %c0_150 = arith.constant 0 : index
    %222 = vector.load %arg9[%c4_149, %c0_150] : memref<84x32xf32, #tpu.memory_space<vmem>>, vector<80x32xf32>
    %c4_151 = arith.constant 4 : index
    %c0_152 = arith.constant 0 : index
    %c0_153 = arith.constant 0 : index
    %223 = vector.load %arg6[%c4_151, %c0_152, %c0_153] : memref<5x80x1xf32, #tpu.memory_space<vmem>>, vector<1x80x1xf32>
    %224 = vector.shape_cast %223 : vector<1x80x1xf32> to vector<80x1xf32>
    %225 = vector.broadcast %224 : vector<80x1xf32> to vector<80x32xf32>
    %226 = arith.mulf %222, %225 : vector<80x32xf32>
    %cst_154 = arith.constant 0.000000e+00 : f32
    %227 = vector.broadcast %cst_154 : f32 to vector<16x16xf32>
    %228 = vector.extract_strided_slice %206 {offsets = [0, 0], sizes = [16, 32], strides = [1, 1]} : vector<80x32xf32> to vector<16x32xf32>
    %c0_155 = arith.constant 0 : index
    %c0_156 = arith.constant 0 : index
    %c0_157 = arith.constant 0 : index
    %229 = vector.load %arg4[%c0_155, %c0_156, %c0_157] : memref<25x32x16xf32, #tpu.memory_space<vmem>>, vector<1x32x16xf32>
    %230 = vector.shape_cast %229 : vector<1x32x16xf32> to vector<32x16xf32>
    %cst_158 = arith.constant dense<0.000000e+00> : vector<16x16xf32>
    %231 = tpu.matmul %228, %230, %cst_158 {dimension_numbers = #tpu.dot_dimension_numbers<[1], [0], [0], [1], [0, 0, 1, 1], [], []>} : vector<16x32xf32>, vector<32x16xf32>, vector<16x16xf32> -> vector<16x16xf32>
    %232 = arith.addf %227, %231 : vector<16x16xf32>
    %233 = vector.extract_strided_slice %211 {offsets = [0, 0], sizes = [16, 32], strides = [1, 1]} : vector<80x32xf32> to vector<16x32xf32>
    %c1_159 = arith.constant 1 : index
    %c0_160 = arith.constant 0 : index
    %c0_161 = arith.constant 0 : index
    %234 = vector.load %arg4[%c1_159, %c0_160, %c0_161] : memref<25x32x16xf32, #tpu.memory_space<vmem>>, vector<1x32x16xf32>
    %235 = vector.shape_cast %234 : vector<1x32x16xf32> to vector<32x16xf32>
    %cst_162 = arith.constant dense<0.000000e+00> : vector<16x16xf32>
    %236 = tpu.matmul %233, %235, %cst_162 {dimension_numbers = #tpu.dot_dimension_numbers<[1], [0], [0], [1], [0, 0, 1, 1], [], []>} : vector<16x32xf32>, vector<32x16xf32>, vector<16x16xf32> -> vector<16x16xf32>
    %237 = arith.addf %232, %236 : vector<16x16xf32>
    %238 = vector.extract_strided_slice %216 {offsets = [0, 0], sizes = [16, 32], strides = [1, 1]} : vector<80x32xf32> to vector<16x32xf32>
    %c2_163 = arith.constant 2 : index
    %c0_164 = arith.constant 0 : index
    %c0_165 = arith.constant 0 : index
    %239 = vector.load %arg4[%c2_163, %c0_164, %c0_165] : memref<25x32x16xf32, #tpu.memory_space<vmem>>, vector<1x32x16xf32>
    %240 = vector.shape_cast %239 : vector<1x32x16xf32> to vector<32x16xf32>
    %cst_166 = arith.constant dense<0.000000e+00> : vector<16x16xf32>
    %241 = tpu.matmul %238, %240, %cst_166 {dimension_numbers = #tpu.dot_dimension_numbers<[1], [0], [0], [1], [0, 0, 1, 1], [], []>} : vector<16x32xf32>, vector<32x16xf32>, vector<16x16xf32> -> vector<16x16xf32>
    %242 = arith.addf %237, %241 : vector<16x16xf32>
    %243 = vector.extract_strided_slice %221 {offsets = [0, 0], sizes = [16, 32], strides = [1, 1]} : vector<80x32xf32> to vector<16x32xf32>
    %c3_167 = arith.constant 3 : index
    %c0_168 = arith.constant 0 : index
    %c0_169 = arith.constant 0 : index
    %244 = vector.load %arg4[%c3_167, %c0_168, %c0_169] : memref<25x32x16xf32, #tpu.memory_space<vmem>>, vector<1x32x16xf32>
    %245 = vector.shape_cast %244 : vector<1x32x16xf32> to vector<32x16xf32>
    %cst_170 = arith.constant dense<0.000000e+00> : vector<16x16xf32>
    %246 = tpu.matmul %243, %245, %cst_170 {dimension_numbers = #tpu.dot_dimension_numbers<[1], [0], [0], [1], [0, 0, 1, 1], [], []>} : vector<16x32xf32>, vector<32x16xf32>, vector<16x16xf32> -> vector<16x16xf32>
    %247 = arith.addf %242, %246 : vector<16x16xf32>
    %248 = vector.extract_strided_slice %226 {offsets = [0, 0], sizes = [16, 32], strides = [1, 1]} : vector<80x32xf32> to vector<16x32xf32>
    %c4_171 = arith.constant 4 : index
    %c0_172 = arith.constant 0 : index
    %c0_173 = arith.constant 0 : index
    %249 = vector.load %arg4[%c4_171, %c0_172, %c0_173] : memref<25x32x16xf32, #tpu.memory_space<vmem>>, vector<1x32x16xf32>
    %250 = vector.shape_cast %249 : vector<1x32x16xf32> to vector<32x16xf32>
    %cst_174 = arith.constant dense<0.000000e+00> : vector<16x16xf32>
    %251 = tpu.matmul %248, %250, %cst_174 {dimension_numbers = #tpu.dot_dimension_numbers<[1], [0], [0], [1], [0, 0, 1, 1], [], []>} : vector<16x32xf32>, vector<32x16xf32>, vector<16x16xf32> -> vector<16x16xf32>
    %252 = arith.addf %247, %251 : vector<16x16xf32>
    %253 = vector.extract_strided_slice %206 {offsets = [16, 0], sizes = [16, 32], strides = [1, 1]} : vector<80x32xf32> to vector<16x32xf32>
    %c5_175 = arith.constant 5 : index
    %c0_176 = arith.constant 0 : index
    %c0_177 = arith.constant 0 : index
    %254 = vector.load %arg4[%c5_175, %c0_176, %c0_177] : memref<25x32x16xf32, #tpu.memory_space<vmem>>, vector<1x32x16xf32>
    %255 = vector.shape_cast %254 : vector<1x32x16xf32> to vector<32x16xf32>
    %cst_178 = arith.constant dense<0.000000e+00> : vector<16x16xf32>
    %256 = tpu.matmul %253, %255, %cst_178 {dimension_numbers = #tpu.dot_dimension_numbers<[1], [0], [0], [1], [0, 0, 1, 1], [], []>} : vector<16x32xf32>, vector<32x16xf32>, vector<16x16xf32> -> vector<16x16xf32>
    %257 = arith.addf %252, %256 : vector<16x16xf32>
    %258 = vector.extract_strided_slice %211 {offsets = [16, 0], sizes = [16, 32], strides = [1, 1]} : vector<80x32xf32> to vector<16x32xf32>
    %c6_179 = arith.constant 6 : index
    %c0_180 = arith.constant 0 : index
    %c0_181 = arith.constant 0 : index
    %259 = vector.load %arg4[%c6_179, %c0_180, %c0_181] : memref<25x32x16xf32, #tpu.memory_space<vmem>>, vector<1x32x16xf32>
    %260 = vector.shape_cast %259 : vector<1x32x16xf32> to vector<32x16xf32>
    %cst_182 = arith.constant dense<0.000000e+00> : vector<16x16xf32>
    %261 = tpu.matmul %258, %260, %cst_182 {dimension_numbers = #tpu.dot_dimension_numbers<[1], [0], [0], [1], [0, 0, 1, 1], [], []>} : vector<16x32xf32>, vector<32x16xf32>, vector<16x16xf32> -> vector<16x16xf32>
    %262 = arith.addf %257, %261 : vector<16x16xf32>
    %263 = vector.extract_strided_slice %216 {offsets = [16, 0], sizes = [16, 32], strides = [1, 1]} : vector<80x32xf32> to vector<16x32xf32>
    %c7_183 = arith.constant 7 : index
    %c0_184 = arith.constant 0 : index
    %c0_185 = arith.constant 0 : index
    %264 = vector.load %arg4[%c7_183, %c0_184, %c0_185] : memref<25x32x16xf32, #tpu.memory_space<vmem>>, vector<1x32x16xf32>
    %265 = vector.shape_cast %264 : vector<1x32x16xf32> to vector<32x16xf32>
    %cst_186 = arith.constant dense<0.000000e+00> : vector<16x16xf32>
    %266 = tpu.matmul %263, %265, %cst_186 {dimension_numbers = #tpu.dot_dimension_numbers<[1], [0], [0], [1], [0, 0, 1, 1], [], []>} : vector<16x32xf32>, vector<32x16xf32>, vector<16x16xf32> -> vector<16x16xf32>
    %267 = arith.addf %262, %266 : vector<16x16xf32>
    %268 = vector.extract_strided_slice %221 {offsets = [16, 0], sizes = [16, 32], strides = [1, 1]} : vector<80x32xf32> to vector<16x32xf32>
    %c8_187 = arith.constant 8 : index
    %c0_188 = arith.constant 0 : index
    %c0_189 = arith.constant 0 : index
    %269 = vector.load %arg4[%c8_187, %c0_188, %c0_189] : memref<25x32x16xf32, #tpu.memory_space<vmem>>, vector<1x32x16xf32>
    %270 = vector.shape_cast %269 : vector<1x32x16xf32> to vector<32x16xf32>
    %cst_190 = arith.constant dense<0.000000e+00> : vector<16x16xf32>
    %271 = tpu.matmul %268, %270, %cst_190 {dimension_numbers = #tpu.dot_dimension_numbers<[1], [0], [0], [1], [0, 0, 1, 1], [], []>} : vector<16x32xf32>, vector<32x16xf32>, vector<16x16xf32> -> vector<16x16xf32>
    %272 = arith.addf %267, %271 : vector<16x16xf32>
    %273 = vector.extract_strided_slice %226 {offsets = [16, 0], sizes = [16, 32], strides = [1, 1]} : vector<80x32xf32> to vector<16x32xf32>
    %c9_191 = arith.constant 9 : index
    %c0_192 = arith.constant 0 : index
    %c0_193 = arith.constant 0 : index
    %274 = vector.load %arg4[%c9_191, %c0_192, %c0_193] : memref<25x32x16xf32, #tpu.memory_space<vmem>>, vector<1x32x16xf32>
    %275 = vector.shape_cast %274 : vector<1x32x16xf32> to vector<32x16xf32>
    %cst_194 = arith.constant dense<0.000000e+00> : vector<16x16xf32>
    %276 = tpu.matmul %273, %275, %cst_194 {dimension_numbers = #tpu.dot_dimension_numbers<[1], [0], [0], [1], [0, 0, 1, 1], [], []>} : vector<16x32xf32>, vector<32x16xf32>, vector<16x16xf32> -> vector<16x16xf32>
    %277 = arith.addf %272, %276 : vector<16x16xf32>
    %278 = vector.extract_strided_slice %206 {offsets = [32, 0], sizes = [16, 32], strides = [1, 1]} : vector<80x32xf32> to vector<16x32xf32>
    %c10_195 = arith.constant 10 : index
    %c0_196 = arith.constant 0 : index
    %c0_197 = arith.constant 0 : index
    %279 = vector.load %arg4[%c10_195, %c0_196, %c0_197] : memref<25x32x16xf32, #tpu.memory_space<vmem>>, vector<1x32x16xf32>
    %280 = vector.shape_cast %279 : vector<1x32x16xf32> to vector<32x16xf32>
    %cst_198 = arith.constant dense<0.000000e+00> : vector<16x16xf32>
    %281 = tpu.matmul %278, %280, %cst_198 {dimension_numbers = #tpu.dot_dimension_numbers<[1], [0], [0], [1], [0, 0, 1, 1], [], []>} : vector<16x32xf32>, vector<32x16xf32>, vector<16x16xf32> -> vector<16x16xf32>
    %282 = arith.addf %277, %281 : vector<16x16xf32>
    %283 = vector.extract_strided_slice %211 {offsets = [32, 0], sizes = [16, 32], strides = [1, 1]} : vector<80x32xf32> to vector<16x32xf32>
    %c11_199 = arith.constant 11 : index
    %c0_200 = arith.constant 0 : index
    %c0_201 = arith.constant 0 : index
    %284 = vector.load %arg4[%c11_199, %c0_200, %c0_201] : memref<25x32x16xf32, #tpu.memory_space<vmem>>, vector<1x32x16xf32>
    %285 = vector.shape_cast %284 : vector<1x32x16xf32> to vector<32x16xf32>
    %cst_202 = arith.constant dense<0.000000e+00> : vector<16x16xf32>
    %286 = tpu.matmul %283, %285, %cst_202 {dimension_numbers = #tpu.dot_dimension_numbers<[1], [0], [0], [1], [0, 0, 1, 1], [], []>} : vector<16x32xf32>, vector<32x16xf32>, vector<16x16xf32> -> vector<16x16xf32>
    %287 = arith.addf %282, %286 : vector<16x16xf32>
    %288 = vector.extract_strided_slice %216 {offsets = [32, 0], sizes = [16, 32], strides = [1, 1]} : vector<80x32xf32> to vector<16x32xf32>
    %c12_203 = arith.constant 12 : index
    %c0_204 = arith.constant 0 : index
    %c0_205 = arith.constant 0 : index
    %289 = vector.load %arg4[%c12_203, %c0_204, %c0_205] : memref<25x32x16xf32, #tpu.memory_space<vmem>>, vector<1x32x16xf32>
    %290 = vector.shape_cast %289 : vector<1x32x16xf32> to vector<32x16xf32>
    %cst_206 = arith.constant dense<0.000000e+00> : vector<16x16xf32>
    %291 = tpu.matmul %288, %290, %cst_206 {dimension_numbers = #tpu.dot_dimension_numbers<[1], [0], [0], [1], [0, 0, 1, 1], [], []>} : vector<16x32xf32>, vector<32x16xf32>, vector<16x16xf32> -> vector<16x16xf32>
    %292 = arith.addf %287, %291 : vector<16x16xf32>
    %293 = vector.extract_strided_slice %221 {offsets = [32, 0], sizes = [16, 32], strides = [1, 1]} : vector<80x32xf32> to vector<16x32xf32>
    %c13_207 = arith.constant 13 : index
    %c0_208 = arith.constant 0 : index
    %c0_209 = arith.constant 0 : index
    %294 = vector.load %arg4[%c13_207, %c0_208, %c0_209] : memref<25x32x16xf32, #tpu.memory_space<vmem>>, vector<1x32x16xf32>
    %295 = vector.shape_cast %294 : vector<1x32x16xf32> to vector<32x16xf32>
    %cst_210 = arith.constant dense<0.000000e+00> : vector<16x16xf32>
    %296 = tpu.matmul %293, %295, %cst_210 {dimension_numbers = #tpu.dot_dimension_numbers<[1], [0], [0], [1], [0, 0, 1, 1], [], []>} : vector<16x32xf32>, vector<32x16xf32>, vector<16x16xf32> -> vector<16x16xf32>
    %297 = arith.addf %292, %296 : vector<16x16xf32>
    %298 = vector.extract_strided_slice %226 {offsets = [32, 0], sizes = [16, 32], strides = [1, 1]} : vector<80x32xf32> to vector<16x32xf32>
    %c14_211 = arith.constant 14 : index
    %c0_212 = arith.constant 0 : index
    %c0_213 = arith.constant 0 : index
    %299 = vector.load %arg4[%c14_211, %c0_212, %c0_213] : memref<25x32x16xf32, #tpu.memory_space<vmem>>, vector<1x32x16xf32>
    %300 = vector.shape_cast %299 : vector<1x32x16xf32> to vector<32x16xf32>
    %cst_214 = arith.constant dense<0.000000e+00> : vector<16x16xf32>
    %301 = tpu.matmul %298, %300, %cst_214 {dimension_numbers = #tpu.dot_dimension_numbers<[1], [0], [0], [1], [0, 0, 1, 1], [], []>} : vector<16x32xf32>, vector<32x16xf32>, vector<16x16xf32> -> vector<16x16xf32>
    %302 = arith.addf %297, %301 : vector<16x16xf32>
    %303 = vector.extract_strided_slice %206 {offsets = [48, 0], sizes = [16, 32], strides = [1, 1]} : vector<80x32xf32> to vector<16x32xf32>
    %c15_215 = arith.constant 15 : index
    %c0_216 = arith.constant 0 : index
    %c0_217 = arith.constant 0 : index
    %304 = vector.load %arg4[%c15_215, %c0_216, %c0_217] : memref<25x32x16xf32, #tpu.memory_space<vmem>>, vector<1x32x16xf32>
    %305 = vector.shape_cast %304 : vector<1x32x16xf32> to vector<32x16xf32>
    %cst_218 = arith.constant dense<0.000000e+00> : vector<16x16xf32>
    %306 = tpu.matmul %303, %305, %cst_218 {dimension_numbers = #tpu.dot_dimension_numbers<[1], [0], [0], [1], [0, 0, 1, 1], [], []>} : vector<16x32xf32>, vector<32x16xf32>, vector<16x16xf32> -> vector<16x16xf32>
    %307 = arith.addf %302, %306 : vector<16x16xf32>
    %308 = vector.extract_strided_slice %211 {offsets = [48, 0], sizes = [16, 32], strides = [1, 1]} : vector<80x32xf32> to vector<16x32xf32>
    %c16_219 = arith.constant 16 : index
    %c0_220 = arith.constant 0 : index
    %c0_221 = arith.constant 0 : index
    %309 = vector.load %arg4[%c16_219, %c0_220, %c0_221] : memref<25x32x16xf32, #tpu.memory_space<vmem>>, vector<1x32x16xf32>
    %310 = vector.shape_cast %309 : vector<1x32x16xf32> to vector<32x16xf32>
    %cst_222 = arith.constant dense<0.000000e+00> : vector<16x16xf32>
    %311 = tpu.matmul %308, %310, %cst_222 {dimension_numbers = #tpu.dot_dimension_numbers<[1], [0], [0], [1], [0, 0, 1, 1], [], []>} : vector<16x32xf32>, vector<32x16xf32>, vector<16x16xf32> -> vector<16x16xf32>
    %312 = arith.addf %307, %311 : vector<16x16xf32>
    %313 = vector.extract_strided_slice %216 {offsets = [48, 0], sizes = [16, 32], strides = [1, 1]} : vector<80x32xf32> to vector<16x32xf32>
    %c17_223 = arith.constant 17 : index
    %c0_224 = arith.constant 0 : index
    %c0_225 = arith.constant 0 : index
    %314 = vector.load %arg4[%c17_223, %c0_224, %c0_225] : memref<25x32x16xf32, #tpu.memory_space<vmem>>, vector<1x32x16xf32>
    %315 = vector.shape_cast %314 : vector<1x32x16xf32> to vector<32x16xf32>
    %cst_226 = arith.constant dense<0.000000e+00> : vector<16x16xf32>
    %316 = tpu.matmul %313, %315, %cst_226 {dimension_numbers = #tpu.dot_dimension_numbers<[1], [0], [0], [1], [0, 0, 1, 1], [], []>} : vector<16x32xf32>, vector<32x16xf32>, vector<16x16xf32> -> vector<16x16xf32>
    %317 = arith.addf %312, %316 : vector<16x16xf32>
    %318 = vector.extract_strided_slice %221 {offsets = [48, 0], sizes = [16, 32], strides = [1, 1]} : vector<80x32xf32> to vector<16x32xf32>
    %c18_227 = arith.constant 18 : index
    %c0_228 = arith.constant 0 : index
    %c0_229 = arith.constant 0 : index
    %319 = vector.load %arg4[%c18_227, %c0_228, %c0_229] : memref<25x32x16xf32, #tpu.memory_space<vmem>>, vector<1x32x16xf32>
    %320 = vector.shape_cast %319 : vector<1x32x16xf32> to vector<32x16xf32>
    %cst_230 = arith.constant dense<0.000000e+00> : vector<16x16xf32>
    %321 = tpu.matmul %318, %320, %cst_230 {dimension_numbers = #tpu.dot_dimension_numbers<[1], [0], [0], [1], [0, 0, 1, 1], [], []>} : vector<16x32xf32>, vector<32x16xf32>, vector<16x16xf32> -> vector<16x16xf32>
    %322 = arith.addf %317, %321 : vector<16x16xf32>
    %323 = vector.extract_strided_slice %226 {offsets = [48, 0], sizes = [16, 32], strides = [1, 1]} : vector<80x32xf32> to vector<16x32xf32>
    %c19_231 = arith.constant 19 : index
    %c0_232 = arith.constant 0 : index
    %c0_233 = arith.constant 0 : index
    %324 = vector.load %arg4[%c19_231, %c0_232, %c0_233] : memref<25x32x16xf32, #tpu.memory_space<vmem>>, vector<1x32x16xf32>
    %325 = vector.shape_cast %324 : vector<1x32x16xf32> to vector<32x16xf32>
    %cst_234 = arith.constant dense<0.000000e+00> : vector<16x16xf32>
    %326 = tpu.matmul %323, %325, %cst_234 {dimension_numbers = #tpu.dot_dimension_numbers<[1], [0], [0], [1], [0, 0, 1, 1], [], []>} : vector<16x32xf32>, vector<32x16xf32>, vector<16x16xf32> -> vector<16x16xf32>
    %327 = arith.addf %322, %326 : vector<16x16xf32>
    %328 = vector.extract_strided_slice %206 {offsets = [64, 0], sizes = [16, 32], strides = [1, 1]} : vector<80x32xf32> to vector<16x32xf32>
    %c20_235 = arith.constant 20 : index
    %c0_236 = arith.constant 0 : index
    %c0_237 = arith.constant 0 : index
    %329 = vector.load %arg4[%c20_235, %c0_236, %c0_237] : memref<25x32x16xf32, #tpu.memory_space<vmem>>, vector<1x32x16xf32>
    %330 = vector.shape_cast %329 : vector<1x32x16xf32> to vector<32x16xf32>
    %cst_238 = arith.constant dense<0.000000e+00> : vector<16x16xf32>
    %331 = tpu.matmul %328, %330, %cst_238 {dimension_numbers = #tpu.dot_dimension_numbers<[1], [0], [0], [1], [0, 0, 1, 1], [], []>} : vector<16x32xf32>, vector<32x16xf32>, vector<16x16xf32> -> vector<16x16xf32>
    %332 = arith.addf %327, %331 : vector<16x16xf32>
    %333 = vector.extract_strided_slice %211 {offsets = [64, 0], sizes = [16, 32], strides = [1, 1]} : vector<80x32xf32> to vector<16x32xf32>
    %c21_239 = arith.constant 21 : index
    %c0_240 = arith.constant 0 : index
    %c0_241 = arith.constant 0 : index
    %334 = vector.load %arg4[%c21_239, %c0_240, %c0_241] : memref<25x32x16xf32, #tpu.memory_space<vmem>>, vector<1x32x16xf32>
    %335 = vector.shape_cast %334 : vector<1x32x16xf32> to vector<32x16xf32>
    %cst_242 = arith.constant dense<0.000000e+00> : vector<16x16xf32>
    %336 = tpu.matmul %333, %335, %cst_242 {dimension_numbers = #tpu.dot_dimension_numbers<[1], [0], [0], [1], [0, 0, 1, 1], [], []>} : vector<16x32xf32>, vector<32x16xf32>, vector<16x16xf32> -> vector<16x16xf32>
    %337 = arith.addf %332, %336 : vector<16x16xf32>
    %338 = vector.extract_strided_slice %216 {offsets = [64, 0], sizes = [16, 32], strides = [1, 1]} : vector<80x32xf32> to vector<16x32xf32>
    %c22_243 = arith.constant 22 : index
    %c0_244 = arith.constant 0 : index
    %c0_245 = arith.constant 0 : index
    %339 = vector.load %arg4[%c22_243, %c0_244, %c0_245] : memref<25x32x16xf32, #tpu.memory_space<vmem>>, vector<1x32x16xf32>
    %340 = vector.shape_cast %339 : vector<1x32x16xf32> to vector<32x16xf32>
    %cst_246 = arith.constant dense<0.000000e+00> : vector<16x16xf32>
    %341 = tpu.matmul %338, %340, %cst_246 {dimension_numbers = #tpu.dot_dimension_numbers<[1], [0], [0], [1], [0, 0, 1, 1], [], []>} : vector<16x32xf32>, vector<32x16xf32>, vector<16x16xf32> -> vector<16x16xf32>
    %342 = arith.addf %337, %341 : vector<16x16xf32>
    %343 = vector.extract_strided_slice %221 {offsets = [64, 0], sizes = [16, 32], strides = [1, 1]} : vector<80x32xf32> to vector<16x32xf32>
    %c23_247 = arith.constant 23 : index
    %c0_248 = arith.constant 0 : index
    %c0_249 = arith.constant 0 : index
    %344 = vector.load %arg4[%c23_247, %c0_248, %c0_249] : memref<25x32x16xf32, #tpu.memory_space<vmem>>, vector<1x32x16xf32>
    %345 = vector.shape_cast %344 : vector<1x32x16xf32> to vector<32x16xf32>
    %cst_250 = arith.constant dense<0.000000e+00> : vector<16x16xf32>
    %346 = tpu.matmul %343, %345, %cst_250 {dimension_numbers = #tpu.dot_dimension_numbers<[1], [0], [0], [1], [0, 0, 1, 1], [], []>} : vector<16x32xf32>, vector<32x16xf32>, vector<16x16xf32> -> vector<16x16xf32>
    %347 = arith.addf %342, %346 : vector<16x16xf32>
    %348 = vector.extract_strided_slice %226 {offsets = [64, 0], sizes = [16, 32], strides = [1, 1]} : vector<80x32xf32> to vector<16x32xf32>
    %c24_251 = arith.constant 24 : index
    %c0_252 = arith.constant 0 : index
    %c0_253 = arith.constant 0 : index
    %349 = vector.load %arg4[%c24_251, %c0_252, %c0_253] : memref<25x32x16xf32, #tpu.memory_space<vmem>>, vector<1x32x16xf32>
    %350 = vector.shape_cast %349 : vector<1x32x16xf32> to vector<32x16xf32>
    %cst_254 = arith.constant dense<0.000000e+00> : vector<16x16xf32>
    %351 = tpu.matmul %348, %350, %cst_254 {dimension_numbers = #tpu.dot_dimension_numbers<[1], [0], [0], [1], [0, 0, 1, 1], [], []>} : vector<16x32xf32>, vector<32x16xf32>, vector<16x16xf32> -> vector<16x16xf32>
    %352 = arith.addf %347, %351 : vector<16x16xf32>
    %c0_255 = arith.constant 0 : index
    %c0_256 = arith.constant 0 : index
    %353 = vector.load %arg5[%c0_255, %c0_256] : memref<1x16xf32, #tpu.memory_space<vmem>>, vector<1x16xf32>
    %354 = vector.broadcast %353 : vector<1x16xf32> to vector<16x16xf32>
    %355 = arith.addf %352, %354 : vector<16x16xf32>
    %c0_257 = arith.constant 0 : index
    %c0_258 = arith.constant 0 : index
    %c0_259 = arith.constant 0 : index
    %356 = vector.load %arg7[%c0_257, %c0_258, %c0_259] : memref<1x16x16xf32, #tpu.memory_space<vmem>>, vector<1x16x16xf32>
    %357 = vector.shape_cast %356 : vector<1x16x16xf32> to vector<16x16xf32>
    %358 = vector.shape_cast %355 : vector<16x16xf32> to vector<1x16x16xf32>
    tpu.vector_store %arg7[%c0_257, %c0_258, %c0_259], %358 {strides = array<i32>} : memref<1x16x16xf32, #tpu.memory_space<vmem>>, vector<1x16x16xf32>,
    return
  }
  func.func @transform_0(%arg0: i32) -> (i32, i32, i32) {
    %c0_i32 = arith.constant 0 : i32
    %c0_i32_0 = arith.constant 0 : i32
    %c0_i32_1 = arith.constant 0 : i32
    return %arg0, %c0_i32, %c0_i32_0 : i32, i32, i32
  }
  func.func @transform_1(%arg0: i32) -> (i32, i32, i32) {
    %c0_i32 = arith.constant 0 : i32
    %c0_i32_0 = arith.constant 0 : i32
    %c0_i32_1 = arith.constant 0 : i32
    %c0_i32_2 = arith.constant 0 : i32
    return %c0_i32, %c0_i32_0, %c0_i32_1 : i32, i32, i32
  }
  func.func @transform_2(%arg0: i32) -> (i32, i32) {
    %c0_i32 = arith.constant 0 : i32
    %c0_i32_0 = arith.constant 0 : i32
    %c0_i32_1 = arith.constant 0 : i32
    return %c0_i32, %c0_i32_0 : i32, i32
  }
  func.func @transform_3(%arg0: i32) -> (i32, i32, i32) {
    %c0_i32 = arith.constant 0 : i32
    %c0_i32_0 = arith.constant 0 : i32
    %c0_i32_1 = arith.constant 0 : i32
    %c0_i32_2 = arith.constant 0 : i32
    return %c0_i32, %c0_i32_0, %c0_i32_1 : i32, i32, i32
  }
  func.func @transform_4(%arg0: i32) -> (i32, i32) {
    %c0_i32 = arith.constant 0 : i32
    %c0_i32_0 = arith.constant 0 : i32
    %c0_i32_1 = arith.constant 0 : i32
    return %c0_i32, %c0_i32_0 : i32, i32
  }
  func.func @transform_5(%arg0: i32) -> (i32, i32, i32) {
    %c0_i32 = arith.constant 0 : i32
    %c0_i32_0 = arith.constant 0 : i32
    %c0_i32_1 = arith.constant 0 : i32
    %c0_i32_2 = arith.constant 0 : i32
    return %c0_i32, %c0_i32_0, %c0_i32_1 : i32, i32, i32
  }
  func.func @transform_6(%arg0: i32) -> (i32, i32, i32) {
    %c0_i32 = arith.constant 0 : i32
    %c0_i32_0 = arith.constant 0 : i32
    %c0_i32_1 = arith.constant 0 : i32
    return %arg0, %c0_i32, %c0_i32_0 : i32, i32, i32
  }
}

</mosaic_0001>

<llo_original>
// kernel: tpu_custom_call.1
$region0: #{tpu_custom_call.1}
  #allocation0 [shape = 'u32[]', space=smem, size = 0x4, offset = 0x4, fixed_abs, tag = 'smem constant byte address 0x4 - core index']
  #allocation1 [shape = 'u32[144,128]{1,0:T(1,128)}', space=vmem, size = 0x12000, scoped, tag = 'internal scratch']
  #allocation2 [shape = 'f32[84,16]{1,0:T(8,128)}', space=vmem, size = 0xb000, scoped, tag = 'scratch operand']
  #allocation3 [shape = 'f32[84,32]{1,0:T(8,128)}', space=vmem, size = 0xb000, scoped, tag = 'scratch operand']
  %s0 = inlined_call_operand.vmem [shape: f32[2,16,16], index: 0, kind: input, shape index: {}]
  %s1 = inlined_call_operand.vmem [shape: f32[25,16,32], index: 1, kind: input, shape index: {}]
  %s2 = inlined_call_operand.vmem [shape: f32[1,32], index: 2, kind: input, shape index: {}]
  %s3 = inlined_call_operand.vmem [shape: f32[25,32,16], index: 3, kind: input, shape index: {}]
  %s4 = inlined_call_operand.vmem [shape: f32[1,16], index: 4, kind: input, shape index: {}]
  %s5 = inlined_call_operand.vmem [shape: f32[5,80,1], index: 5, kind: input, shape index: {}]
  %s6 = inlined_call_operand.hbm [shape: f32[2,16,16], index: 6, kind: output, shape index: {}]
  %s7 = sld [smem:[#allocation0]]
  $region57: #{tpu_custom_call.1} parent=0
    _
  %s9 = ssub.s32 1, %s7
  %s10 = scalar_select 0, %s9, %s7
  $region1: #{tpu_custom_call.1} parent=0
    #allocation4 [shape = 'u8[16384]{0}', space=vmem, size = 0x4000, scoped, tag = 'output window, operand 0']
    #allocation5 [shape = 's32[2]{0}', space=sflag, size = 0x8, scoped, tag = 'scoped memory for tpu_custom_call.1']
    %11 = vsyncpa [#allocation5], 0
    %s12 = scalar_lea.sflag [#allocation5], 1
    %13 = vsyncpa %s12, 0
    loop: start=0, step=1, limit=4
    $region2: #{tpu_custom_call.1} parent=1 // loop_pre_header
      _
    $region3: #{tpu_custom_call.1} parent=1 // loop_header
      %s15 = sphi 0, %s19
      %p16 = scmp.ge.s32.totalorder %s15, 4
      %s25 = sphi 0, %s27
      %s28 = sphi 0, %s25
      %s29 = sphi 0, %s28
      %s45 = sphi 0, %s29
      %s49 = sphi 0, %s49
      %s51 = sphi 0, %s49
      %s52 = sphi 0, %s51
      %s66 = sphi 0, %s52
      %s70 = sphi 0, %s70
      %s72 = sphi 0, %s70
      %s73 = sphi 0, %s72
      %s87 = sphi 0, %s73
      %s91 = sphi 0, %s91
      %s93 = sphi 0, %s91
      %s94 = sphi 0, %s93
      %s108 = sphi 0, %s94
      %s112 = sphi 0, %s112
      %s114 = sphi 0, %s112
      %s115 = sphi 0, %s114
      %s129 = sphi 0, %s115
      %s133 = sphi 0, %s133
      %s135 = sphi 0, %s133
      %s136 = sphi 0, %s135
      %s150 = sphi 0, %s136
      %s156 = sphi 0, %s158
      %s159 = sphi 0, %s156
      %s160 = sphi 0, %s159
      %s176 = sphi 0, %s160
    $region4: #{tpu_custom_call.1} parent=1 // loop_header_branch
      %18 = sbr.rel (%p16) target = $region8
    $region5: #{tpu_custom_call.1} parent=1 // loop_body
      %s20 = ssub.s32 %s15, 1
      %s21 = ssub.s32 %s15, 2
      %s22 = sadd.s32 %s15, 1
      %s23 = ssub.s32 %s15, %s22
      %p24 = scmp.eq.s32.totalorder %s23, 0
      %s26 = sadd.s32 %s25, 1
      %s27 = scalar_select %p24, %s25, %s26
      %p30 = pneg %p24
      %p31 = scmp.eq.s32.totalorder %s15, 1
      %p32 = por %p30, %p31
      %p33 = scmp.ne.s32.totalorder %s25, %s28
      %p34 = scmp.eq.s32.totalorder %s15, 0
      %p35 = por %p33, %p34
      %p36 = scmp.ne.s32.totalorder %s25, %s28
      %p37 = scmp.eq.s32.totalorder %s20, 1
      %p38 = por %p36, %p37
      %p39 = scmp.ne.s32.totalorder %s28, %s29
      %p40 = scmp.eq.s32.totalorder %s20, 0
      %p41 = por %p39, %p40
      %p42 = scmp.ne.s32.totalorder %s28, %s29
      %p43 = scmp.eq.s32.totalorder %s21, 1
      %p44 = por %p42, %p43
      %p46 = scmp.ne.s32.totalorder %s29, %s45
      %p47 = scmp.eq.s32.totalorder %s21, 0
      %p48 = por %p46, %p47
      %s50 = sadd.s32 %s49, 1
      %p53 = scmp.eq.s32.totalorder %s15, 1
      %p54 = scmp.ne.s32.totalorder %s49, %s51
      %p55 = scmp.eq.s32.totalorder %s15, 0
      %p56 = por %p54, %p55
      %p57 = scmp.ne.s32.totalorder %s49, %s51
      %p58 = scmp.eq.s32.totalorder %s20, 1
      %p59 = por %p57, %p58
      %p60 = scmp.ne.s32.totalorder %s51, %s52
      %p61 = scmp.eq.s32.totalorder %s20, 0
      %p62 = por %p60, %p61
      %p63 = scmp.ne.s32.totalorder %s51, %s52
      %p64 = scmp.eq.s32.totalorder %s21, 1
      %p65 = por %p63, %p64
      %p67 = scmp.ne.s32.totalorder %s52, %s66
      %p68 = scmp.eq.s32.totalorder %s21, 0
      %p69 = por %p67, %p68
      %s71 = sadd.s32 %s70, 1
      %p74 = scmp.eq.s32.totalorder %s15, 1
      %p75 = scmp.ne.s32.totalorder %s70, %s72
      %p76 = scmp.eq.s32.totalorder %s15, 0
      %p77 = por %p75, %p76
      %p78 = scmp.ne.s32.totalorder %s70, %s72
      %p79 = scmp.eq.s32.totalorder %s20, 1
      %p80 = por %p78, %p79
      %p81 = scmp.ne.s32.totalorder %s72, %s73
      %p82 = scmp.eq.s32.totalorder %s20, 0
      %p83 = por %p81, %p82
      %p84 = scmp.ne.s32.totalorder %s72, %s73
      %p85 = scmp.eq.s32.totalorder %s21, 1
      %p86 = por %p84, %p85
      %p88 = scmp.ne.s32.totalorder %s73, %s87
      %p89 = scmp.eq.s32.totalorder %s21, 0
      %p90 = por %p88, %p89
      %s92 = sadd.s32 %s91, 1
      %p95 = scmp.eq.s32.totalorder %s15, 1
      %p96 = scmp.ne.s32.totalorder %s91, %s93
      %p97 = scmp.eq.s32.totalorder %s15, 0
      %p98 = por %p96, %p97
      %p99 = scmp.ne.s32.totalorder %s91, %s93
      %p100 = scmp.eq.s32.totalorder %s20, 1
      %p101 = por %p99, %p100
      %p102 = scmp.ne.s32.totalorder %s93, %s94
      %p103 = scmp.eq.s32.totalorder %s20, 0
      %p104 = por %p102, %p103
      %p105 = scmp.ne.s32.totalorder %s93, %s94
      %p106 = scmp.eq.s32.totalorder %s21, 1
      %p107 = por %p105, %p106
      %p109 = scmp.ne.s32.totalorder %s94, %s108
      %p110 = scmp.eq.s32.totalorder %s21, 0
      %p111 = por %p109, %p110
      %s113 = sadd.s32 %s112, 1
      %p116 = scmp.eq.s32.totalorder %s15, 1
      %p117 = scmp.ne.s32.totalorder %s112, %s114
      %p118 = scmp.eq.s32.totalorder %s15, 0
      %p119 = por %p117, %p118
      %p120 = scmp.ne.s32.totalorder %s112, %s114
      %p121 = scmp.eq.s32.totalorder %s20, 1
      %p122 = por %p120, %p121
      %p123 = scmp.ne.s32.totalorder %s114, %s115
      %p124 = scmp.eq.s32.totalorder %s20, 0
      %p125 = por %p123, %p124
      %p126 = scmp.ne.s32.totalorder %s114, %s115
      %p127 = scmp.eq.s32.totalorder %s21, 1
      %p128 = por %p126, %p127
      %p130 = scmp.ne.s32.totalorder %s115, %s129
      %p131 = scmp.eq.s32.totalorder %s21, 0
      %p132 = por %p130, %p131
      %s134 = sadd.s32 %s133, 1
      %p137 = scmp.eq.s32.totalorder %s15, 1
      %p138 = scmp.ne.s32.totalorder %s133, %s135
      %p139 = scmp.eq.s32.totalorder %s15, 0
      %p140 = por %p138, %p139
      %p141 = scmp.ne.s32.totalorder %s133, %s135
      %p142 = scmp.eq.s32.totalorder %s20, 1
      %p143 = por %p141, %p142
      %p144 = scmp.ne.s32.totalorder %s135, %s136
      %p145 = scmp.eq.s32.totalorder %s20, 0
      %p146 = por %p144, %p145
      %p147 = scmp.ne.s32.totalorder %s135, %s136
      %p148 = scmp.eq.s32.totalorder %s21, 1
      %p149 = por %p147, %p148
      %p151 = scmp.ne.s32.totalorder %s136, %s150
      %p152 = scmp.eq.s32.totalorder %s21, 0
      %p153 = por %p151, %p152
      %s154 = ssub.s32 %s15, %s22
      %p155 = scmp.eq.s32.totalorder %s154, 0
      %s157 = sadd.s32 %s156, 1
      %s158 = scalar_select %p155, %s156, %s157
      %p161 = pneg %p155
      %p162 = scmp.eq.s32.totalorder %s15, 1
      %p163 = por %p161, %p162
      %p164 = scmp.ne.s32.totalorder %s156, %s159
      %p165 = scmp.eq.s32.totalorder %s15, 0
      %p166 = por %p164, %p165
      %p167 = scmp.ne.s32.totalorder %s156, %s159
      %p168 = scmp.eq.s32.totalorder %s20, 1
      %p169 = por %p167, %p168
      %p170 = scmp.ne.s32.totalorder %s159, %s160
      %p171 = scmp.eq.s32.totalorder %s20, 0
      %p172 = por %p170, %p171
      %p173 = scmp.ne.s32.totalorder %s159, %s160
      %p174 = scmp.eq.s32.totalorder %s21, 1
      %p175 = por %p173, %p174
      %p177 = scmp.ne.s32.totalorder %s160, %s176
      %p178 = scmp.eq.s32.totalorder %s21, 0
      %p179 = por %p177, %p178
      %p180 = scmp.le.s32.totalorder 1, %s15
      %p181 = scmp.lt.s32.totalorder %s15, 3
      %p182 = pnand %p180, %p181
      %p183 = pneg %p182
      // Predicated region
      $region9: #{tpu_custom_call.1} parent=5 // pred_check
        _
      $region10: #{tpu_custom_call.1} parent=5 // pred_check_branch
        %185 = sbr.rel (%p182) target = $region12
      $region11: #{tpu_custom_call.1} parent=5 // pred_region
        %s186 = ssub.s32 %s15, 1
        // Predicated region
        $region13: #{tpu_custom_call.1} parent=11 // pred_check
          %p187 = pneg %p62
        $region14: #{tpu_custom_call.1} parent=11 // pred_check_branch
          %189 = sbr.rel (%p187) target = $region16
        $region15: #{tpu_custom_call.1} parent=11 // pred_region
          _
        $region16: #{tpu_custom_call.1} parent=11 // pred_fallthru
          _
        // Predicated region
        $region17: #{tpu_custom_call.1} parent=11 // pred_check
          %p190 = pneg %p83
        $region18: #{tpu_custom_call.1} parent=11 // pred_check_branch
          %192 = sbr.rel (%p190) target = $region20
        $region19: #{tpu_custom_call.1} parent=11 // pred_region
          _
        $region20: #{tpu_custom_call.1} parent=11 // pred_fallthru
          _
        // Predicated region
        $region21: #{tpu_custom_call.1} parent=11 // pred_check
          %p193 = pneg %p104
        $region22: #{tpu_custom_call.1} parent=11 // pred_check_branch
          %195 = sbr.rel (%p193) target = $region24
        $region23: #{tpu_custom_call.1} parent=11 // pred_region
          _
        $region24: #{tpu_custom_call.1} parent=11 // pred_fallthru
          _
        // Predicated region
        $region25: #{tpu_custom_call.1} parent=11 // pred_check
          %p196 = pneg %p125
        $region26: #{tpu_custom_call.1} parent=11 // pred_check_branch
          %198 = sbr.rel (%p196) target = $region28
        $region27: #{tpu_custom_call.1} parent=11 // pred_region
          _
        $region28: #{tpu_custom_call.1} parent=11 // pred_fallthru
          _
        // Predicated region
        $region29: #{tpu_custom_call.1} parent=11 // pred_check
          %p199 = pneg %p146
        $region30: #{tpu_custom_call.1} parent=11 // pred_check_branch
          %201 = sbr.rel (%p199) target = $region32
        $region31: #{tpu_custom_call.1} parent=11 // pred_region
          _
        $region32: #{tpu_custom_call.1} parent=11 // pred_fallthru
          _
      $region12: #{tpu_custom_call.1} parent=5 // pred_fallthru
        _
      %p202 = scmp.lt.s32.totalorder %s15, 2
      // Predicated region
      $region33: #{tpu_custom_call.1} parent=5 // pred_check
        %p203 = pneg %p202
      $region34: #{tpu_custom_call.1} parent=5 // pred_check_branch
        %205 = sbr.rel (%p203) target = $region36
      $region35: #{tpu_custom_call.1} parent=5 // pred_region
        // Predicated region
        $region37: #{tpu_custom_call.1} parent=35 // pred_check
          %p206 = pneg %p35
        $region38: #{tpu_custom_call.1} parent=35 // pred_check_branch
          %208 = sbr.rel (%p206) target = $region40
        $region39: #{tpu_custom_call.1} parent=35 // pred_region
          %p209 = scmp.lt.s32.totalorder %s15, 1
          %s210 = scalar_select %p209, %s15, 1
          %s211 = smul.addr %s210, 2
          %s212 = smul.addr %s211, 8
          %s213 = scalar_lea.vmem %s0, %s212
        $region40: #{tpu_custom_call.1} parent=35 // pred_fallthru
          _
      $region36: #{tpu_custom_call.1} parent=5 // pred_fallthru
        _
      %p214 = scmp.le.s32.totalorder 1, %s15
      %p215 = scmp.lt.s32.totalorder %s15, 3
      %p216 = pnand %p214, %p215
      %p217 = pneg %p216
      // Predicated region
      $region41: #{tpu_custom_call.1} parent=5 // pred_check
        _
      $region42: #{tpu_custom_call.1} parent=5 // pred_check_branch
        %219 = sbr.rel (%p216) target = $region44
      $region43: #{tpu_custom_call.1} parent=5 // pred_region
        %s220 = ssub.s32 %s15, 1
        %p221 = scmp.lt.s32.totalorder %s20, 1
        %s222 = scalar_select %p221, %s20, 1
        %s223 = smul.addr %s222, 2
        %s224 = smul.addr %s223, 8
        %s225 = scalar_lea.vmem %s0, %s224
        %p226 = pneg %p41
        %p227 = pneg %p38
        %p228 = pneg %p62
        %p229 = pneg %p59
        %p230 = pneg %p83
        %p231 = pneg %p80
        %p232 = pneg %p104
        %p233 = pneg %p101
        %p234 = pneg %p125
        %p235 = pneg %p122
        %p236 = pneg %p146
        %p237 = pneg %p143
        %p238 = pneg %p172
        %p239 = pneg %p169
        %s240 = sand.u32 %s159, 1
        %s241 = scalar_lea.sflag [#allocation5], %s240
        %s242 = sand.u32 %s159, 1
        %s243 = smul.addr %s242, 16
        %s244 = scalar_lea.vmem [#allocation4], %s243
        %p245 = scmp.lt.s32.totalorder %s20, 1
        %s246 = scalar_select %p245, %s20, 1
        %s247 = smul.addr %s246, 2
        %s248 = smul.addr %s247, 8
        %s249 = scalar_lea.vmem %s0, %s248
        %v250 = vld [vmem:[%s249] sm:$0xff]
        %v251 = vld [vmem:[%s249 + $0x8] sm:$0xff]
        %vm252 = vcmask 130048
        %253 = vst.msk [vmem:[#allocation2] sm:$0xff] %vm252, 0.0
        %254 = vst.msk [vmem:[#allocation2 + $0x8] sm:$0xff] %vm252, 0.0
        %255 = vst.msk [vmem:[#allocation2 + $0x10] sm:$0xff] %vm252, 0.0
        %256 = vst.msk [vmem:[#allocation2 + $0x18] sm:$0xff] %vm252, 0.0
        %257 = vst.msk [vmem:[#allocation2 + $0x20] sm:$0xff] %vm252, 0.0
        %258 = vst.msk [vmem:[#allocation2 + $0x28] sm:$0xff] %vm252, 0.0
        %259 = vst.msk [vmem:[#allocation2 + $0x30] sm:$0xff] %vm252, 0.0
        %260 = vst.msk [vmem:[#allocation2 + $0x38] sm:$0xff] %vm252, 0.0
        %261 = vst.msk [vmem:[#allocation2 + $0x40] sm:$0xff] %vm252, 0.0
        %262 = vst.msk [vmem:[#allocation2 + $0x48] sm:$0xff] %vm252, 0.0
        %vm263 = vcmask 125952
        %264 = vst.msk [vmem:[#allocation2 + $0x50] sm:$0xf] %vm263, 0.0
        %265 = vst.msk [vmem:[#allocation2 + $0x22] sm:$0xff] %vm252, %v250
        %266 = vst.msk [vmem:[#allocation2 + $0x2a] sm:$0xff] %vm252, %v251
        %v267 = vld [vmem:[#allocation2] sm:$0xff]
        %v268 = vld [vmem:[#allocation2 + $0x8] sm:$0xff]
        %v269 = vld [vmem:[#allocation2 + $0x10] sm:$0xff]
        %v270 = vld [vmem:[#allocation2 + $0x18] sm:$0xff]
        %v271 = vld [vmem:[#allocation2 + $0x20] sm:$0xff]
        %v272 = vld [vmem:[#allocation2 + $0x28] sm:$0xff]
        %v273 = vld [vmem:[#allocation2 + $0x30] sm:$0xff]
        %v274 = vld [vmem:[#allocation2 + $0x38] sm:$0xff]
        %v275 = vld [vmem:[#allocation2 + $0x40] sm:$0xff]
        %v276 = vld [vmem:[#allocation2 + $0x48] sm:$0xff]
        %v277 = vld [vmem:[%s5] sm:$0xff]
        %v278 = vld [vmem:[%s5 + $0x8] sm:$0xff]
        %v279 = vld [vmem:[%s5 + $0x10] sm:$0xff]
        %v280 = vld [vmem:[%s5 + $0x18] sm:$0xff]
        %v281 = vld [vmem:[%s5 + $0x20] sm:$0xff]
        %v282 = vld [vmem:[%s5 + $0x28] sm:$0xff]
        %v283 = vld [vmem:[%s5 + $0x30] sm:$0xff]
        %v284 = vld [vmem:[%s5 + $0x38] sm:$0xff]
        %v285 = vld [vmem:[%s5 + $0x40] sm:$0xff]
        %v286 = vld [vmem:[%s5 + $0x48] sm:$0xff]
        %288 = vset.pattern.permute.xlu0 0
        %289 = vperm.xlu0 %288, %v277
        %v290 = vpop.permute.xlu0 %289
        %293 = vset.pattern.permute.xlu0 0
        %294 = vperm.xlu0 %293, %v278
        %v295 = vpop.permute.xlu0 %294
        %298 = vset.pattern.permute.xlu0 0
        %299 = vperm.xlu0 %298, %v279
        %v300 = vpop.permute.xlu0 %299
        %303 = vset.pattern.permute.xlu0 0
        %304 = vperm.xlu0 %303, %v280
        %v305 = vpop.permute.xlu0 %304
        %308 = vset.pattern.permute.xlu0 0
        %309 = vperm.xlu0 %308, %v281
        %v310 = vpop.permute.xlu0 %309
        %313 = vset.pattern.permute.xlu0 0
        %314 = vperm.xlu0 %313, %v282
        %v315 = vpop.permute.xlu0 %314
        %318 = vset.pattern.permute.xlu0 0
        %319 = vperm.xlu0 %318, %v283
        %v320 = vpop.permute.xlu0 %319
        %323 = vset.pattern.permute.xlu0 0
        %324 = vperm.xlu0 %323, %v284
        %v325 = vpop.permute.xlu0 %324
        %328 = vset.pattern.permute.xlu0 0
        %329 = vperm.xlu0 %328, %v285
        %v330 = vpop.permute.xlu0 %329
        %333 = vset.pattern.permute.xlu0 0
        %334 = vperm.xlu0 %333, %v286
        %v335 = vpop.permute.xlu0 %334
        %v337 = vmul.f32 %v267, %v290
        %v338 = vmul.f32 %v268, %v295
        %v339 = vmul.f32 %v269, %v300
        %v340 = vmul.f32 %v270, %v305
        %v341 = vmul.f32 %v271, %v310
        %v342 = vmul.f32 %v272, %v315
        %v343 = vmul.f32 %v273, %v320
        %v344 = vmul.f32 %v274, %v325
        %v345 = vmul.f32 %v275, %v330
        %v346 = vmul.f32 %v276, %v335
        %v347 = vld [vmem:[#allocation2 + $0x1] sm:$0xff]
        %v348 = vld [vmem:[#allocation2 + $0x9] sm:$0xff]
        %v349 = vld [vmem:[#allocation2 + $0x11] sm:$0xff]
        %v350 = vld [vmem:[#allocation2 + $0x19] sm:$0xff]
        %v351 = vld [vmem:[#allocation2 + $0x21] sm:$0xff]
        %v352 = vld [vmem:[#allocation2 + $0x29] sm:$0xff]
        %v353 = vld [vmem:[#allocation2 + $0x31] sm:$0xff]
        %v354 = vld [vmem:[#allocation2 + $0x39] sm:$0xff]
        %v355 = vld [vmem:[#allocation2 + $0x41] sm:$0xff]
        %v356 = vld [vmem:[#allocation2 + $0x49] sm:$0xff]
        %s357 = scalar_lea.vmem %s5, 80
        %v358 = vld [vmem:[%s357] sm:$0xff]
        %v359 = vld [vmem:[%s357 + $0x8] sm:$0xff]
        %v360 = vld [vmem:[%s357 + $0x10] sm:$0xff]
        %v361 = vld [vmem:[%s357 + $0x18] sm:$0xff]
        %v362 = vld [vmem:[%s357 + $0x20] sm:$0xff]
        %v363 = vld [vmem:[%s357 + $0x28] sm:$0xff]
        %v364 = vld [vmem:[%s357 + $0x30] sm:$0xff]
        %v365 = vld [vmem:[%s357 + $0x38] sm:$0xff]
        %v366 = vld [vmem:[%s357 + $0x40] sm:$0xff]
        %v367 = vld [vmem:[%s357 + $0x48] sm:$0xff]
        %369 = vset.pattern.permute.xlu0 0
        %370 = vperm.xlu0 %369, %v358
        %v371 = vpop.permute.xlu0 %370
        %374 = vset.pattern.permute.xlu0 0
        %375 = vperm.xlu0 %374, %v359
        %v376 = vpop.permute.xlu0 %375
        %379 = vset.pattern.permute.xlu0 0
        %380 = vperm.xlu0 %379, %v360
        %v381 = vpop.permute.xlu0 %380
        %384 = vset.pattern.permute.xlu0 0
        %385 = vperm.xlu0 %384, %v361
        %v386 = vpop.permute.xlu0 %385
        %389 = vset.pattern.permute.xlu0 0
        %390 = vperm.xlu0 %389, %v362
        %v391 = vpop.permute.xlu0 %390
        %394 = vset.pattern.permute.xlu0 0
        %395 = vperm.xlu0 %394, %v363
        %v396 = vpop.permute.xlu0 %395
        %399 = vset.pattern.permute.xlu0 0
        %400 = vperm.xlu0 %399, %v364
        %v401 = vpop.permute.xlu0 %400
        %404 = vset.pattern.permute.xlu0 0
        %405 = vperm.xlu0 %404, %v365
        %v406 = vpop.permute.xlu0 %405
        %409 = vset.pattern.permute.xlu0 0
        %410 = vperm.xlu0 %409, %v366
        %v411 = vpop.permute.xlu0 %410
        %414 = vset.pattern.permute.xlu0 0
        %415 = vperm.xlu0 %414, %v367
        %v416 = vpop.permute.xlu0 %415
        %v418 = vmul.f32 %v347, %v371
        %v419 = vmul.f32 %v348, %v376
        %v420 = vmul.f32 %v349, %v381
        %v421 = vmul.f32 %v350, %v386
        %v422 = vmul.f32 %v351, %v391
        %v423 = vmul.f32 %v352, %v396
        %v424 = vmul.f32 %v353, %v401
        %v425 = vmul.f32 %v354, %v406
        %v426 = vmul.f32 %v355, %v411
        %v427 = vmul.f32 %v356, %v416
        %v428 = vld [vmem:[#allocation2 + $0x2] sm:$0xff]
        %v429 = vld [vmem:[#allocation2 + $0xa] sm:$0xff]
        %v430 = vld [vmem:[#allocation2 + $0x12] sm:$0xff]
        %v431 = vld [vmem:[#allocation2 + $0x1a] sm:$0xff]
        %v432 = vld [vmem:[#allocation2 + $0x22] sm:$0xff]
        %v433 = vld [vmem:[#allocation2 + $0x2a] sm:$0xff]
        %v434 = vld [vmem:[#allocation2 + $0x32] sm:$0xff]
        %v435 = vld [vmem:[#allocation2 + $0x3a] sm:$0xff]
        %v436 = vld [vmem:[#allocation2 + $0x42] sm:$0xff]
        %v437 = vld [vmem:[#allocation2 + $0x4a] sm:$0xff]
        %s438 = scalar_lea.vmem %s5, 160
        %v439 = vld [vmem:[%s438] sm:$0xff]
        %v440 = vld [vmem:[%s438 + $0x8] sm:$0xff]
        %v441 = vld [vmem:[%s438 + $0x10] sm:$0xff]
        %v442 = vld [vmem:[%s438 + $0x18] sm:$0xff]
        %v443 = vld [vmem:[%s438 + $0x20] sm:$0xff]
        %v444 = vld [vmem:[%s438 + $0x28] sm:$0xff]
        %v445 = vld [vmem:[%s438 + $0x30] sm:$0xff]
        %v446 = vld [vmem:[%s438 + $0x38] sm:$0xff]
        %v447 = vld [vmem:[%s438 + $0x40] sm:$0xff]
        %v448 = vld [vmem:[%s438 + $0x48] sm:$0xff]
        %450 = vset.pattern.permute.xlu0 0
        %451 = vperm.xlu0 %450, %v439
        %v452 = vpop.permute.xlu0 %451
        %455 = vset.pattern.permute.xlu0 0
        %456 = vperm.xlu0 %455, %v440
        %v457 = vpop.permute.xlu0 %456
        %460 = vset.pattern.permute.xlu0 0
        %461 = vperm.xlu0 %460, %v441
        %v462 = vpop.permute.xlu0 %461
        %465 = vset.pattern.permute.xlu0 0
        %466 = vperm.xlu0 %465, %v442
        %v467 = vpop.permute.xlu0 %466
        %470 = vset.pattern.permute.xlu0 0
        %471 = vperm.xlu0 %470, %v443
        %v472 = vpop.permute.xlu0 %471
        %475 = vset.pattern.permute.xlu0 0
        %476 = vperm.xlu0 %475, %v444
        %v477 = vpop.permute.xlu0 %476
        %480 = vset.pattern.permute.xlu0 0
        %481 = vperm.xlu0 %480, %v445
        %v482 = vpop.permute.xlu0 %481
        %485 = vset.pattern.permute.xlu0 0
        %486 = vperm.xlu0 %485, %v446
        %v487 = vpop.permute.xlu0 %486
        %490 = vset.pattern.permute.xlu0 0
        %491 = vperm.xlu0 %490, %v447
        %v492 = vpop.permute.xlu0 %491
        %495 = vset.pattern.permute.xlu0 0
        %496 = vperm.xlu0 %495, %v448
        %v497 = vpop.permute.xlu0 %496
        %v499 = vmul.f32 %v428, %v452
        %v500 = vmul.f32 %v429, %v457
        %v501 = vmul.f32 %v430, %v462
        %v502 = vmul.f32 %v431, %v467
        %v503 = vmul.f32 %v432, %v472
        %v504 = vmul.f32 %v433, %v477
        %v505 = vmul.f32 %v434, %v482
        %v506 = vmul.f32 %v435, %v487
        %v507 = vmul.f32 %v436, %v492
        %v508 = vmul.f32 %v437, %v497
        %v509 = vld [vmem:[#allocation2 + $0x3] sm:$0xff]
        %v510 = vld [vmem:[#allocation2 + $0xb] sm:$0xff]
        %v511 = vld [vmem:[#allocation2 + $0x13] sm:$0xff]
        %v512 = vld [vmem:[#allocation2 + $0x1b] sm:$0xff]
        %v513 = vld [vmem:[#allocation2 + $0x23] sm:$0xff]
        %v514 = vld [vmem:[#allocation2 + $0x2b] sm:$0xff]
        %v515 = vld [vmem:[#allocation2 + $0x33] sm:$0xff]
        %v516 = vld [vmem:[#allocation2 + $0x3b] sm:$0xff]
        %v517 = vld [vmem:[#allocation2 + $0x43] sm:$0xff]
        %v518 = vld [vmem:[#allocation2 + $0x4b] sm:$0xff]
        %s519 = scalar_lea.vmem %s5, 240
        %v520 = vld [vmem:[%s519] sm:$0xff]
        %v521 = vld [vmem:[%s519 + $0x8] sm:$0xff]
        %v522 = vld [vmem:[%s519 + $0x10] sm:$0xff]
        %v523 = vld [vmem:[%s519 + $0x18] sm:$0xff]
        %v524 = vld [vmem:[%s519 + $0x20] sm:$0xff]
        %v525 = vld [vmem:[%s519 + $0x28] sm:$0xff]
        %v526 = vld [vmem:[%s519 + $0x30] sm:$0xff]
        %v527 = vld [vmem:[%s519 + $0x38] sm:$0xff]
        %v528 = vld [vmem:[%s519 + $0x40] sm:$0xff]
        %v529 = vld [vmem:[%s519 + $0x48] sm:$0xff]
        %531 = vset.pattern.permute.xlu0 0
        %532 = vperm.xlu0 %531, %v520
        %v533 = vpop.permute.xlu0 %532
        %536 = vset.pattern.permute.xlu0 0
        %537 = vperm.xlu0 %536, %v521
        %v538 = vpop.permute.xlu0 %537
        %541 = vset.pattern.permute.xlu0 0
        %542 = vperm.xlu0 %541, %v522
        %v543 = vpop.permute.xlu0 %542
        %546 = vset.pattern.permute.xlu0 0
        %547 = vperm.xlu0 %546, %v523
        %v548 = vpop.permute.xlu0 %547
        %551 = vset.pattern.permute.xlu0 0
        %552 = vperm.xlu0 %551, %v524
        %v553 = vpop.permute.xlu0 %552
        %556 = vset.pattern.permute.xlu0 0
        %557 = vperm.xlu0 %556, %v525
        %v558 = vpop.permute.xlu0 %557
        %561 = vset.pattern.permute.xlu0 0
        %562 = vperm.xlu0 %561, %v526
        %v563 = vpop.permute.xlu0 %562
        %566 = vset.pattern.permute.xlu0 0
        %567 = vperm.xlu0 %566, %v527
        %v568 = vpop.permute.xlu0 %567
        %571 = vset.pattern.permute.xlu0 0
        %572 = vperm.xlu0 %571, %v528
        %v573 = vpop.permute.xlu0 %572
        %576 = vset.pattern.permute.xlu0 0
        %577 = vperm.xlu0 %576, %v529
        %v578 = vpop.permute.xlu0 %577
        %v580 = vmul.f32 %v509, %v533
        %v581 = vmul.f32 %v510, %v538
        %v582 = vmul.f32 %v511, %v543
        %v583 = vmul.f32 %v512, %v548
        %v584 = vmul.f32 %v513, %v553
        %v585 = vmul.f32 %v514, %v558
        %v586 = vmul.f32 %v515, %v563
        %v587 = vmul.f32 %v516, %v568
        %v588 = vmul.f32 %v517, %v573
        %v589 = vmul.f32 %v518, %v578
        %v590 = vld [vmem:[#allocation2 + $0x4] sm:$0xff]
        %v591 = vld [vmem:[#allocation2 + $0xc] sm:$0xff]
        %v592 = vld [vmem:[#allocation2 + $0x14] sm:$0xff]
        %v593 = vld [vmem:[#allocation2 + $0x1c] sm:$0xff]
        %v594 = vld [vmem:[#allocation2 + $0x24] sm:$0xff]
        %v595 = vld [vmem:[#allocation2 + $0x2c] sm:$0xff]
        %v596 = vld [vmem:[#allocation2 + $0x34] sm:$0xff]
        %v597 = vld [vmem:[#allocation2 + $0x3c] sm:$0xff]
        %v598 = vld [vmem:[#allocation2 + $0x44] sm:$0xff]
        %v599 = vld [vmem:[#allocation2 + $0x4c] sm:$0xff]
        %s600 = scalar_lea.vmem %s5, 320
        %v601 = vld [vmem:[%s600] sm:$0xff]
        %v602 = vld [vmem:[%s600 + $0x8] sm:$0xff]
        %v603 = vld [vmem:[%s600 + $0x10] sm:$0xff]
        %v604 = vld [vmem:[%s600 + $0x18] sm:$0xff]
        %v605 = vld [vmem:[%s600 + $0x20] sm:$0xff]
        %v606 = vld [vmem:[%s600 + $0x28] sm:$0xff]
        %v607 = vld [vmem:[%s600 + $0x30] sm:$0xff]
        %v608 = vld [vmem:[%s600 + $0x38] sm:$0xff]
        %v609 = vld [vmem:[%s600 + $0x40] sm:$0xff]
        %v610 = vld [vmem:[%s600 + $0x48] sm:$0xff]
        %612 = vset.pattern.permute.xlu0 0
        %613 = vperm.xlu0 %612, %v601
        %v614 = vpop.permute.xlu0 %613
        %617 = vset.pattern.permute.xlu0 0
        %618 = vperm.xlu0 %617, %v602
        %v619 = vpop.permute.xlu0 %618
        %622 = vset.pattern.permute.xlu0 0
        %623 = vperm.xlu0 %622, %v603
        %v624 = vpop.permute.xlu0 %623
        %627 = vset.pattern.permute.xlu0 0
        %628 = vperm.xlu0 %627, %v604
        %v629 = vpop.permute.xlu0 %628
        %632 = vset.pattern.permute.xlu0 0
        %633 = vperm.xlu0 %632, %v605
        %v634 = vpop.permute.xlu0 %633
        %637 = vset.pattern.permute.xlu0 0
        %638 = vperm.xlu0 %637, %v606
        %v639 = vpop.permute.xlu0 %638
        %642 = vset.pattern.permute.xlu0 0
        %643 = vperm.xlu0 %642, %v607
        %v644 = vpop.permute.xlu0 %643
        %647 = vset.pattern.permute.xlu0 0
        %648 = vperm.xlu0 %647, %v608
        %v649 = vpop.permute.xlu0 %648
        %652 = vset.pattern.permute.xlu0 0
        %653 = vperm.xlu0 %652, %v609
        %v654 = vpop.permute.xlu0 %653
        %657 = vset.pattern.permute.xlu0 0
        %658 = vperm.xlu0 %657, %v610
        %v659 = vpop.permute.xlu0 %658
        %v661 = vmul.f32 %v590, %v614
        %v662 = vmul.f32 %v591, %v619
        %v663 = vmul.f32 %v592, %v624
        %v664 = vmul.f32 %v593, %v629
        %v665 = vmul.f32 %v594, %v634
        %v666 = vmul.f32 %v595, %v639
        %v667 = vmul.f32 %v596, %v644
        %v668 = vmul.f32 %v597, %v649
        %v669 = vmul.f32 %v598, %v654
        %v670 = vmul.f32 %v599, %v659
        %v671 = vld [vmem:[%s1] sm:$0xff]
        %v672 = vld [vmem:[%s1 + $0x8] sm:$0xff]
        %s673 = scalar_lea.vmem %s1, 16
        %v674 = vld [vmem:[%s673] sm:$0xff]
        %v675 = vld [vmem:[%s673 + $0x8] sm:$0xff]
        %v677 = vsel %vm252, %v418, 0
        %v680 = vsel %vm252, %v419, 0
        %682 = vmatprep.subr.mxu0 0.0
        %683 = vmatpush1.msra.mxu0 %v674
        %684 = vmatprep.subr.mxu0 0.0
        %685 = vmatpush1.msra.mxu0 %v675
        %686 = vmatprep.subr.mxu0 0.0
        %687 = vmatpush1.msra.mxu0 0.0
        %688 = vmatprep.subr.mxu0 0.0
        %689 = vmatpush1.msra.mxu0 0.0
        %690 = vmatprep.subr.mxu0 0.0
        %691 = vmatpush1.msra.mxu0 0.0
        %692 = vmatprep.subr.mxu0 0.0
        %693 = vmatpush1.msra.mxu0 0.0
        %694 = vmatprep.subr.mxu0 0.0
        %695 = vmatpush1.msra.mxu0 0.0
        %696 = vmatprep.subr.mxu0 0.0
        %697 = vmatpush1.msra.mxu0 0.0
        %698 = vmatprep.subr.mxu0 0.0
        %699 = vmatpush1.msra.mxu0 0.0
        %700 = vmatprep.subr.mxu0 0.0
        %701 = vmatpush1.msra.mxu0 0.0
        %702 = vmatprep.subr.mxu0 0.0
        %703 = vmatpush1.msra.mxu0 0.0
        %704 = vmatprep.subr.mxu0 0.0
        %705 = vmatpush1.msra.mxu0 0.0
        %706 = vmatprep.subr.mxu0 0.0
        %707 = vmatpush1.msra.mxu0 0.0
        %708 = vmatprep.subr.mxu0 0.0
        %709 = vmatpush1.msra.mxu0 0.0
        %710 = vmatprep.subr.mxu0 0.0
        %711 = vmatpush1.msra.mxu0 0.0
        %712 = vmatprep.subr.mxu0 0.0
        %713 = vmatpush1.msra.mxu0 0.0
        %714 = vmatprep.subr.mxu0 0.0
        %715 = vmatpush1.msra.mxu0 0.0
        %716 = vmatprep.subr.mxu0 0.0
        %717 = vmatpush1.msra.mxu0 0.0
        %718 = vmatprep.subr.mxu0 0.0
        %719 = vmatpush1.msra.mxu0 0.0
        %720 = vmatprep.subr.mxu0 0.0
        %721 = vmatpush1.msra.mxu0 0.0
        %722 = vmatprep.subr.mxu0 0.0
        %723 = vmatpush1.msra.mxu0 0.0
        %724 = vmatprep.subr.mxu0 0.0
        %725 = vmatpush1.msra.mxu0 0.0
        %726 = vmatprep.subr.mxu0 0.0
        %727 = vmatpush1.msra.mxu0 0.0
        %728 = vmatprep.subr.mxu0 0.0
        %729 = vmatpush1.msra.mxu0 0.0
        %730 = vmatprep.subr.mxu0 0.0
        %731 = vmatpush1.msra.mxu0 0.0
        %732 = vmatprep.subr.mxu0 0.0
        %733 = vmatpush1.msra.mxu0 0.0
        %734 = vmatprep.subr.mxu0 0.0
        %735 = vmatpush1.msra.mxu0 0.0
        %736 = vmatprep.subr.mxu0 0.0
        %737 = vmatpush1.msra.mxu0 0.0
        %738 = vmatprep.subr.mxu0 0.0
        %739 = vmatpush1.msra.mxu0 0.0
        %740 = vmatprep.subr.mxu0 0.0
        %741 = vmatpush1.msra.mxu0 0.0
        %742 = vmatprep.subr.mxu0 0.0
        %743 = vmatpush1.msra.mxu0 0.0
        %744 = vmatprep.subr.mxu0 0.0
        %745 = vmatpush1.msra.mxu0 0.0
        %746 = vmatprep.mubr.f32.mxu0 0.0
        %747 = vmatmul.mubr.f32.gmra.mrb[0].mxu0 %v677
        %v748 = vpop.f32.mrb[0].mxu0
        %v749 = vadd.f32 0.0, %v748
        %v750 = vpop.f32.mrb[0].mxu0
        %751 = vmatprep.mubr.f32.mxu0 0.0
        %752 = vmatmul.mubr.f32.gmra.mrb[0].mxu0 %v680
        %v753 = vpop.f32.mrb[0].mxu0
        %v754 = vadd.f32 0.0, %v753
        %v755 = vpop.f32.mrb[0].mxu0
        %756 = vdwg.mxu0
        %v758 = vsel %vm252, %v337, 0
        %v761 = vsel %vm252, %v338, 0
        %763 = vmatprep.subr.mxu0 0.0
        %764 = vmatpush1.msra.mxu0 %v671
        %765 = vmatprep.subr.mxu0 0.0
        %766 = vmatpush1.msra.mxu0 %v672
        %767 = vmatprep.subr.mxu0 0.0
        %768 = vmatpush1.msra.mxu0 0.0
        %769 = vmatprep.subr.mxu0 0.0
        %770 = vmatpush1.msra.mxu0 0.0
        %771 = vmatprep.subr.mxu0 0.0
        %772 = vmatpush1.msra.mxu0 0.0
        %773 = vmatprep.subr.mxu0 0.0
        %774 = vmatpush1.msra.mxu0 0.0
        %775 = vmatprep.subr.mxu0 0.0
        %776 = vmatpush1.msra.mxu0 0.0
        %777 = vmatprep.subr.mxu0 0.0
        %778 = vmatpush1.msra.mxu0 0.0
        %779 = vmatprep.subr.mxu0 0.0
        %780 = vmatpush1.msra.mxu0 0.0
        %781 = vmatprep.subr.mxu0 0.0
        %782 = vmatpush1.msra.mxu0 0.0
        %783 = vmatprep.subr.mxu0 0.0
        %784 = vmatpush1.msra.mxu0 0.0
        %785 = vmatprep.subr.mxu0 0.0
        %786 = vmatpush1.msra.mxu0 0.0
        %787 = vmatprep.subr.mxu0 0.0
        %788 = vmatpush1.msra.mxu0 0.0
        %789 = vmatprep.subr.mxu0 0.0
        %790 = vmatpush1.msra.mxu0 0.0
        %791 = vmatprep.subr.mxu0 0.0
        %792 = vmatpush1.msra.mxu0 0.0
        %793 = vmatprep.subr.mxu0 0.0
        %794 = vmatpush1.msra.mxu0 0.0
        %795 = vmatprep.subr.mxu0 0.0
        %796 = vmatpush1.msra.mxu0 0.0
        %797 = vmatprep.subr.mxu0 0.0
        %798 = vmatpush1.msra.mxu0 0.0
        %799 = vmatprep.subr.mxu0 0.0
        %800 = vmatpush1.msra.mxu0 0.0
        %801 = vmatprep.subr.mxu0 0.0
        %802 = vmatpush1.msra.mxu0 0.0
        %803 = vmatprep.subr.mxu0 0.0
        %804 = vmatpush1.msra.mxu0 0.0
        %805 = vmatprep.subr.mxu0 0.0
        %806 = vmatpush1.msra.mxu0 0.0
        %807 = vmatprep.subr.mxu0 0.0
        %808 = vmatpush1.msra.mxu0 0.0
        %809 = vmatprep.subr.mxu0 0.0
        %810 = vmatpush1.msra.mxu0 0.0
        %811 = vmatprep.subr.mxu0 0.0
        %812 = vmatpush1.msra.mxu0 0.0
        %813 = vmatprep.subr.mxu0 0.0
        %814 = vmatpush1.msra.mxu0 0.0
        %815 = vmatprep.subr.mxu0 0.0
        %816 = vmatpush1.msra.mxu0 0.0
        %817 = vmatprep.subr.mxu0 0.0
        %818 = vmatpush1.msra.mxu0 0.0
        %819 = vmatprep.subr.mxu0 0.0
        %820 = vmatpush1.msra.mxu0 0.0
        %821 = vmatprep.subr.mxu0 0.0
        %822 = vmatpush1.msra.mxu0 0.0
        %823 = vmatprep.subr.mxu0 0.0
        %824 = vmatpush1.msra.mxu0 0.0
        %825 = vmatprep.subr.mxu0 0.0
        %826 = vmatpush1.msra.mxu0 0.0
        %827 = vmatprep.mubr.f32.mxu0 0.0
        %828 = vmatmul.mubr.f32.gmra.mrb[0].mxu0 %v758
        %v829 = vpop.f32.mrb[0].mxu0
        %v830 = vadd.f32 %v749, %v829
        %v831 = vpop.f32.mrb[0].mxu0
        %832 = vmatprep.mubr.f32.mxu0 0.0
        %833 = vmatmul.mubr.f32.gmra.mrb[0].mxu0 %v761
        %v834 = vpop.f32.mrb[0].mxu0
        %v835 = vadd.f32 %v754, %v834
        %v836 = vpop.f32.mrb[0].mxu0
        %837 = vdwg.mxu0
        %s838 = scalar_lea.vmem %s1, 32
        %v839 = vld [vmem:[%s838] sm:$0xff]
        %v840 = vld [vmem:[%s838 + $0x8] sm:$0xff]
        %v842 = vsel %vm252, %v499, 0
        %v845 = vsel %vm252, %v500, 0
        %847 = vmatprep.subr.mxu0 0.0
        %848 = vmatpush1.msra.mxu0 %v839
        %849 = vmatprep.subr.mxu0 0.0
        %850 = vmatpush1.msra.mxu0 %v840
        %851 = vmatprep.subr.mxu0 0.0
        %852 = vmatpush1.msra.mxu0 0.0
        %853 = vmatprep.subr.mxu0 0.0
        %854 = vmatpush1.msra.mxu0 0.0
        %855 = vmatprep.subr.mxu0 0.0
        %856 = vmatpush1.msra.mxu0 0.0
        %857 = vmatprep.subr.mxu0 0.0
        %858 = vmatpush1.msra.mxu0 0.0
        %859 = vmatprep.subr.mxu0 0.0
        %860 = vmatpush1.msra.mxu0 0.0
        %861 = vmatprep.subr.mxu0 0.0
        %862 = vmatpush1.msra.mxu0 0.0
        %863 = vmatprep.subr.mxu0 0.0
        %864 = vmatpush1.msra.mxu0 0.0
        %865 = vmatprep.subr.mxu0 0.0
        %866 = vmatpush1.msra.mxu0 0.0
        %867 = vmatprep.subr.mxu0 0.0
        %868 = vmatpush1.msra.mxu0 0.0
        %869 = vmatprep.subr.mxu0 0.0
        %870 = vmatpush1.msra.mxu0 0.0
        %871 = vmatprep.subr.mxu0 0.0
        %872 = vmatpush1.msra.mxu0 0.0
        %873 = vmatprep.subr.mxu0 0.0
        %874 = vmatpush1.msra.mxu0 0.0
        %875 = vmatprep.subr.mxu0 0.0
        %876 = vmatpush1.msra.mxu0 0.0
        %877 = vmatprep.subr.mxu0 0.0
        %878 = vmatpush1.msra.mxu0 0.0
        %879 = vmatprep.subr.mxu0 0.0
        %880 = vmatpush1.msra.mxu0 0.0
        %881 = vmatprep.subr.mxu0 0.0
        %882 = vmatpush1.msra.mxu0 0.0
        %883 = vmatprep.subr.mxu0 0.0
        %884 = vmatpush1.msra.mxu0 0.0
        %885 = vmatprep.subr.mxu0 0.0
        %886 = vmatpush1.msra.mxu0 0.0
        %887 = vmatprep.subr.mxu0 0.0
        %888 = vmatpush1.msra.mxu0 0.0
        %889 = vmatprep.subr.mxu0 0.0
        %890 = vmatpush1.msra.mxu0 0.0
        %891 = vmatprep.subr.mxu0 0.0
        %892 = vmatpush1.msra.mxu0 0.0
        %893 = vmatprep.subr.mxu0 0.0
        %894 = vmatpush1.msra.mxu0 0.0
        %895 = vmatprep.subr.mxu0 0.0
        %896 = vmatpush1.msra.mxu0 0.0
        %897 = vmatprep.subr.mxu0 0.0
        %898 = vmatpush1.msra.mxu0 0.0
        %899 = vmatprep.subr.mxu0 0.0
        %900 = vmatpush1.msra.mxu0 0.0
        %901 = vmatprep.subr.mxu0 0.0
        %902 = vmatpush1.msra.mxu0 0.0
        %903 = vmatprep.subr.mxu0 0.0
        %904 = vmatpush1.msra.mxu0 0.0
        %905 = vmatprep.subr.mxu0 0.0
        %906 = vmatpush1.msra.mxu0 0.0
        %907 = vmatprep.subr.mxu0 0.0
        %908 = vmatpush1.msra.mxu0 0.0
        %909 = vmatprep.subr.mxu0 0.0
        %910 = vmatpush1.msra.mxu0 0.0
        %911 = vmatprep.mubr.f32.mxu0 0.0
        %912 = vmatmul.mubr.f32.gmra.mrb[0].mxu0 %v842
        %v913 = vpop.f32.mrb[0].mxu0
        %v914 = vadd.f32 0.0, %v913
        %v915 = vpop.f32.mrb[0].mxu0
        %916 = vmatprep.mubr.f32.mxu0 0.0
        %917 = vmatmul.mubr.f32.gmra.mrb[0].mxu0 %v845
        %v918 = vpop.f32.mrb[0].mxu0
        %v919 = vadd.f32 0.0, %v918
        %v920 = vpop.f32.mrb[0].mxu0
        %921 = vdwg.mxu0
        %v922 = vadd.f32 %v830, %v914
        %v923 = vadd.f32 %v835, %v919
        %s924 = scalar_lea.vmem %s1, 48
        %v925 = vld [vmem:[%s924] sm:$0xff]
        %v926 = vld [vmem:[%s924 + $0x8] sm:$0xff]
        %v928 = vsel %vm252, %v580, 0
        %v931 = vsel %vm252, %v581, 0
        %933 = vmatprep.subr.mxu0 0.0
        %934 = vmatpush1.msra.mxu0 %v925
        %935 = vmatprep.subr.mxu0 0.0
        %936 = vmatpush1.msra.mxu0 %v926
        %937 = vmatprep.subr.mxu0 0.0
        %938 = vmatpush1.msra.mxu0 0.0
        %939 = vmatprep.subr.mxu0 0.0
        %940 = vmatpush1.msra.mxu0 0.0
        %941 = vmatprep.subr.mxu0 0.0
        %942 = vmatpush1.msra.mxu0 0.0
        %943 = vmatprep.subr.mxu0 0.0
        %944 = vmatpush1.msra.mxu0 0.0
        %945 = vmatprep.subr.mxu0 0.0
        %946 = vmatpush1.msra.mxu0 0.0
        %947 = vmatprep.subr.mxu0 0.0
        %948 = vmatpush1.msra.mxu0 0.0
        %949 = vmatprep.subr.mxu0 0.0
        %950 = vmatpush1.msra.mxu0 0.0
        %951 = vmatprep.subr.mxu0 0.0
        %952 = vmatpush1.msra.mxu0 0.0
        %953 = vmatprep.subr.mxu0 0.0
        %954 = vmatpush1.msra.mxu0 0.0
        %955 = vmatprep.subr.mxu0 0.0
        %956 = vmatpush1.msra.mxu0 0.0
        %957 = vmatprep.subr.mxu0 0.0
        %958 = vmatpush1.msra.mxu0 0.0
        %959 = vmatprep.subr.mxu0 0.0
        %960 = vmatpush1.msra.mxu0 0.0
        %961 = vmatprep.subr.mxu0 0.0
        %962 = vmatpush1.msra.mxu0 0.0
        %963 = vmatprep.subr.mxu0 0.0
        %964 = vmatpush1.msra.mxu0 0.0
        %965 = vmatprep.subr.mxu0 0.0
        %966 = vmatpush1.msra.mxu0 0.0
        %967 = vmatprep.subr.mxu0 0.0
        %968 = vmatpush1.msra.mxu0 0.0
        %969 = vmatprep.subr.mxu0 0.0
        %970 = vmatpush1.msra.mxu0 0.0
        %971 = vmatprep.subr.mxu0 0.0
        %972 = vmatpush1.msra.mxu0 0.0
        %973 = vmatprep.subr.mxu0 0.0
        %974 = vmatpush1.msra.mxu0 0.0
        %975 = vmatprep.subr.mxu0 0.0
        %976 = vmatpush1.msra.mxu0 0.0
        %977 = vmatprep.subr.mxu0 0.0
        %978 = vmatpush1.msra.mxu0 0.0
        %979 = vmatprep.subr.mxu0 0.0
        %980 = vmatpush1.msra.mxu0 0.0
        %981 = vmatprep.subr.mxu0 0.0
        %982 = vmatpush1.msra.mxu0 0.0
        %983 = vmatprep.subr.mxu0 0.0
        %984 = vmatpush1.msra.mxu0 0.0
        %985 = vmatprep.subr.mxu0 0.0
        %986 = vmatpush1.msra.mxu0 0.0
        %987 = vmatprep.subr.mxu0 0.0
        %988 = vmatpush1.msra.mxu0 0.0
        %989 = vmatprep.subr.mxu0 0.0
        %990 = vmatpush1.msra.mxu0 0.0
        %991 = vmatprep.subr.mxu0 0.0
        %992 = vmatpush1.msra.mxu0 0.0
        %993 = vmatprep.subr.mxu0 0.0
        %994 = vmatpush1.msra.mxu0 0.0
        %995 = vmatprep.subr.mxu0 0.0
        %996 = vmatpush1.msra.mxu0 0.0
        %997 = vmatprep.mubr.f32.mxu0 0.0
        %998 = vmatmul.mubr.f32.gmra.mrb[0].mxu0 %v928
        %v999 = vpop.f32.mrb[0].mxu0
        %v1000 = vadd.f32 0.0, %v999
        %v1001 = vpop.f32.mrb[0].mxu0
        %1002 = vmatprep.mubr.f32.mxu0 0.0
        %1003 = vmatmul.mubr.f32.gmra.mrb[0].mxu0 %v931
        %v1004 = vpop.f32.mrb[0].mxu0
        %v1005 = vadd.f32 0.0, %v1004
        %v1006 = vpop.f32.mrb[0].mxu0
        %1007 = vdwg.mxu0
        %v1008 = vadd.f32 %v922, %v1000
        %v1009 = vadd.f32 %v923, %v1005
        %s1010 = scalar_lea.vmem %s1, 64
        %v1011 = vld [vmem:[%s1010] sm:$0xff]
        %v1012 = vld [vmem:[%s1010 + $0x8] sm:$0xff]
        %v1014 = vsel %vm252, %v661, 0
        %v1017 = vsel %vm252, %v662, 0
        %1019 = vmatprep.subr.mxu0 0.0
        %1020 = vmatpush1.msra.mxu0 %v1011
        %1021 = vmatprep.subr.mxu0 0.0
        %1022 = vmatpush1.msra.mxu0 %v1012
        %1023 = vmatprep.subr.mxu0 0.0
        %1024 = vmatpush1.msra.mxu0 0.0
        %1025 = vmatprep.subr.mxu0 0.0
        %1026 = vmatpush1.msra.mxu0 0.0
        %1027 = vmatprep.subr.mxu0 0.0
        %1028 = vmatpush1.msra.mxu0 0.0
        %1029 = vmatprep.subr.mxu0 0.0
        %1030 = vmatpush1.msra.mxu0 0.0
        %1031 = vmatprep.subr.mxu0 0.0
        %1032 = vmatpush1.msra.mxu0 0.0
        %1033 = vmatprep.subr.mxu0 0.0
        %1034 = vmatpush1.msra.mxu0 0.0
        %1035 = vmatprep.subr.mxu0 0.0
        %1036 = vmatpush1.msra.mxu0 0.0
        %1037 = vmatprep.subr.mxu0 0.0
        %1038 = vmatpush1.msra.mxu0 0.0
        %1039 = vmatprep.subr.mxu0 0.0
        %1040 = vmatpush1.msra.mxu0 0.0
        %1041 = vmatprep.subr.mxu0 0.0
        %1042 = vmatpush1.msra.mxu0 0.0
        %1043 = vmatprep.subr.mxu0 0.0
        %1044 = vmatpush1.msra.mxu0 0.0
        %1045 = vmatprep.subr.mxu0 0.0
        %1046 = vmatpush1.msra.mxu0 0.0
        %1047 = vmatprep.subr.mxu0 0.0
        %1048 = vmatpush1.msra.mxu0 0.0
        %1049 = vmatprep.subr.mxu0 0.0
        %1050 = vmatpush1.msra.mxu0 0.0
        %1051 = vmatprep.subr.mxu0 0.0
        %1052 = vmatpush1.msra.mxu0 0.0
        %1053 = vmatprep.subr.mxu0 0.0
        %1054 = vmatpush1.msra.mxu0 0.0
        %1055 = vmatprep.subr.mxu0 0.0
        %1056 = vmatpush1.msra.mxu0 0.0
        %1057 = vmatprep.subr.mxu0 0.0
        %1058 = vmatpush1.msra.mxu0 0.0
        %1059 = vmatprep.subr.mxu0 0.0
        %1060 = vmatpush1.msra.mxu0 0.0
        %1061 = vmatprep.subr.mxu0 0.0
        %1062 = vmatpush1.msra.mxu0 0.0
        %1063 = vmatprep.subr.mxu0 0.0
        %1064 = vmatpush1.msra.mxu0 0.0
        %1065 = vmatprep.subr.mxu0 0.0
        %1066 = vmatpush1.msra.mxu0 0.0
        %1067 = vmatprep.subr.mxu0 0.0
        %1068 = vmatpush1.msra.mxu0 0.0
        %1069 = vmatprep.subr.mxu0 0.0
        %1070 = vmatpush1.msra.mxu0 0.0
        %1071 = vmatprep.subr.mxu0 0.0
        %1072 = vmatpush1.msra.mxu0 0.0
        %1073 = vmatprep.subr.mxu0 0.0
        %1074 = vmatpush1.msra.mxu0 0.0
        %1075 = vmatprep.subr.mxu0 0.0
        %1076 = vmatpush1.msra.mxu0 0.0
        %1077 = vmatprep.subr.mxu0 0.0
        %1078 = vmatpush1.msra.mxu0 0.0
        %1079 = vmatprep.subr.mxu0 0.0
        %1080 = vmatpush1.msra.mxu0 0.0
        %1081 = vmatprep.subr.mxu0 0.0
        %1082 = vmatpush1.msra.mxu0 0.0
        %1083 = vmatprep.mubr.f32.mxu0 0.0
        %1084 = vmatmul.mubr.f32.gmra.mrb[0].mxu0 %v1014
        %v1085 = vpop.f32.mrb[0].mxu0
        %v1086 = vadd.f32 0.0, %v1085
        %v1087 = vpop.f32.mrb[0].mxu0
        %1088 = vmatprep.mubr.f32.mxu0 0.0
        %1089 = vmatmul.mubr.f32.gmra.mrb[0].mxu0 %v1017
        %v1090 = vpop.f32.mrb[0].mxu0
        %v1091 = vadd.f32 0.0, %v1090
        %v1092 = vpop.f32.mrb[0].mxu0
        %1093 = vdwg.mxu0
        %v1094 = vadd.f32 %v1008, %v1086
        %v1095 = vadd.f32 %v1009, %v1091
        %s1096 = scalar_lea.vmem %s1, 80
        %v1097 = vld [vmem:[%s1096] sm:$0xff]
        %v1098 = vld [vmem:[%s1096 + $0x8] sm:$0xff]
        %v1100 = vsel %vm252, %v339, 0
        %v1103 = vsel %vm252, %v340, 0
        %1105 = vmatprep.subr.mxu0 0.0
        %1106 = vmatpush1.msra.mxu0 %v1097
        %1107 = vmatprep.subr.mxu0 0.0
        %1108 = vmatpush1.msra.mxu0 %v1098
        %1109 = vmatprep.subr.mxu0 0.0
        %1110 = vmatpush1.msra.mxu0 0.0
        %1111 = vmatprep.subr.mxu0 0.0
        %1112 = vmatpush1.msra.mxu0 0.0
        %1113 = vmatprep.subr.mxu0 0.0
        %1114 = vmatpush1.msra.mxu0 0.0
        %1115 = vmatprep.subr.mxu0 0.0
        %1116 = vmatpush1.msra.mxu0 0.0
        %1117 = vmatprep.subr.mxu0 0.0
        %1118 = vmatpush1.msra.mxu0 0.0
        %1119 = vmatprep.subr.mxu0 0.0
        %1120 = vmatpush1.msra.mxu0 0.0
        %1121 = vmatprep.subr.mxu0 0.0
        %1122 = vmatpush1.msra.mxu0 0.0
        %1123 = vmatprep.subr.mxu0 0.0
        %1124 = vmatpush1.msra.mxu0 0.0
        %1125 = vmatprep.subr.mxu0 0.0
        %1126 = vmatpush1.msra.mxu0 0.0
        %1127 = vmatprep.subr.mxu0 0.0
        %1128 = vmatpush1.msra.mxu0 0.0
        %1129 = vmatprep.subr.mxu0 0.0
        %1130 = vmatpush1.msra.mxu0 0.0
        %1131 = vmatprep.subr.mxu0 0.0
        %1132 = vmatpush1.msra.mxu0 0.0
        %1133 = vmatprep.subr.mxu0 0.0
        %1134 = vmatpush1.msra.mxu0 0.0
        %1135 = vmatprep.subr.mxu0 0.0
        %1136 = vmatpush1.msra.mxu0 0.0
        %1137 = vmatprep.subr.mxu0 0.0
        %1138 = vmatpush1.msra.mxu0 0.0
        %1139 = vmatprep.subr.mxu0 0.0
        %1140 = vmatpush1.msra.mxu0 0.0
        %1141 = vmatprep.subr.mxu0 0.0
        %1142 = vmatpush1.msra.mxu0 0.0
        %1143 = vmatprep.subr.mxu0 0.0
        %1144 = vmatpush1.msra.mxu0 0.0
        %1145 = vmatprep.subr.mxu0 0.0
        %1146 = vmatpush1.msra.mxu0 0.0
        %1147 = vmatprep.subr.mxu0 0.0
        %1148 = vmatpush1.msra.mxu0 0.0
        %1149 = vmatprep.subr.mxu0 0.0
        %1150 = vmatpush1.msra.mxu0 0.0
        %1151 = vmatprep.subr.mxu0 0.0
        %1152 = vmatpush1.msra.mxu0 0.0
        %1153 = vmatprep.subr.mxu0 0.0
        %1154 = vmatpush1.msra.mxu0 0.0
        %1155 = vmatprep.subr.mxu0 0.0
        %1156 = vmatpush1.msra.mxu0 0.0
        %1157 = vmatprep.subr.mxu0 0.0
        %1158 = vmatpush1.msra.mxu0 0.0
        %1159 = vmatprep.subr.mxu0 0.0
        %1160 = vmatpush1.msra.mxu0 0.0
        %1161 = vmatprep.subr.mxu0 0.0
        %1162 = vmatpush1.msra.mxu0 0.0
        %1163 = vmatprep.subr.mxu0 0.0
        %1164 = vmatpush1.msra.mxu0 0.0
        %1165 = vmatprep.subr.mxu0 0.0
        %1166 = vmatpush1.msra.mxu0 0.0
        %1167 = vmatprep.subr.mxu0 0.0
        %1168 = vmatpush1.msra.mxu0 0.0
        %1169 = vmatprep.mubr.f32.mxu0 0.0
        %1170 = vmatmul.mubr.f32.gmra.mrb[0].mxu0 %v1100
        %v1171 = vpop.f32.mrb[0].mxu0
        %v1172 = vadd.f32 0.0, %v1171
        %v1173 = vpop.f32.mrb[0].mxu0
        %1174 = vmatprep.mubr.f32.mxu0 0.0
        %1175 = vmatmul.mubr.f32.gmra.mrb[0].mxu0 %v1103
        %v1176 = vpop.f32.mrb[0].mxu0
        %v1177 = vadd.f32 0.0, %v1176
        %v1178 = vpop.f32.mrb[0].mxu0
        %1179 = vdwg.mxu0
        %v1180 = vadd.f32 %v1094, %v1172
        %v1181 = vadd.f32 %v1095, %v1177
        %s1182 = scalar_lea.vmem %s1, 96
        %v1183 = vld [vmem:[%s1182] sm:$0xff]
        %v1184 = vld [vmem:[%s1182 + $0x8] sm:$0xff]
        %v1186 = vsel %vm252, %v420, 0
        %v1189 = vsel %vm252, %v421, 0
        %1191 = vmatprep.subr.mxu0 0.0
        %1192 = vmatpush1.msra.mxu0 %v1183
        %1193 = vmatprep.subr.mxu0 0.0
        %1194 = vmatpush1.msra.mxu0 %v1184
        %1195 = vmatprep.subr.mxu0 0.0
        %1196 = vmatpush1.msra.mxu0 0.0
        %1197 = vmatprep.subr.mxu0 0.0
        %1198 = vmatpush1.msra.mxu0 0.0
        %1199 = vmatprep.subr.mxu0 0.0
        %1200 = vmatpush1.msra.mxu0 0.0
        %1201 = vmatprep.subr.mxu0 0.0
        %1202 = vmatpush1.msra.mxu0 0.0
        %1203 = vmatprep.subr.mxu0 0.0
        %1204 = vmatpush1.msra.mxu0 0.0
        %1205 = vmatprep.subr.mxu0 0.0
        %1206 = vmatpush1.msra.mxu0 0.0
        %1207 = vmatprep.subr.mxu0 0.0
        %1208 = vmatpush1.msra.mxu0 0.0
        %1209 = vmatprep.subr.mxu0 0.0
        %1210 = vmatpush1.msra.mxu0 0.0
        %1211 = vmatprep.subr.mxu0 0.0
        %1212 = vmatpush1.msra.mxu0 0.0
        %1213 = vmatprep.subr.mxu0 0.0
        %1214 = vmatpush1.msra.mxu0 0.0
        %1215 = vmatprep.subr.mxu0 0.0
        %1216 = vmatpush1.msra.mxu0 0.0
        %1217 = vmatprep.subr.mxu0 0.0
        %1218 = vmatpush1.msra.mxu0 0.0
        %1219 = vmatprep.subr.mxu0 0.0
        %1220 = vmatpush1.msra.mxu0 0.0
        %1221 = vmatprep.subr.mxu0 0.0
        %1222 = vmatpush1.msra.mxu0 0.0
        %1223 = vmatprep.subr.mxu0 0.0
        %1224 = vmatpush1.msra.mxu0 0.0
        %1225 = vmatprep.subr.mxu0 0.0
        %1226 = vmatpush1.msra.mxu0 0.0
        %1227 = vmatprep.subr.mxu0 0.0
        %1228 = vmatpush1.msra.mxu0 0.0
        %1229 = vmatprep.subr.mxu0 0.0
        %1230 = vmatpush1.msra.mxu0 0.0
        %1231 = vmatprep.subr.mxu0 0.0
        %1232 = vmatpush1.msra.mxu0 0.0
        %1233 = vmatprep.subr.mxu0 0.0
        %1234 = vmatpush1.msra.mxu0 0.0
        %1235 = vmatprep.subr.mxu0 0.0
        %1236 = vmatpush1.msra.mxu0 0.0
        %1237 = vmatprep.subr.mxu0 0.0
        %1238 = vmatpush1.msra.mxu0 0.0
        %1239 = vmatprep.subr.mxu0 0.0
        %1240 = vmatpush1.msra.mxu0 0.0
        %1241 = vmatprep.subr.mxu0 0.0
        %1242 = vmatpush1.msra.mxu0 0.0
        %1243 = vmatprep.subr.mxu0 0.0
        %1244 = vmatpush1.msra.mxu0 0.0
        %1245 = vmatprep.subr.mxu0 0.0
        %1246 = vmatpush1.msra.mxu0 0.0
        %1247 = vmatprep.subr.mxu0 0.0
        %1248 = vmatpush1.msra.mxu0 0.0
        %1249 = vmatprep.subr.mxu0 0.0
        %1250 = vmatpush1.msra.mxu0 0.0
        %1251 = vmatprep.subr.mxu0 0.0
        %1252 = vmatpush1.msra.mxu0 0.0
        %1253 = vmatprep.subr.mxu0 0.0
        %1254 = vmatpush1.msra.mxu0 0.0
        %1255 = vmatprep.mubr.f32.mxu0 0.0
        %1256 = vmatmul.mubr.f32.gmra.mrb[0].mxu0 %v1186
        %v1257 = vpop.f32.mrb[0].mxu0
        %v1258 = vadd.f32 0.0, %v1257
        %v1259 = vpop.f32.mrb[0].mxu0
        %1260 = vmatprep.mubr.f32.mxu0 0.0
        %1261 = vmatmul.mubr.f32.gmra.mrb[0].mxu0 %v1189
        %v1262 = vpop.f32.mrb[0].mxu0
        %v1263 = vadd.f32 0.0, %v1262
        %v1264 = vpop.f32.mrb[0].mxu0
        %1265 = vdwg.mxu0
        %v1266 = vadd.f32 %v1180, %v1258
        %v1267 = vadd.f32 %v1181, %v1263
        %s1268 = scalar_lea.vmem %s1, 112
        %v1269 = vld [vmem:[%s1268] sm:$0xff]
        %v1270 = vld [vmem:[%s1268 + $0x8] sm:$0xff]
        %v1272 = vsel %vm252, %v501, 0
        %v1275 = vsel %vm252, %v502, 0
        %1277 = vmatprep.subr.mxu0 0.0
        %1278 = vmatpush1.msra.mxu0 %v1269
        %1279 = vmatprep.subr.mxu0 0.0
        %1280 = vmatpush1.msra.mxu0 %v1270
        %1281 = vmatprep.subr.mxu0 0.0
        %1282 = vmatpush1.msra.mxu0 0.0
        %1283 = vmatprep.subr.mxu0 0.0
        %1284 = vmatpush1.msra.mxu0 0.0
        %1285 = vmatprep.subr.mxu0 0.0
        %1286 = vmatpush1.msra.mxu0 0.0
        %1287 = vmatprep.subr.mxu0 0.0
        %1288 = vmatpush1.msra.mxu0 0.0
        %1289 = vmatprep.subr.mxu0 0.0
        %1290 = vmatpush1.msra.mxu0 0.0
        %1291 = vmatprep.subr.mxu0 0.0
        %1292 = vmatpush1.msra.mxu0 0.0
        %1293 = vmatprep.subr.mxu0 0.0
        %1294 = vmatpush1.msra.mxu0 0.0
        %1295 = vmatprep.subr.mxu0 0.0
        %1296 = vmatpush1.msra.mxu0 0.0
        %1297 = vmatprep.subr.mxu0 0.0
        %1298 = vmatpush1.msra.mxu0 0.0
        %1299 = vmatprep.subr.mxu0 0.0
        %1300 = vmatpush1.msra.mxu0 0.0
        %1301 = vmatprep.subr.mxu0 0.0
        %1302 = vmatpush1.msra.mxu0 0.0
        %1303 = vmatprep.subr.mxu0 0.0
        %1304 = vmatpush1.msra.mxu0 0.0
        %1305 = vmatprep.subr.mxu0 0.0
        %1306 = vmatpush1.msra.mxu0 0.0
        %1307 = vmatprep.subr.mxu0 0.0
        %1308 = vmatpush1.msra.mxu0 0.0
        %1309 = vmatprep.subr.mxu0 0.0
        %1310 = vmatpush1.msra.mxu0 0.0
        %1311 = vmatprep.subr.mxu0 0.0
        %1312 = vmatpush1.msra.mxu0 0.0
        %1313 = vmatprep.subr.mxu0 0.0
        %1314 = vmatpush1.msra.mxu0 0.0
        %1315 = vmatprep.subr.mxu0 0.0
        %1316 = vmatpush1.msra.mxu0 0.0
        %1317 = vmatprep.subr.mxu0 0.0
        %1318 = vmatpush1.msra.mxu0 0.0
        %1319 = vmatprep.subr.mxu0 0.0
        %1320 = vmatpush1.msra.mxu0 0.0
        %1321 = vmatprep.subr.mxu0 0.0
        %1322 = vmatpush1.msra.mxu0 0.0
        %1323 = vmatprep.subr.mxu0 0.0
        %1324 = vmatpush1.msra.mxu0 0.0
        %1325 = vmatprep.subr.mxu0 0.0
        %1326 = vmatpush1.msra.mxu0 0.0
        %1327 = vmatprep.subr.mxu0 0.0
        %1328 = vmatpush1.msra.mxu0 0.0
        %1329 = vmatprep.subr.mxu0 0.0
        %1330 = vmatpush1.msra.mxu0 0.0
        %1331 = vmatprep.subr.mxu0 0.0
        %1332 = vmatpush1.msra.mxu0 0.0
        %1333 = vmatprep.subr.mxu0 0.0
        %1334 = vmatpush1.msra.mxu0 0.0
        %1335 = vmatprep.subr.mxu0 0.0
        %1336 = vmatpush1.msra.mxu0 0.0
        %1337 = vmatprep.subr.mxu0 0.0
        %1338 = vmatpush1.msra.mxu0 0.0
        %1339 = vmatprep.subr.mxu0 0.0
        %1340 = vmatpush1.msra.mxu0 0.0
        %1341 = vmatprep.mubr.f32.mxu0 0.0
        %1342 = vmatmul.mubr.f32.gmra.mrb[0].mxu0 %v1272
        %v1343 = vpop.f32.mrb[0].mxu0
        %v1344 = vadd.f32 0.0, %v1343
        %v1345 = vpop.f32.mrb[0].mxu0
        %1346 = vmatprep.mubr.f32.mxu0 0.0
        %1347 = vmatmul.mubr.f32.gmra.mrb[0].mxu0 %v1275
        %v1348 = vpop.f32.mrb[0].mxu0
        %v1349 = vadd.f32 0.0, %v1348
        %v1350 = vpop.f32.mrb[0].mxu0
        %1351 = vdwg.mxu0
        %v1352 = vadd.f32 %v1266, %v1344
        %v1353 = vadd.f32 %v1267, %v1349
        %s1354 = scalar_lea.vmem %s1, 128
        %v1355 = vld [vmem:[%s1354] sm:$0xff]
        %v1356 = vld [vmem:[%s1354 + $0x8] sm:$0xff]
        %v1358 = vsel %vm252, %v582, 0
        %v1361 = vsel %vm252, %v583, 0
        %1363 = vmatprep.subr.mxu0 0.0
        %1364 = vmatpush1.msra.mxu0 %v1355
        %1365 = vmatprep.subr.mxu0 0.0
        %1366 = vmatpush1.msra.mxu0 %v1356
        %1367 = vmatprep.subr.mxu0 0.0
        %1368 = vmatpush1.msra.mxu0 0.0
        %1369 = vmatprep.subr.mxu0 0.0
        %1370 = vmatpush1.msra.mxu0 0.0
        %1371 = vmatprep.subr.mxu0 0.0
        %1372 = vmatpush1.msra.mxu0 0.0
        %1373 = vmatprep.subr.mxu0 0.0
        %1374 = vmatpush1.msra.mxu0 0.0
        %1375 = vmatprep.subr.mxu0 0.0
        %1376 = vmatpush1.msra.mxu0 0.0
        %1377 = vmatprep.subr.mxu0 0.0
        %1378 = vmatpush1.msra.mxu0 0.0
        %1379 = vmatprep.subr.mxu0 0.0
        %1380 = vmatpush1.msra.mxu0 0.0
        %1381 = vmatprep.subr.mxu0 0.0
        %1382 = vmatpush1.msra.mxu0 0.0
        %1383 = vmatprep.subr.mxu0 0.0
        %1384 = vmatpush1.msra.mxu0 0.0
        %1385 = vmatprep.subr.mxu0 0.0
        %1386 = vmatpush1.msra.mxu0 0.0
        %1387 = vmatprep.subr.mxu0 0.0
        %1388 = vmatpush1.msra.mxu0 0.0
        %1389 = vmatprep.subr.mxu0 0.0
        %1390 = vmatpush1.msra.mxu0 0.0
        %1391 = vmatprep.subr.mxu0 0.0
        %1392 = vmatpush1.msra.mxu0 0.0
        %1393 = vmatprep.subr.mxu0 0.0
        %1394 = vmatpush1.msra.mxu0 0.0
        %1395 = vmatprep.subr.mxu0 0.0
        %1396 = vmatpush1.msra.mxu0 0.0
        %1397 = vmatprep.subr.mxu0 0.0
        %1398 = vmatpush1.msra.mxu0 0.0
        %1399 = vmatprep.subr.mxu0 0.0
        %1400 = vmatpush1.msra.mxu0 0.0
        %1401 = vmatprep.subr.mxu0 0.0
        %1402 = vmatpush1.msra.mxu0 0.0
        %1403 = vmatprep.subr.mxu0 0.0
        %1404 = vmatpush1.msra.mxu0 0.0
        %1405 = vmatprep.subr.mxu0 0.0
        %1406 = vmatpush1.msra.mxu0 0.0
        %1407 = vmatprep.subr.mxu0 0.0
        %1408 = vmatpush1.msra.mxu0 0.0
        %1409 = vmatprep.subr.mxu0 0.0
        %1410 = vmatpush1.msra.mxu0 0.0
        %1411 = vmatprep.subr.mxu0 0.0
        %1412 = vmatpush1.msra.mxu0 0.0
        %1413 = vmatprep.subr.mxu0 0.0
        %1414 = vmatpush1.msra.mxu0 0.0
        %1415 = vmatprep.subr.mxu0 0.0
        %1416 = vmatpush1.msra.mxu0 0.0
        %1417 = vmatprep.subr.mxu0 0.0
        %1418 = vmatpush1.msra.mxu0 0.0
        %1419 = vmatprep.subr.mxu0 0.0
        %1420 = vmatpush1.msra.mxu0 0.0
        %1421 = vmatprep.subr.mxu0 0.0
        %1422 = vmatpush1.msra.mxu0 0.0
        %1423 = vmatprep.subr.mxu0 0.0
        %1424 = vmatpush1.msra.mxu0 0.0
        %1425 = vmatprep.subr.mxu0 0.0
        %1426 = vmatpush1.msra.mxu0 0.0
        %1427 = vmatprep.mubr.f32.mxu0 0.0
        %1428 = vmatmul.mubr.f32.gmra.mrb[0].mxu0 %v1358
        %v1429 = vpop.f32.mrb[0].mxu0
        %v1430 = vadd.f32 0.0, %v1429
        %v1431 = vpop.f32.mrb[0].mxu0
        %1432 = vmatprep.mubr.f32.mxu0 0.0
        %1433 = vmatmul.mubr.f32.gmra.mrb[0].mxu0 %v1361
        %v1434 = vpop.f32.mrb[0].mxu0
        %v1435 = vadd.f32 0.0, %v1434
        %v1436 = vpop.f32.mrb[0].mxu0
        %1437 = vdwg.mxu0
        %v1438 = vadd.f32 %v1352, %v1430
        %v1439 = vadd.f32 %v1353, %v1435
        %s1440 = scalar_lea.vmem %s1, 144
        %v1441 = vld [vmem:[%s1440] sm:$0xff]
        %v1442 = vld [vmem:[%s1440 + $0x8] sm:$0xff]
        %v1444 = vsel %vm252, %v663, 0
        %v1447 = vsel %vm252, %v664, 0
        %1449 = vmatprep.subr.mxu0 0.0
        %1450 = vmatpush1.msra.mxu0 %v1441
        %1451 = vmatprep.subr.mxu0 0.0
        %1452 = vmatpush1.msra.mxu0 %v1442
        %1453 = vmatprep.subr.mxu0 0.0
        %1454 = vmatpush1.msra.mxu0 0.0
        %1455 = vmatprep.subr.mxu0 0.0
        %1456 = vmatpush1.msra.mxu0 0.0
        %1457 = vmatprep.subr.mxu0 0.0
        %1458 = vmatpush1.msra.mxu0 0.0
        %1459 = vmatprep.subr.mxu0 0.0
        %1460 = vmatpush1.msra.mxu0 0.0
        %1461 = vmatprep.subr.mxu0 0.0
        %1462 = vmatpush1.msra.mxu0 0.0
        %1463 = vmatprep.subr.mxu0 0.0
        %1464 = vmatpush1.msra.mxu0 0.0
        %1465 = vmatprep.subr.mxu0 0.0
        %1466 = vmatpush1.msra.mxu0 0.0
        %1467 = vmatprep.subr.mxu0 0.0
        %1468 = vmatpush1.msra.mxu0 0.0
        %1469 = vmatprep.subr.mxu0 0.0
        %1470 = vmatpush1.msra.mxu0 0.0
        %1471 = vmatprep.subr.mxu0 0.0
        %1472 = vmatpush1.msra.mxu0 0.0
        %1473 = vmatprep.subr.mxu0 0.0
        %1474 = vmatpush1.msra.mxu0 0.0
        %1475 = vmatprep.subr.mxu0 0.0
        %1476 = vmatpush1.msra.mxu0 0.0
        %1477 = vmatprep.subr.mxu0 0.0
        %1478 = vmatpush1.msra.mxu0 0.0
        %1479 = vmatprep.subr.mxu0 0.0
        %1480 = vmatpush1.msra.mxu0 0.0
        %1481 = vmatprep.subr.mxu0 0.0
        %1482 = vmatpush1.msra.mxu0 0.0
        %1483 = vmatprep.subr.mxu0 0.0
        %1484 = vmatpush1.msra.mxu0 0.0
        %1485 = vmatprep.subr.mxu0 0.0
        %1486 = vmatpush1.msra.mxu0 0.0
        %1487 = vmatprep.subr.mxu0 0.0
        %1488 = vmatpush1.msra.mxu0 0.0
        %1489 = vmatprep.subr.mxu0 0.0
        %1490 = vmatpush1.msra.mxu0 0.0
        %1491 = vmatprep.subr.mxu0 0.0
        %1492 = vmatpush1.msra.mxu0 0.0
        %1493 = vmatprep.subr.mxu0 0.0
        %1494 = vmatpush1.msra.mxu0 0.0
        %1495 = vmatprep.subr.mxu0 0.0
        %1496 = vmatpush1.msra.mxu0 0.0
        %1497 = vmatprep.subr.mxu0 0.0
        %1498 = vmatpush1.msra.mxu0 0.0
        %1499 = vmatprep.subr.mxu0 0.0
        %1500 = vmatpush1.msra.mxu0 0.0
        %1501 = vmatprep.subr.mxu0 0.0
        %1502 = vmatpush1.msra.mxu0 0.0
        %1503 = vmatprep.subr.mxu0 0.0
        %1504 = vmatpush1.msra.mxu0 0.0
        %1505 = vmatprep.subr.mxu0 0.0
        %1506 = vmatpush1.msra.mxu0 0.0
        %1507 = vmatprep.subr.mxu0 0.0
        %1508 = vmatpush1.msra.mxu0 0.0
        %1509 = vmatprep.subr.mxu0 0.0
        %1510 = vmatpush1.msra.mxu0 0.0
        %1511 = vmatprep.subr.mxu0 0.0
        %1512 = vmatpush1.msra.mxu0 0.0
        %1513 = vmatprep.mubr.f32.mxu0 0.0
        %1514 = vmatmul.mubr.f32.gmra.mrb[0].mxu0 %v1444
        %v1515 = vpop.f32.mrb[0].mxu0
        %v1516 = vadd.f32 0.0, %v1515
        %v1517 = vpop.f32.mrb[0].mxu0
        %1518 = vmatprep.mubr.f32.mxu0 0.0
        %1519 = vmatmul.mubr.f32.gmra.mrb[0].mxu0 %v1447
        %v1520 = vpop.f32.mrb[0].mxu0
        %v1521 = vadd.f32 0.0, %v1520
        %v1522 = vpop.f32.mrb[0].mxu0
        %1523 = vdwg.mxu0
        %v1524 = vadd.f32 %v1438, %v1516
        %v1525 = vadd.f32 %v1439, %v1521
        %s1526 = scalar_lea.vmem %s1, 160
        %v1527 = vld [vmem:[%s1526] sm:$0xff]
        %v1528 = vld [vmem:[%s1526 + $0x8] sm:$0xff]
        %v1530 = vsel %vm252, %v341, 0
        %v1533 = vsel %vm252, %v342, 0
        %1535 = vmatprep.subr.mxu0 0.0
        %1536 = vmatpush1.msra.mxu0 %v1527
        %1537 = vmatprep.subr.mxu0 0.0
        %1538 = vmatpush1.msra.mxu0 %v1528
        %1539 = vmatprep.subr.mxu0 0.0
        %1540 = vmatpush1.msra.mxu0 0.0
        %1541 = vmatprep.subr.mxu0 0.0
        %1542 = vmatpush1.msra.mxu0 0.0
        %1543 = vmatprep.subr.mxu0 0.0
        %1544 = vmatpush1.msra.mxu0 0.0
        %1545 = vmatprep.subr.mxu0 0.0
        %1546 = vmatpush1.msra.mxu0 0.0
        %1547 = vmatprep.subr.mxu0 0.0
        %1548 = vmatpush1.msra.mxu0 0.0
        %1549 = vmatprep.subr.mxu0 0.0
        %1550 = vmatpush1.msra.mxu0 0.0
        %1551 = vmatprep.subr.mxu0 0.0
        %1552 = vmatpush1.msra.mxu0 0.0
        %1553 = vmatprep.subr.mxu0 0.0
        %1554 = vmatpush1.msra.mxu0 0.0
        %1555 = vmatprep.subr.mxu0 0.0
        %1556 = vmatpush1.msra.mxu0 0.0
        %1557 = vmatprep.subr.mxu0 0.0
        %1558 = vmatpush1.msra.mxu0 0.0
        %1559 = vmatprep.subr.mxu0 0.0
        %1560 = vmatpush1.msra.mxu0 0.0
        %1561 = vmatprep.subr.mxu0 0.0
        %1562 = vmatpush1.msra.mxu0 0.0
        %1563 = vmatprep.subr.mxu0 0.0
        %1564 = vmatpush1.msra.mxu0 0.0
        %1565 = vmatprep.subr.mxu0 0.0
        %1566 = vmatpush1.msra.mxu0 0.0
        %1567 = vmatprep.subr.mxu0 0.0
        %1568 = vmatpush1.msra.mxu0 0.0
        %1569 = vmatprep.subr.mxu0 0.0
        %1570 = vmatpush1.msra.mxu0 0.0
        %1571 = vmatprep.subr.mxu0 0.0
        %1572 = vmatpush1.msra.mxu0 0.0
        %1573 = vmatprep.subr.mxu0 0.0
        %1574 = vmatpush1.msra.mxu0 0.0
        %1575 = vmatprep.subr.mxu0 0.0
        %1576 = vmatpush1.msra.mxu0 0.0
        %1577 = vmatprep.subr.mxu0 0.0
        %1578 = vmatpush1.msra.mxu0 0.0
        %1579 = vmatprep.subr.mxu0 0.0
        %1580 = vmatpush1.msra.mxu0 0.0
        %1581 = vmatprep.subr.mxu0 0.0
        %1582 = vmatpush1.msra.mxu0 0.0
        %1583 = vmatprep.subr.mxu0 0.0
        %1584 = vmatpush1.msra.mxu0 0.0
        %1585 = vmatprep.subr.mxu0 0.0
        %1586 = vmatpush1.msra.mxu0 0.0
        %1587 = vmatprep.subr.mxu0 0.0
        %1588 = vmatpush1.msra.mxu0 0.0
        %1589 = vmatprep.subr.mxu0 0.0
        %1590 = vmatpush1.msra.mxu0 0.0
        %1591 = vmatprep.subr.mxu0 0.0
        %1592 = vmatpush1.msra.mxu0 0.0
        %1593 = vmatprep.subr.mxu0 0.0
        %1594 = vmatpush1.msra.mxu0 0.0
        %1595 = vmatprep.subr.mxu0 0.0
        %1596 = vmatpush1.msra.mxu0 0.0
        %1597 = vmatprep.subr.mxu0 0.0
        %1598 = vmatpush1.msra.mxu0 0.0
        %1599 = vmatprep.mubr.f32.mxu0 0.0
        %1600 = vmatmul.mubr.f32.gmra.mrb[0].mxu0 %v1530
        %v1601 = vpop.f32.mrb[0].mxu0
        %v1602 = vadd.f32 0.0, %v1601
        %v1603 = vpop.f32.mrb[0].mxu0
        %1604 = vmatprep.mubr.f32.mxu0 0.0
        %1605 = vmatmul.mubr.f32.gmra.mrb[0].mxu0 %v1533
        %v1606 = vpop.f32.mrb[0].mxu0
        %v1607 = vadd.f32 0.0, %v1606
        %v1608 = vpop.f32.mrb[0].mxu0
        %1609 = vdwg.mxu0
        %v1610 = vadd.f32 %v1524, %v1602
        %v1611 = vadd.f32 %v1525, %v1607
        %s1612 = scalar_lea.vmem %s1, 176
        %v1613 = vld [vmem:[%s1612] sm:$0xff]
        %v1614 = vld [vmem:[%s1612 + $0x8] sm:$0xff]
        %v1616 = vsel %vm252, %v422, 0
        %v1619 = vsel %vm252, %v423, 0
        %1621 = vmatprep.subr.mxu0 0.0
        %1622 = vmatpush1.msra.mxu0 %v1613
        %1623 = vmatprep.subr.mxu0 0.0
        %1624 = vmatpush1.msra.mxu0 %v1614
        %1625 = vmatprep.subr.mxu0 0.0
        %1626 = vmatpush1.msra.mxu0 0.0
        %1627 = vmatprep.subr.mxu0 0.0
        %1628 = vmatpush1.msra.mxu0 0.0
        %1629 = vmatprep.subr.mxu0 0.0
        %1630 = vmatpush1.msra.mxu0 0.0
        %1631 = vmatprep.subr.mxu0 0.0
        %1632 = vmatpush1.msra.mxu0 0.0
        %1633 = vmatprep.subr.mxu0 0.0
        %1634 = vmatpush1.msra.mxu0 0.0
        %1635 = vmatprep.subr.mxu0 0.0
        %1636 = vmatpush1.msra.mxu0 0.0
        %1637 = vmatprep.subr.mxu0 0.0
        %1638 = vmatpush1.msra.mxu0 0.0
        %1639 = vmatprep.subr.mxu0 0.0
        %1640 = vmatpush1.msra.mxu0 0.0
        %1641 = vmatprep.subr.mxu0 0.0
        %1642 = vmatpush1.msra.mxu0 0.0
        %1643 = vmatprep.subr.mxu0 0.0
        %1644 = vmatpush1.msra.mxu0 0.0
        %1645 = vmatprep.subr.mxu0 0.0
        %1646 = vmatpush1.msra.mxu0 0.0
        %1647 = vmatprep.subr.mxu0 0.0
        %1648 = vmatpush1.msra.mxu0 0.0
        %1649 = vmatprep.subr.mxu0 0.0
        %1650 = vmatpush1.msra.mxu0 0.0
        %1651 = vmatprep.subr.mxu0 0.0
        %1652 = vmatpush1.msra.mxu0 0.0
        %1653 = vmatprep.subr.mxu0 0.0
        %1654 = vmatpush1.msra.mxu0 0.0
        %1655 = vmatprep.subr.mxu0 0.0
        %1656 = vmatpush1.msra.mxu0 0.0
        %1657 = vmatprep.subr.mxu0 0.0
        %1658 = vmatpush1.msra.mxu0 0.0
        %1659 = vmatprep.subr.mxu0 0.0
        %1660 = vmatpush1.msra.mxu0 0.0
        %1661 = vmatprep.subr.mxu0 0.0
        %1662 = vmatpush1.msra.mxu0 0.0
        %1663 = vmatprep.subr.mxu0 0.0
        %1664 = vmatpush1.msra.mxu0 0.0
        %1665 = vmatprep.subr.mxu0 0.0
        %1666 = vmatpush1.msra.mxu0 0.0
        %1667 = vmatprep.subr.mxu0 0.0
        %1668 = vmatpush1.msra.mxu0 0.0
        %1669 = vmatprep.subr.mxu0 0.0
        %1670 = vmatpush1.msra.mxu0 0.0
        %1671 = vmatprep.subr.mxu0 0.0
        %1672 = vmatpush1.msra.mxu0 0.0
        %1673 = vmatprep.subr.mxu0 0.0
        %1674 = vmatpush1.msra.mxu0 0.0
        %1675 = vmatprep.subr.mxu0 0.0
        %1676 = vmatpush1.msra.mxu0 0.0
        %1677 = vmatprep.subr.mxu0 0.0
        %1678 = vmatpush1.msra.mxu0 0.0
        %1679 = vmatprep.subr.mxu0 0.0
        %1680 = vmatpush1.msra.mxu0 0.0
        %1681 = vmatprep.subr.mxu0 0.0
        %1682 = vmatpush1.msra.mxu0 0.0
        %1683 = vmatprep.subr.mxu0 0.0
        %1684 = vmatpush1.msra.mxu0 0.0
        %1685 = vmatprep.mubr.f32.mxu0 0.0
        %1686 = vmatmul.mubr.f32.gmra.mrb[0].mxu0 %v1616
        %v1687 = vpop.f32.mrb[0].mxu0
        %v1688 = vadd.f32 0.0, %v1687
        %v1689 = vpop.f32.mrb[0].mxu0
        %1690 = vmatprep.mubr.f32.mxu0 0.0
        %1691 = vmatmul.mubr.f32.gmra.mrb[0].mxu0 %v1619
        %v1692 = vpop.f32.mrb[0].mxu0
        %v1693 = vadd.f32 0.0, %v1692
        %v1694 = vpop.f32.mrb[0].mxu0
        %1695 = vdwg.mxu0
        %v1696 = vadd.f32 %v1610, %v1688
        %v1697 = vadd.f32 %v1611, %v1693
        %s1698 = scalar_lea.vmem %s1, 192
        %v1699 = vld [vmem:[%s1698] sm:$0xff]
        %v1700 = vld [vmem:[%s1698 + $0x8] sm:$0xff]
        %v1702 = vsel %vm252, %v503, 0
        %v1705 = vsel %vm252, %v504, 0
        %1707 = vmatprep.subr.mxu0 0.0
        %1708 = vmatpush1.msra.mxu0 %v1699
        %1709 = vmatprep.subr.mxu0 0.0
        %1710 = vmatpush1.msra.mxu0 %v1700
        %1711 = vmatprep.subr.mxu0 0.0
        %1712 = vmatpush1.msra.mxu0 0.0
        %1713 = vmatprep.subr.mxu0 0.0
        %1714 = vmatpush1.msra.mxu0 0.0
        %1715 = vmatprep.subr.mxu0 0.0
        %1716 = vmatpush1.msra.mxu0 0.0
        %1717 = vmatprep.subr.mxu0 0.0
        %1718 = vmatpush1.msra.mxu0 0.0
        %1719 = vmatprep.subr.mxu0 0.0
        %1720 = vmatpush1.msra.mxu0 0.0
        %1721 = vmatprep.subr.mxu0 0.0
        %1722 = vmatpush1.msra.mxu0 0.0
        %1723 = vmatprep.subr.mxu0 0.0
        %1724 = vmatpush1.msra.mxu0 0.0
        %1725 = vmatprep.subr.mxu0 0.0
        %1726 = vmatpush1.msra.mxu0 0.0
        %1727 = vmatprep.subr.mxu0 0.0
        %1728 = vmatpush1.msra.mxu0 0.0
        %1729 = vmatprep.subr.mxu0 0.0
        %1730 = vmatpush1.msra.mxu0 0.0
        %1731 = vmatprep.subr.mxu0 0.0
        %1732 = vmatpush1.msra.mxu0 0.0
        %1733 = vmatprep.subr.mxu0 0.0
        %1734 = vmatpush1.msra.mxu0 0.0
        %1735 = vmatprep.subr.mxu0 0.0
        %1736 = vmatpush1.msra.mxu0 0.0
        %1737 = vmatprep.subr.mxu0 0.0
        %1738 = vmatpush1.msra.mxu0 0.0
        %1739 = vmatprep.subr.mxu0 0.0
        %1740 = vmatpush1.msra.mxu0 0.0
        %1741 = vmatprep.subr.mxu0 0.0
        %1742 = vmatpush1.msra.mxu0 0.0
        %1743 = vmatprep.subr.mxu0 0.0
        %1744 = vmatpush1.msra.mxu0 0.0
        %1745 = vmatprep.subr.mxu0 0.0
        %1746 = vmatpush1.msra.mxu0 0.0
        %1747 = vmatprep.subr.mxu0 0.0
        %1748 = vmatpush1.msra.mxu0 0.0
        %1749 = vmatprep.subr.mxu0 0.0
        %1750 = vmatpush1.msra.mxu0 0.0
        %1751 = vmatprep.subr.mxu0 0.0
        %1752 = vmatpush1.msra.mxu0 0.0
        %1753 = vmatprep.subr.mxu0 0.0
        %1754 = vmatpush1.msra.mxu0 0.0
        %1755 = vmatprep.subr.mxu0 0.0
        %1756 = vmatpush1.msra.mxu0 0.0
        %1757 = vmatprep.subr.mxu0 0.0
        %1758 = vmatpush1.msra.mxu0 0.0
        %1759 = vmatprep.subr.mxu0 0.0
        %1760 = vmatpush1.msra.mxu0 0.0
        %1761 = vmatprep.subr.mxu0 0.0
        %1762 = vmatpush1.msra.mxu0 0.0
        %1763 = vmatprep.subr.mxu0 0.0
        %1764 = vmatpush1.msra.mxu0 0.0
        %1765 = vmatprep.subr.mxu0 0.0
        %1766 = vmatpush1.msra.mxu0 0.0
        %1767 = vmatprep.subr.mxu0 0.0
        %1768 = vmatpush1.msra.mxu0 0.0
        %1769 = vmatprep.subr.mxu0 0.0
        %1770 = vmatpush1.msra.mxu0 0.0
        %1771 = vmatprep.mubr.f32.mxu0 0.0
        %1772 = vmatmul.mubr.f32.gmra.mrb[0].mxu0 %v1702
        %v1773 = vpop.f32.mrb[0].mxu0
        %v1774 = vadd.f32 0.0, %v1773
        %v1775 = vpop.f32.mrb[0].mxu0
        %1776 = vmatprep.mubr.f32.mxu0 0.0
        %1777 = vmatmul.mubr.f32.gmra.mrb[0].mxu0 %v1705
        %v1778 = vpop.f32.mrb[0].mxu0
        %v1779 = vadd.f32 0.0, %v1778
        %v1780 = vpop.f32.mrb[0].mxu0
        %1781 = vdwg.mxu0
        %v1782 = vadd.f32 %v1696, %v1774
        %v1783 = vadd.f32 %v1697, %v1779
        %s1784 = scalar_lea.vmem %s1, 208
        %v1785 = vld [vmem:[%s1784] sm:$0xff]
        %v1786 = vld [vmem:[%s1784 + $0x8] sm:$0xff]
        %v1788 = vsel %vm252, %v584, 0
        %v1791 = vsel %vm252, %v585, 0
        %1793 = vmatprep.subr.mxu0 0.0
        %1794 = vmatpush1.msra.mxu0 %v1785
        %1795 = vmatprep.subr.mxu0 0.0
        %1796 = vmatpush1.msra.mxu0 %v1786
        %1797 = vmatprep.subr.mxu0 0.0
        %1798 = vmatpush1.msra.mxu0 0.0
        %1799 = vmatprep.subr.mxu0 0.0
        %1800 = vmatpush1.msra.mxu0 0.0
        %1801 = vmatprep.subr.mxu0 0.0
        %1802 = vmatpush1.msra.mxu0 0.0
        %1803 = vmatprep.subr.mxu0 0.0
        %1804 = vmatpush1.msra.mxu0 0.0
        %1805 = vmatprep.subr.mxu0 0.0
        %1806 = vmatpush1.msra.mxu0 0.0
        %1807 = vmatprep.subr.mxu0 0.0
        %1808 = vmatpush1.msra.mxu0 0.0
        %1809 = vmatprep.subr.mxu0 0.0
        %1810 = vmatpush1.msra.mxu0 0.0
        %1811 = vmatprep.subr.mxu0 0.0
        %1812 = vmatpush1.msra.mxu0 0.0
        %1813 = vmatprep.subr.mxu0 0.0
        %1814 = vmatpush1.msra.mxu0 0.0
        %1815 = vmatprep.subr.mxu0 0.0
        %1816 = vmatpush1.msra.mxu0 0.0
        %1817 = vmatprep.subr.mxu0 0.0
        %1818 = vmatpush1.msra.mxu0 0.0
        %1819 = vmatprep.subr.mxu0 0.0
        %1820 = vmatpush1.msra.mxu0 0.0
        %1821 = vmatprep.subr.mxu0 0.0
        %1822 = vmatpush1.msra.mxu0 0.0
        %1823 = vmatprep.subr.mxu0 0.0
        %1824 = vmatpush1.msra.mxu0 0.0
        %1825 = vmatprep.subr.mxu0 0.0
        %1826 = vmatpush1.msra.mxu0 0.0
        %1827 = vmatprep.subr.mxu0 0.0
        %1828 = vmatpush1.msra.mxu0 0.0
        %1829 = vmatprep.subr.mxu0 0.0
        %1830 = vmatpush1.msra.mxu0 0.0
        %1831 = vmatprep.subr.mxu0 0.0
        %1832 = vmatpush1.msra.mxu0 0.0
        %1833 = vmatprep.subr.mxu0 0.0
        %1834 = vmatpush1.msra.mxu0 0.0
        %1835 = vmatprep.subr.mxu0 0.0
        %1836 = vmatpush1.msra.mxu0 0.0
        %1837 = vmatprep.subr.mxu0 0.0
        %1838 = vmatpush1.msra.mxu0 0.0
        %1839 = vmatprep.subr.mxu0 0.0
        %1840 = vmatpush1.msra.mxu0 0.0
        %1841 = vmatprep.subr.mxu0 0.0
        %1842 = vmatpush1.msra.mxu0 0.0
        %1843 = vmatprep.subr.mxu0 0.0
        %1844 = vmatpush1.msra.mxu0 0.0
        %1845 = vmatprep.subr.mxu0 0.0
        %1846 = vmatpush1.msra.mxu0 0.0
        %1847 = vmatprep.subr.mxu0 0.0
        %1848 = vmatpush1.msra.mxu0 0.0
        %1849 = vmatprep.subr.mxu0 0.0
        %1850 = vmatpush1.msra.mxu0 0.0
        %1851 = vmatprep.subr.mxu0 0.0
        %1852 = vmatpush1.msra.mxu0 0.0
        %1853 = vmatprep.subr.mxu0 0.0
        %1854 = vmatpush1.msra.mxu0 0.0
        %1855 = vmatprep.subr.mxu0 0.0
        %1856 = vmatpush1.msra.mxu0 0.0
        %1857 = vmatprep.mubr.f32.mxu0 0.0
        %1858 = vmatmul.mubr.f32.gmra.mrb[0].mxu0 %v1788
        %v1859 = vpop.f32.mrb[0].mxu0
        %v1860 = vadd.f32 0.0, %v1859
        %v1861 = vpop.f32.mrb[0].mxu0
        %1862 = vmatprep.mubr.f32.mxu0 0.0
        %1863 = vmatmul.mubr.f32.gmra.mrb[0].mxu0 %v1791
        %v1864 = vpop.f32.mrb[0].mxu0
        %v1865 = vadd.f32 0.0, %v1864
        %v1866 = vpop.f32.mrb[0].mxu0
        %1867 = vdwg.mxu0
        %v1868 = vadd.f32 %v1782, %v1860
        %v1869 = vadd.f32 %v1783, %v1865
        %s1870 = scalar_lea.vmem %s1, 224
        %v1871 = vld [vmem:[%s1870] sm:$0xff]
        %v1872 = vld [vmem:[%s1870 + $0x8] sm:$0xff]
        %v1874 = vsel %vm252, %v665, 0
        %v1877 = vsel %vm252, %v666, 0
        %1879 = vmatprep.subr.mxu0 0.0
        %1880 = vmatpush1.msra.mxu0 %v1871
        %1881 = vmatprep.subr.mxu0 0.0
        %1882 = vmatpush1.msra.mxu0 %v1872
        %1883 = vmatprep.subr.mxu0 0.0
        %1884 = vmatpush1.msra.mxu0 0.0
        %1885 = vmatprep.subr.mxu0 0.0
        %1886 = vmatpush1.msra.mxu0 0.0
        %1887 = vmatprep.subr.mxu0 0.0
        %1888 = vmatpush1.msra.mxu0 0.0
        %1889 = vmatprep.subr.mxu0 0.0
        %1890 = vmatpush1.msra.mxu0 0.0
        %1891 = vmatprep.subr.mxu0 0.0
        %1892 = vmatpush1.msra.mxu0 0.0
        %1893 = vmatprep.subr.mxu0 0.0
        %1894 = vmatpush1.msra.mxu0 0.0
        %1895 = vmatprep.subr.mxu0 0.0
        %1896 = vmatpush1.msra.mxu0 0.0
        %1897 = vmatprep.subr.mxu0 0.0
        %1898 = vmatpush1.msra.mxu0 0.0
        %1899 = vmatprep.subr.mxu0 0.0
        %1900 = vmatpush1.msra.mxu0 0.0
        %1901 = vmatprep.subr.mxu0 0.0
        %1902 = vmatpush1.msra.mxu0 0.0
        %1903 = vmatprep.subr.mxu0 0.0
        %1904 = vmatpush1.msra.mxu0 0.0
        %1905 = vmatprep.subr.mxu0 0.0
        %1906 = vmatpush1.msra.mxu0 0.0
        %1907 = vmatprep.subr.mxu0 0.0
        %1908 = vmatpush1.msra.mxu0 0.0
        %1909 = vmatprep.subr.mxu0 0.0
        %1910 = vmatpush1.msra.mxu0 0.0
        %1911 = vmatprep.subr.mxu0 0.0
        %1912 = vmatpush1.msra.mxu0 0.0
        %1913 = vmatprep.subr.mxu0 0.0
        %1914 = vmatpush1.msra.mxu0 0.0
        %1915 = vmatprep.subr.mxu0 0.0
        %1916 = vmatpush1.msra.mxu0 0.0
        %1917 = vmatprep.subr.mxu0 0.0
        %1918 = vmatpush1.msra.mxu0 0.0
        %1919 = vmatprep.subr.mxu0 0.0
        %1920 = vmatpush1.msra.mxu0 0.0
        %1921 = vmatprep.subr.mxu0 0.0
        %1922 = vmatpush1.msra.mxu0 0.0
        %1923 = vmatprep.subr.mxu0 0.0
        %1924 = vmatpush1.msra.mxu0 0.0
        %1925 = vmatprep.subr.mxu0 0.0
        %1926 = vmatpush1.msra.mxu0 0.0
        %1927 = vmatprep.subr.mxu0 0.0
        %1928 = vmatpush1.msra.mxu0 0.0
        %1929 = vmatprep.subr.mxu0 0.0
        %1930 = vmatpush1.msra.mxu0 0.0
        %1931 = vmatprep.subr.mxu0 0.0
        %1932 = vmatpush1.msra.mxu0 0.0
        %1933 = vmatprep.subr.mxu0 0.0
        %1934 = vmatpush1.msra.mxu0 0.0
        %1935 = vmatprep.subr.mxu0 0.0
        %1936 = vmatpush1.msra.mxu0 0.0
        %1937 = vmatprep.subr.mxu0 0.0
        %1938 = vmatpush1.msra.mxu0 0.0
        %1939 = vmatprep.subr.mxu0 0.0
        %1940 = vmatpush1.msra.mxu0 0.0
        %1941 = vmatprep.subr.mxu0 0.0
        %1942 = vmatpush1.msra.mxu0 0.0
        %1943 = vmatprep.mubr.f32.mxu0 0.0
        %1944 = vmatmul.mubr.f32.gmra.mrb[0].mxu0 %v1874
        %v1945 = vpop.f32.mrb[0].mxu0
        %v1946 = vadd.f32 0.0, %v1945
        %v1947 = vpop.f32.mrb[0].mxu0
        %1948 = vmatprep.mubr.f32.mxu0 0.0
        %1949 = vmatmul.mubr.f32.gmra.mrb[0].mxu0 %v1877
        %v1950 = vpop.f32.mrb[0].mxu0
        %v1951 = vadd.f32 0.0, %v1950
        %v1952 = vpop.f32.mrb[0].mxu0
        %1953 = vdwg.mxu0
        %v1954 = vadd.f32 %v1868, %v1946
        %v1955 = vadd.f32 %v1869, %v1951
        %s1956 = scalar_lea.vmem %s1, 240
        %v1957 = vld [vmem:[%s1956] sm:$0xff]
        %v1958 = vld [vmem:[%s1956 + $0x8] sm:$0xff]
        %v1960 = vsel %vm252, %v343, 0
        %v1963 = vsel %vm252, %v344, 0
        %1965 = vmatprep.subr.mxu0 0.0
        %1966 = vmatpush1.msra.mxu0 %v1957
        %1967 = vmatprep.subr.mxu0 0.0
        %1968 = vmatpush1.msra.mxu0 %v1958
        %1969 = vmatprep.subr.mxu0 0.0
        %1970 = vmatpush1.msra.mxu0 0.0
        %1971 = vmatprep.subr.mxu0 0.0
        %1972 = vmatpush1.msra.mxu0 0.0
        %1973 = vmatprep.subr.mxu0 0.0
        %1974 = vmatpush1.msra.mxu0 0.0
        %1975 = vmatprep.subr.mxu0 0.0
        %1976 = vmatpush1.msra.mxu0 0.0
        %1977 = vmatprep.subr.mxu0 0.0
        %1978 = vmatpush1.msra.mxu0 0.0
        %1979 = vmatprep.subr.mxu0 0.0
        %1980 = vmatpush1.msra.mxu0 0.0
        %1981 = vmatprep.subr.mxu0 0.0
        %1982 = vmatpush1.msra.mxu0 0.0
        %1983 = vmatprep.subr.mxu0 0.0
        %1984 = vmatpush1.msra.mxu0 0.0
        %1985 = vmatprep.subr.mxu0 0.0
        %1986 = vmatpush1.msra.mxu0 0.0
        %1987 = vmatprep.subr.mxu0 0.0
        %1988 = vmatpush1.msra.mxu0 0.0
        %1989 = vmatprep.subr.mxu0 0.0
        %1990 = vmatpush1.msra.mxu0 0.0
        %1991 = vmatprep.subr.mxu0 0.0
        %1992 = vmatpush1.msra.mxu0 0.0
        %1993 = vmatprep.subr.mxu0 0.0
        %1994 = vmatpush1.msra.mxu0 0.0
        %1995 = vmatprep.subr.mxu0 0.0
        %1996 = vmatpush1.msra.mxu0 0.0
        %1997 = vmatprep.subr.mxu0 0.0
        %1998 = vmatpush1.msra.mxu0 0.0
        %1999 = vmatprep.subr.mxu0 0.0
        %2000 = vmatpush1.msra.mxu0 0.0
        %2001 = vmatprep.subr.mxu0 0.0
        %2002 = vmatpush1.msra.mxu0 0.0
        %2003 = vmatprep.subr.mxu0 0.0
        %2004 = vmatpush1.msra.mxu0 0.0
        %2005 = vmatprep.subr.mxu0 0.0
        %2006 = vmatpush1.msra.mxu0 0.0
        %2007 = vmatprep.subr.mxu0 0.0
        %2008 = vmatpush1.msra.mxu0 0.0
        %2009 = vmatprep.subr.mxu0 0.0
        %2010 = vmatpush1.msra.mxu0 0.0
        %2011 = vmatprep.subr.mxu0 0.0
        %2012 = vmatpush1.msra.mxu0 0.0
        %2013 = vmatprep.subr.mxu0 0.0
        %2014 = vmatpush1.msra.mxu0 0.0
        %2015 = vmatprep.subr.mxu0 0.0
        %2016 = vmatpush1.msra.mxu0 0.0
        %2017 = vmatprep.subr.mxu0 0.0
        %2018 = vmatpush1.msra.mxu0 0.0
        %2019 = vmatprep.subr.mxu0 0.0
        %2020 = vmatpush1.msra.mxu0 0.0
        %2021 = vmatprep.subr.mxu0 0.0
        %2022 = vmatpush1.msra.mxu0 0.0
        %2023 = vmatprep.subr.mxu0 0.0
        %2024 = vmatpush1.msra.mxu0 0.0
        %2025 = vmatprep.subr.mxu0 0.0
        %2026 = vmatpush1.msra.mxu0 0.0
        %2027 = vmatprep.subr.mxu0 0.0
        %2028 = vmatpush1.msra.mxu0 0.0
        %2029 = vmatprep.mubr.f32.mxu0 0.0
        %2030 = vmatmul.mubr.f32.gmra.mrb[0].mxu0 %v1960
        %v2031 = vpop.f32.mrb[0].mxu0
        %v2032 = vadd.f32 0.0, %v2031
        %v2033 = vpop.f32.mrb[0].mxu0
        %2034 = vmatprep.mubr.f32.mxu0 0.0
        %2035 = vmatmul.mubr.f32.gmra.mrb[0].mxu0 %v1963
        %v2036 = vpop.f32.mrb[0].mxu0
        %v2037 = vadd.f32 0.0, %v2036
        %v2038 = vpop.f32.mrb[0].mxu0
        %2039 = vdwg.mxu0
        %v2040 = vadd.f32 %v1954, %v2032
        %v2041 = vadd.f32 %v1955, %v2037
        %s2042 = scalar_lea.vmem %s1, 256
        %v2043 = vld [vmem:[%s2042] sm:$0xff]
        %v2044 = vld [vmem:[%s2042 + $0x8] sm:$0xff]
        %v2046 = vsel %vm252, %v424, 0
        %v2049 = vsel %vm252, %v425, 0
        %2051 = vmatprep.subr.mxu0 0.0
        %2052 = vmatpush1.msra.mxu0 %v2043
        %2053 = vmatprep.subr.mxu0 0.0
        %2054 = vmatpush1.msra.mxu0 %v2044
        %2055 = vmatprep.subr.mxu0 0.0
        %2056 = vmatpush1.msra.mxu0 0.0
        %2057 = vmatprep.subr.mxu0 0.0
        %2058 = vmatpush1.msra.mxu0 0.0
        %2059 = vmatprep.subr.mxu0 0.0
        %2060 = vmatpush1.msra.mxu0 0.0
        %2061 = vmatprep.subr.mxu0 0.0
        %2062 = vmatpush1.msra.mxu0 0.0
        %2063 = vmatprep.subr.mxu0 0.0
        %2064 = vmatpush1.msra.mxu0 0.0
        %2065 = vmatprep.subr.mxu0 0.0
        %2066 = vmatpush1.msra.mxu0 0.0
        %2067 = vmatprep.subr.mxu0 0.0
        %2068 = vmatpush1.msra.mxu0 0.0
        %2069 = vmatprep.subr.mxu0 0.0
        %2070 = vmatpush1.msra.mxu0 0.0
        %2071 = vmatprep.subr.mxu0 0.0
        %2072 = vmatpush1.msra.mxu0 0.0
        %2073 = vmatprep.subr.mxu0 0.0
        %2074 = vmatpush1.msra.mxu0 0.0
        %2075 = vmatprep.subr.mxu0 0.0
        %2076 = vmatpush1.msra.mxu0 0.0
        %2077 = vmatprep.subr.mxu0 0.0
        %2078 = vmatpush1.msra.mxu0 0.0
        %2079 = vmatprep.subr.mxu0 0.0
        %2080 = vmatpush1.msra.mxu0 0.0
        %2081 = vmatprep.subr.mxu0 0.0
        %2082 = vmatpush1.msra.mxu0 0.0
        %2083 = vmatprep.subr.mxu0 0.0
        %2084 = vmatpush1.msra.mxu0 0.0
        %2085 = vmatprep.subr.mxu0 0.0
        %2086 = vmatpush1.msra.mxu0 0.0
        %2087 = vmatprep.subr.mxu0 0.0
        %2088 = vmatpush1.msra.mxu0 0.0
        %2089 = vmatprep.subr.mxu0 0.0
        %2090 = vmatpush1.msra.mxu0 0.0
        %2091 = vmatprep.subr.mxu0 0.0
        %2092 = vmatpush1.msra.mxu0 0.0
        %2093 = vmatprep.subr.mxu0 0.0
        %2094 = vmatpush1.msra.mxu0 0.0
        %2095 = vmatprep.subr.mxu0 0.0
        %2096 = vmatpush1.msra.mxu0 0.0
        %2097 = vmatprep.subr.mxu0 0.0
        %2098 = vmatpush1.msra.mxu0 0.0
        %2099 = vmatprep.subr.mxu0 0.0
        %2100 = vmatpush1.msra.mxu0 0.0
        %2101 = vmatprep.subr.mxu0 0.0
        %2102 = vmatpush1.msra.mxu0 0.0
        %2103 = vmatprep.subr.mxu0 0.0
        %2104 = vmatpush1.msra.mxu0 0.0
        %2105 = vmatprep.subr.mxu0 0.0
        %2106 = vmatpush1.msra.mxu0 0.0
        %2107 = vmatprep.subr.mxu0 0.0
        %2108 = vmatpush1.msra.mxu0 0.0
        %2109 = vmatprep.subr.mxu0 0.0
        %2110 = vmatpush1.msra.mxu0 0.0
        %2111 = vmatprep.subr.mxu0 0.0
        %2112 = vmatpush1.msra.mxu0 0.0
        %2113 = vmatprep.subr.mxu0 0.0
        %2114 = vmatpush1.msra.mxu0 0.0
        %2115 = vmatprep.mubr.f32.mxu0 0.0
        %2116 = vmatmul.mubr.f32.gmra.mrb[0].mxu0 %v2046
        %v2117 = vpop.f32.mrb[0].mxu0
        %v2118 = vadd.f32 0.0, %v2117
        %v2119 = vpop.f32.mrb[0].mxu0
        %2120 = vmatprep.mubr.f32.mxu0 0.0
        %2121 = vmatmul.mubr.f32.gmra.mrb[0].mxu0 %v2049
        %v2122 = vpop.f32.mrb[0].mxu0
        %v2123 = vadd.f32 0.0, %v2122
        %v2124 = vpop.f32.mrb[0].mxu0
        %2125 = vdwg.mxu0
        %v2126 = vadd.f32 %v2040, %v2118
        %v2127 = vadd.f32 %v2041, %v2123
        %s2128 = scalar_lea.vmem %s1, 272
        %v2129 = vld [vmem:[%s2128] sm:$0xff]
        %v2130 = vld [vmem:[%s2128 + $0x8] sm:$0xff]
        %v2132 = vsel %vm252, %v505, 0
        %v2135 = vsel %vm252, %v506, 0
        %2137 = vmatprep.subr.mxu0 0.0
        %2138 = vmatpush1.msra.mxu0 %v2129
        %2139 = vmatprep.subr.mxu0 0.0
        %2140 = vmatpush1.msra.mxu0 %v2130
        %2141 = vmatprep.subr.mxu0 0.0
        %2142 = vmatpush1.msra.mxu0 0.0
        %2143 = vmatprep.subr.mxu0 0.0
        %2144 = vmatpush1.msra.mxu0 0.0
        %2145 = vmatprep.subr.mxu0 0.0
        %2146 = vmatpush1.msra.mxu0 0.0
        %2147 = vmatprep.subr.mxu0 0.0
        %2148 = vmatpush1.msra.mxu0 0.0
        %2149 = vmatprep.subr.mxu0 0.0
        %2150 = vmatpush1.msra.mxu0 0.0
        %2151 = vmatprep.subr.mxu0 0.0
        %2152 = vmatpush1.msra.mxu0 0.0
        %2153 = vmatprep.subr.mxu0 0.0
        %2154 = vmatpush1.msra.mxu0 0.0
        %2155 = vmatprep.subr.mxu0 0.0
        %2156 = vmatpush1.msra.mxu0 0.0
        %2157 = vmatprep.subr.mxu0 0.0
        %2158 = vmatpush1.msra.mxu0 0.0
        %2159 = vmatprep.subr.mxu0 0.0
        %2160 = vmatpush1.msra.mxu0 0.0
        %2161 = vmatprep.subr.mxu0 0.0
        %2162 = vmatpush1.msra.mxu0 0.0
        %2163 = vmatprep.subr.mxu0 0.0
        %2164 = vmatpush1.msra.mxu0 0.0
        %2165 = vmatprep.subr.mxu0 0.0
        %2166 = vmatpush1.msra.mxu0 0.0
        %2167 = vmatprep.subr.mxu0 0.0
        %2168 = vmatpush1.msra.mxu0 0.0
        %2169 = vmatprep.subr.mxu0 0.0
        %2170 = vmatpush1.msra.mxu0 0.0
        %2171 = vmatprep.subr.mxu0 0.0
        %2172 = vmatpush1.msra.mxu0 0.0
        %2173 = vmatprep.subr.mxu0 0.0
        %2174 = vmatpush1.msra.mxu0 0.0
        %2175 = vmatprep.subr.mxu0 0.0
        %2176 = vmatpush1.msra.mxu0 0.0
        %2177 = vmatprep.subr.mxu0 0.0
        %2178 = vmatpush1.msra.mxu0 0.0
        %2179 = vmatprep.subr.mxu0 0.0
        %2180 = vmatpush1.msra.mxu0 0.0
        %2181 = vmatprep.subr.mxu0 0.0
        %2182 = vmatpush1.msra.mxu0 0.0
        %2183 = vmatprep.subr.mxu0 0.0
        %2184 = vmatpush1.msra.mxu0 0.0
        %2185 = vmatprep.subr.mxu0 0.0
        %2186 = vmatpush1.msra.mxu0 0.0
        %2187 = vmatprep.subr.mxu0 0.0
        %2188 = vmatpush1.msra.mxu0 0.0
        %2189 = vmatprep.subr.mxu0 0.0
        %2190 = vmatpush1.msra.mxu0 0.0
        %2191 = vmatprep.subr.mxu0 0.0
        %2192 = vmatpush1.msra.mxu0 0.0
        %2193 = vmatprep.subr.mxu0 0.0
        %2194 = vmatpush1.msra.mxu0 0.0
        %2195 = vmatprep.subr.mxu0 0.0
        %2196 = vmatpush1.msra.mxu0 0.0
        %2197 = vmatprep.subr.mxu0 0.0
        %2198 = vmatpush1.msra.mxu0 0.0
        %2199 = vmatprep.subr.mxu0 0.0
        %2200 = vmatpush1.msra.mxu0 0.0
        %2201 = vmatprep.mubr.f32.mxu0 0.0
        %2202 = vmatmul.mubr.f32.gmra.mrb[0].mxu0 %v2132
        %v2203 = vpop.f32.mrb[0].mxu0
        %v2204 = vadd.f32 0.0, %v2203
        %v2205 = vpop.f32.mrb[0].mxu0
        %2206 = vmatprep.mubr.f32.mxu0 0.0
        %2207 = vmatmul.mubr.f32.gmra.mrb[0].mxu0 %v2135
        %v2208 = vpop.f32.mrb[0].mxu0
        %v2209 = vadd.f32 0.0, %v2208
        %v2210 = vpop.f32.mrb[0].mxu0
        %2211 = vdwg.mxu0
        %v2212 = vadd.f32 %v2126, %v2204
        %v2213 = vadd.f32 %v2127, %v2209
        %s2214 = scalar_lea.vmem %s1, 288
        %v2215 = vld [vmem:[%s2214] sm:$0xff]
        %v2216 = vld [vmem:[%s2214 + $0x8] sm:$0xff]
        %v2218 = vsel %vm252, %v586, 0
        %v2221 = vsel %vm252, %v587, 0
        %2223 = vmatprep.subr.mxu0 0.0
        %2224 = vmatpush1.msra.mxu0 %v2215
        %2225 = vmatprep.subr.mxu0 0.0
        %2226 = vmatpush1.msra.mxu0 %v2216
        %2227 = vmatprep.subr.mxu0 0.0
        %2228 = vmatpush1.msra.mxu0 0.0
        %2229 = vmatprep.subr.mxu0 0.0
        %2230 = vmatpush1.msra.mxu0 0.0
        %2231 = vmatprep.subr.mxu0 0.0
        %2232 = vmatpush1.msra.mxu0 0.0
        %2233 = vmatprep.subr.mxu0 0.0
        %2234 = vmatpush1.msra.mxu0 0.0
        %2235 = vmatprep.subr.mxu0 0.0
        %2236 = vmatpush1.msra.mxu0 0.0
        %2237 = vmatprep.subr.mxu0 0.0
        %2238 = vmatpush1.msra.mxu0 0.0
        %2239 = vmatprep.subr.mxu0 0.0
        %2240 = vmatpush1.msra.mxu0 0.0
        %2241 = vmatprep.subr.mxu0 0.0
        %2242 = vmatpush1.msra.mxu0 0.0
        %2243 = vmatprep.subr.mxu0 0.0
        %2244 = vmatpush1.msra.mxu0 0.0
        %2245 = vmatprep.subr.mxu0 0.0
        %2246 = vmatpush1.msra.mxu0 0.0
        %2247 = vmatprep.subr.mxu0 0.0
        %2248 = vmatpush1.msra.mxu0 0.0
        %2249 = vmatprep.subr.mxu0 0.0
        %2250 = vmatpush1.msra.mxu0 0.0
        %2251 = vmatprep.subr.mxu0 0.0
        %2252 = vmatpush1.msra.mxu0 0.0
        %2253 = vmatprep.subr.mxu0 0.0
        %2254 = vmatpush1.msra.mxu0 0.0
        %2255 = vmatprep.subr.mxu0 0.0
        %2256 = vmatpush1.msra.mxu0 0.0
        %2257 = vmatprep.subr.mxu0 0.0
        %2258 = vmatpush1.msra.mxu0 0.0
        %2259 = vmatprep.subr.mxu0 0.0
        %2260 = vmatpush1.msra.mxu0 0.0
        %2261 = vmatprep.subr.mxu0 0.0
        %2262 = vmatpush1.msra.mxu0 0.0
        %2263 = vmatprep.subr.mxu0 0.0
        %2264 = vmatpush1.msra.mxu0 0.0
        %2265 = vmatprep.subr.mxu0 0.0
        %2266 = vmatpush1.msra.mxu0 0.0
        %2267 = vmatprep.subr.mxu0 0.0
        %2268 = vmatpush1.msra.mxu0 0.0
        %2269 = vmatprep.subr.mxu0 0.0
        %2270 = vmatpush1.msra.mxu0 0.0
        %2271 = vmatprep.subr.mxu0 0.0
        %2272 = vmatpush1.msra.mxu0 0.0
        %2273 = vmatprep.subr.mxu0 0.0
        %2274 = vmatpush1.msra.mxu0 0.0
        %2275 = vmatprep.subr.mxu0 0.0
        %2276 = vmatpush1.msra.mxu0 0.0
        %2277 = vmatprep.subr.mxu0 0.0
        %2278 = vmatpush1.msra.mxu0 0.0
        %2279 = vmatprep.subr.mxu0 0.0
        %2280 = vmatpush1.msra.mxu0 0.0
        %2281 = vmatprep.subr.mxu0 0.0
        %2282 = vmatpush1.msra.mxu0 0.0
        %2283 = vmatprep.subr.mxu0 0.0
        %2284 = vmatpush1.msra.mxu0 0.0
        %2285 = vmatprep.subr.mxu0 0.0
        %2286 = vmatpush1.msra.mxu0 0.0
        %2287 = vmatprep.mubr.f32.mxu0 0.0
        %2288 = vmatmul.mubr.f32.gmra.mrb[0].mxu0 %v2218
        %v2289 = vpop.f32.mrb[0].mxu0
        %v2290 = vadd.f32 0.0, %v2289
        %v2291 = vpop.f32.mrb[0].mxu0
        %2292 = vmatprep.mubr.f32.mxu0 0.0
        %2293 = vmatmul.mubr.f32.gmra.mrb[0].mxu0 %v2221
        %v2294 = vpop.f32.mrb[0].mxu0
        %v2295 = vadd.f32 0.0, %v2294
        %v2296 = vpop.f32.mrb[0].mxu0
        %2297 = vdwg.mxu0
        %v2298 = vadd.f32 %v2212, %v2290
        %v2299 = vadd.f32 %v2213, %v2295
        %s2300 = scalar_lea.vmem %s1, 304
        %v2301 = vld [vmem:[%s2300] sm:$0xff]
        %v2302 = vld [vmem:[%s2300 + $0x8] sm:$0xff]
        %v2304 = vsel %vm252, %v667, 0
        %v2307 = vsel %vm252, %v668, 0
        %2309 = vmatprep.subr.mxu0 0.0
        %2310 = vmatpush1.msra.mxu0 %v2301
        %2311 = vmatprep.subr.mxu0 0.0
        %2312 = vmatpush1.msra.mxu0 %v2302
        %2313 = vmatprep.subr.mxu0 0.0
        %2314 = vmatpush1.msra.mxu0 0.0
        %2315 = vmatprep.subr.mxu0 0.0
        %2316 = vmatpush1.msra.mxu0 0.0
        %2317 = vmatprep.subr.mxu0 0.0
        %2318 = vmatpush1.msra.mxu0 0.0
        %2319 = vmatprep.subr.mxu0 0.0
        %2320 = vmatpush1.msra.mxu0 0.0
        %2321 = vmatprep.subr.mxu0 0.0
        %2322 = vmatpush1.msra.mxu0 0.0
        %2323 = vmatprep.subr.mxu0 0.0
        %2324 = vmatpush1.msra.mxu0 0.0
        %2325 = vmatprep.subr.mxu0 0.0
        %2326 = vmatpush1.msra.mxu0 0.0
        %2327 = vmatprep.subr.mxu0 0.0
        %2328 = vmatpush1.msra.mxu0 0.0
        %2329 = vmatprep.subr.mxu0 0.0
        %2330 = vmatpush1.msra.mxu0 0.0
        %2331 = vmatprep.subr.mxu0 0.0
        %2332 = vmatpush1.msra.mxu0 0.0
        %2333 = vmatprep.subr.mxu0 0.0
        %2334 = vmatpush1.msra.mxu0 0.0
        %2335 = vmatprep.subr.mxu0 0.0
        %2336 = vmatpush1.msra.mxu0 0.0
        %2337 = vmatprep.subr.mxu0 0.0
        %2338 = vmatpush1.msra.mxu0 0.0
        %2339 = vmatprep.subr.mxu0 0.0
        %2340 = vmatpush1.msra.mxu0 0.0
        %2341 = vmatprep.subr.mxu0 0.0
        %2342 = vmatpush1.msra.mxu0 0.0
        %2343 = vmatprep.subr.mxu0 0.0
        %2344 = vmatpush1.msra.mxu0 0.0
        %2345 = vmatprep.subr.mxu0 0.0
        %2346 = vmatpush1.msra.mxu0 0.0
        %2347 = vmatprep.subr.mxu0 0.0
        %2348 = vmatpush1.msra.mxu0 0.0
        %2349 = vmatprep.subr.mxu0 0.0
        %2350 = vmatpush1.msra.mxu0 0.0
        %2351 = vmatprep.subr.mxu0 0.0
        %2352 = vmatpush1.msra.mxu0 0.0
        %2353 = vmatprep.subr.mxu0 0.0
        %2354 = vmatpush1.msra.mxu0 0.0
        %2355 = vmatprep.subr.mxu0 0.0
        %2356 = vmatpush1.msra.mxu0 0.0
        %2357 = vmatprep.subr.mxu0 0.0
        %2358 = vmatpush1.msra.mxu0 0.0
        %2359 = vmatprep.subr.mxu0 0.0
        %2360 = vmatpush1.msra.mxu0 0.0
        %2361 = vmatprep.subr.mxu0 0.0
        %2362 = vmatpush1.msra.mxu0 0.0
        %2363 = vmatprep.subr.mxu0 0.0
        %2364 = vmatpush1.msra.mxu0 0.0
        %2365 = vmatprep.subr.mxu0 0.0
        %2366 = vmatpush1.msra.mxu0 0.0
        %2367 = vmatprep.subr.mxu0 0.0
        %2368 = vmatpush1.msra.mxu0 0.0
        %2369 = vmatprep.subr.mxu0 0.0
        %2370 = vmatpush1.msra.mxu0 0.0
        %2371 = vmatprep.subr.mxu0 0.0
        %2372 = vmatpush1.msra.mxu0 0.0
        %2373 = vmatprep.mubr.f32.mxu0 0.0
        %2374 = vmatmul.mubr.f32.gmra.mrb[0].mxu0 %v2304
        %v2375 = vpop.f32.mrb[0].mxu0
        %v2376 = vadd.f32 0.0, %v2375
        %v2377 = vpop.f32.mrb[0].mxu0
        %2378 = vmatprep.mubr.f32.mxu0 0.0
        %2379 = vmatmul.mubr.f32.gmra.mrb[0].mxu0 %v2307
        %v2380 = vpop.f32.mrb[0].mxu0
        %v2381 = vadd.f32 0.0, %v2380
        %v2382 = vpop.f32.mrb[0].mxu0
        %2383 = vdwg.mxu0
        %v2384 = vadd.f32 %v2298, %v2376
        %v2385 = vadd.f32 %v2299, %v2381
        %s2386 = scalar_lea.vmem %s1, 320
        %v2387 = vld [vmem:[%s2386] sm:$0xff]
        %v2388 = vld [vmem:[%s2386 + $0x8] sm:$0xff]
        %v2390 = vsel %vm252, %v345, 0
        %v2393 = vsel %vm252, %v346, 0
        %2395 = vmatprep.subr.mxu0 0.0
        %2396 = vmatpush1.msra.mxu0 %v2387
        %2397 = vmatprep.subr.mxu0 0.0
        %2398 = vmatpush1.msra.mxu0 %v2388
        %2399 = vmatprep.subr.mxu0 0.0
        %2400 = vmatpush1.msra.mxu0 0.0
        %2401 = vmatprep.subr.mxu0 0.0
        %2402 = vmatpush1.msra.mxu0 0.0
        %2403 = vmatprep.subr.mxu0 0.0
        %2404 = vmatpush1.msra.mxu0 0.0
        %2405 = vmatprep.subr.mxu0 0.0
        %2406 = vmatpush1.msra.mxu0 0.0
        %2407 = vmatprep.subr.mxu0 0.0
        %2408 = vmatpush1.msra.mxu0 0.0
        %2409 = vmatprep.subr.mxu0 0.0
        %2410 = vmatpush1.msra.mxu0 0.0
        %2411 = vmatprep.subr.mxu0 0.0
        %2412 = vmatpush1.msra.mxu0 0.0
        %2413 = vmatprep.subr.mxu0 0.0
        %2414 = vmatpush1.msra.mxu0 0.0
        %2415 = vmatprep.subr.mxu0 0.0
        %2416 = vmatpush1.msra.mxu0 0.0
        %2417 = vmatprep.subr.mxu0 0.0
        %2418 = vmatpush1.msra.mxu0 0.0
        %2419 = vmatprep.subr.mxu0 0.0
        %2420 = vmatpush1.msra.mxu0 0.0
        %2421 = vmatprep.subr.mxu0 0.0
        %2422 = vmatpush1.msra.mxu0 0.0
        %2423 = vmatprep.subr.mxu0 0.0
        %2424 = vmatpush1.msra.mxu0 0.0
        %2425 = vmatprep.subr.mxu0 0.0
        %2426 = vmatpush1.msra.mxu0 0.0
        %2427 = vmatprep.subr.mxu0 0.0
        %2428 = vmatpush1.msra.mxu0 0.0
        %2429 = vmatprep.subr.mxu0 0.0
        %2430 = vmatpush1.msra.mxu0 0.0
        %2431 = vmatprep.subr.mxu0 0.0
        %2432 = vmatpush1.msra.mxu0 0.0
        %2433 = vmatprep.subr.mxu0 0.0
        %2434 = vmatpush1.msra.mxu0 0.0
        %2435 = vmatprep.subr.mxu0 0.0
        %2436 = vmatpush1.msra.mxu0 0.0
        %2437 = vmatprep.subr.mxu0 0.0
        %2438 = vmatpush1.msra.mxu0 0.0
        %2439 = vmatprep.subr.mxu0 0.0
        %2440 = vmatpush1.msra.mxu0 0.0
        %2441 = vmatprep.subr.mxu0 0.0
        %2442 = vmatpush1.msra.mxu0 0.0
        %2443 = vmatprep.subr.mxu0 0.0
        %2444 = vmatpush1.msra.mxu0 0.0
        %2445 = vmatprep.subr.mxu0 0.0
        %2446 = vmatpush1.msra.mxu0 0.0
        %2447 = vmatprep.subr.mxu0 0.0
        %2448 = vmatpush1.msra.mxu0 0.0
        %2449 = vmatprep.subr.mxu0 0.0
        %2450 = vmatpush1.msra.mxu0 0.0
        %2451 = vmatprep.subr.mxu0 0.0
        %2452 = vmatpush1.msra.mxu0 0.0
        %2453 = vmatprep.subr.mxu0 0.0
        %2454 = vmatpush1.msra.mxu0 0.0
        %2455 = vmatprep.subr.mxu0 0.0
        %2456 = vmatpush1.msra.mxu0 0.0
        %2457 = vmatprep.subr.mxu0 0.0
        %2458 = vmatpush1.msra.mxu0 0.0
        %2459 = vmatprep.mubr.f32.mxu0 0.0
        %2460 = vmatmul.mubr.f32.gmra.mrb[0].mxu0 %v2390
        %v2461 = vpop.f32.mrb[0].mxu0
        %v2462 = vadd.f32 0.0, %v2461
        %v2463 = vpop.f32.mrb[0].mxu0
        %2464 = vmatprep.mubr.f32.mxu0 0.0
        %2465 = vmatmul.mubr.f32.gmra.mrb[0].mxu0 %v2393
        %v2466 = vpop.f32.mrb[0].mxu0
        %v2467 = vadd.f32 0.0, %v2466
        %v2468 = vpop.f32.mrb[0].mxu0
        %2469 = vdwg.mxu0
        %v2470 = vadd.f32 %v2384, %v2462
        %v2471 = vadd.f32 %v2385, %v2467
        %s2472 = scalar_lea.vmem %s1, 336
        %v2473 = vld [vmem:[%s2472] sm:$0xff]
        %v2474 = vld [vmem:[%s2472 + $0x8] sm:$0xff]
        %v2476 = vsel %vm252, %v426, 0
        %v2479 = vsel %vm252, %v427, 0
        %2481 = vmatprep.subr.mxu0 0.0
        %2482 = vmatpush1.msra.mxu0 %v2473
        %2483 = vmatprep.subr.mxu0 0.0
        %2484 = vmatpush1.msra.mxu0 %v2474
        %2485 = vmatprep.subr.mxu0 0.0
        %2486 = vmatpush1.msra.mxu0 0.0
        %2487 = vmatprep.subr.mxu0 0.0
        %2488 = vmatpush1.msra.mxu0 0.0
        %2489 = vmatprep.subr.mxu0 0.0
        %2490 = vmatpush1.msra.mxu0 0.0
        %2491 = vmatprep.subr.mxu0 0.0
        %2492 = vmatpush1.msra.mxu0 0.0
        %2493 = vmatprep.subr.mxu0 0.0
        %2494 = vmatpush1.msra.mxu0 0.0
        %2495 = vmatprep.subr.mxu0 0.0
        %2496 = vmatpush1.msra.mxu0 0.0
        %2497 = vmatprep.subr.mxu0 0.0
        %2498 = vmatpush1.msra.mxu0 0.0
        %2499 = vmatprep.subr.mxu0 0.0
        %2500 = vmatpush1.msra.mxu0 0.0
        %2501 = vmatprep.subr.mxu0 0.0
        %2502 = vmatpush1.msra.mxu0 0.0
        %2503 = vmatprep.subr.mxu0 0.0
        %2504 = vmatpush1.msra.mxu0 0.0
        %2505 = vmatprep.subr.mxu0 0.0
        %2506 = vmatpush1.msra.mxu0 0.0
        %2507 = vmatprep.subr.mxu0 0.0
        %2508 = vmatpush1.msra.mxu0 0.0
        %2509 = vmatprep.subr.mxu0 0.0
        %2510 = vmatpush1.msra.mxu0 0.0
        %2511 = vmatprep.subr.mxu0 0.0
        %2512 = vmatpush1.msra.mxu0 0.0
        %2513 = vmatprep.subr.mxu0 0.0
        %2514 = vmatpush1.msra.mxu0 0.0
        %2515 = vmatprep.subr.mxu0 0.0
        %2516 = vmatpush1.msra.mxu0 0.0
        %2517 = vmatprep.subr.mxu0 0.0
        %2518 = vmatpush1.msra.mxu0 0.0
        %2519 = vmatprep.subr.mxu0 0.0
        %2520 = vmatpush1.msra.mxu0 0.0
        %2521 = vmatprep.subr.mxu0 0.0
        %2522 = vmatpush1.msra.mxu0 0.0
        %2523 = vmatprep.subr.mxu0 0.0
        %2524 = vmatpush1.msra.mxu0 0.0
        %2525 = vmatprep.subr.mxu0 0.0
        %2526 = vmatpush1.msra.mxu0 0.0
        %2527 = vmatprep.subr.mxu0 0.0
        %2528 = vmatpush1.msra.mxu0 0.0
        %2529 = vmatprep.subr.mxu0 0.0
        %2530 = vmatpush1.msra.mxu0 0.0
        %2531 = vmatprep.subr.mxu0 0.0
        %2532 = vmatpush1.msra.mxu0 0.0
        %2533 = vmatprep.subr.mxu0 0.0
        %2534 = vmatpush1.msra.mxu0 0.0
        %2535 = vmatprep.subr.mxu0 0.0
        %2536 = vmatpush1.msra.mxu0 0.0
        %2537 = vmatprep.subr.mxu0 0.0
        %2538 = vmatpush1.msra.mxu0 0.0
        %2539 = vmatprep.subr.mxu0 0.0
        %2540 = vmatpush1.msra.mxu0 0.0
        %2541 = vmatprep.subr.mxu0 0.0
        %2542 = vmatpush1.msra.mxu0 0.0
        %2543 = vmatprep.subr.mxu0 0.0
        %2544 = vmatpush1.msra.mxu0 0.0
        %2545 = vmatprep.mubr.f32.mxu0 0.0
        %2546 = vmatmul.mubr.f32.gmra.mrb[0].mxu0 %v2476
        %v2547 = vpop.f32.mrb[0].mxu0
        %v2548 = vadd.f32 0.0, %v2547
        %v2549 = vpop.f32.mrb[0].mxu0
        %2550 = vmatprep.mubr.f32.mxu0 0.0
        %2551 = vmatmul.mubr.f32.gmra.mrb[0].mxu0 %v2479
        %v2552 = vpop.f32.mrb[0].mxu0
        %v2553 = vadd.f32 0.0, %v2552
        %v2554 = vpop.f32.mrb[0].mxu0
        %2555 = vdwg.mxu0
        %v2556 = vadd.f32 %v2470, %v2548
        %v2557 = vadd.f32 %v2471, %v2553
        %s2558 = scalar_lea.vmem %s1, 352
        %v2559 = vld [vmem:[%s2558] sm:$0xff]
        %v2560 = vld [vmem:[%s2558 + $0x8] sm:$0xff]
        %v2562 = vsel %vm252, %v507, 0
        %v2565 = vsel %vm252, %v508, 0
        %2567 = vmatprep.subr.mxu0 0.0
        %2568 = vmatpush1.msra.mxu0 %v2559
        %2569 = vmatprep.subr.mxu0 0.0
        %2570 = vmatpush1.msra.mxu0 %v2560
        %2571 = vmatprep.subr.mxu0 0.0
        %2572 = vmatpush1.msra.mxu0 0.0
        %2573 = vmatprep.subr.mxu0 0.0
        %2574 = vmatpush1.msra.mxu0 0.0
        %2575 = vmatprep.subr.mxu0 0.0
        %2576 = vmatpush1.msra.mxu0 0.0
        %2577 = vmatprep.subr.mxu0 0.0
        %2578 = vmatpush1.msra.mxu0 0.0
        %2579 = vmatprep.subr.mxu0 0.0
        %2580 = vmatpush1.msra.mxu0 0.0
        %2581 = vmatprep.subr.mxu0 0.0
        %2582 = vmatpush1.msra.mxu0 0.0
        %2583 = vmatprep.subr.mxu0 0.0
        %2584 = vmatpush1.msra.mxu0 0.0
        %2585 = vmatprep.subr.mxu0 0.0
        %2586 = vmatpush1.msra.mxu0 0.0
        %2587 = vmatprep.subr.mxu0 0.0
        %2588 = vmatpush1.msra.mxu0 0.0
        %2589 = vmatprep.subr.mxu0 0.0
        %2590 = vmatpush1.msra.mxu0 0.0
        %2591 = vmatprep.subr.mxu0 0.0
        %2592 = vmatpush1.msra.mxu0 0.0
        %2593 = vmatprep.subr.mxu0 0.0
        %2594 = vmatpush1.msra.mxu0 0.0
        %2595 = vmatprep.subr.mxu0 0.0
        %2596 = vmatpush1.msra.mxu0 0.0
        %2597 = vmatprep.subr.mxu0 0.0
        %2598 = vmatpush1.msra.mxu0 0.0
        %2599 = vmatprep.subr.mxu0 0.0
        %2600 = vmatpush1.msra.mxu0 0.0
        %2601 = vmatprep.subr.mxu0 0.0
        %2602 = vmatpush1.msra.mxu0 0.0
        %2603 = vmatprep.subr.mxu0 0.0
        %2604 = vmatpush1.msra.mxu0 0.0
        %2605 = vmatprep.subr.mxu0 0.0
        %2606 = vmatpush1.msra.mxu0 0.0
        %2607 = vmatprep.subr.mxu0 0.0
        %2608 = vmatpush1.msra.mxu0 0.0
        %2609 = vmatprep.subr.mxu0 0.0
        %2610 = vmatpush1.msra.mxu0 0.0
        %2611 = vmatprep.subr.mxu0 0.0
        %2612 = vmatpush1.msra.mxu0 0.0
        %2613 = vmatprep.subr.mxu0 0.0
        %2614 = vmatpush1.msra.mxu0 0.0
        %2615 = vmatprep.subr.mxu0 0.0
        %2616 = vmatpush1.msra.mxu0 0.0
        %2617 = vmatprep.subr.mxu0 0.0
        %2618 = vmatpush1.msra.mxu0 0.0
        %2619 = vmatprep.subr.mxu0 0.0
        %2620 = vmatpush1.msra.mxu0 0.0
        %2621 = vmatprep.subr.mxu0 0.0
        %2622 = vmatpush1.msra.mxu0 0.0
        %2623 = vmatprep.subr.mxu0 0.0
        %2624 = vmatpush1.msra.mxu0 0.0
        %2625 = vmatprep.subr.mxu0 0.0
        %2626 = vmatpush1.msra.mxu0 0.0
        %2627 = vmatprep.subr.mxu0 0.0
        %2628 = vmatpush1.msra.mxu0 0.0
        %2629 = vmatprep.subr.mxu0 0.0
        %2630 = vmatpush1.msra.mxu0 0.0
        %2631 = vmatprep.mubr.f32.mxu0 0.0
        %2632 = vmatmul.mubr.f32.gmra.mrb[0].mxu0 %v2562
        %v2633 = vpop.f32.mrb[0].mxu0
        %v2634 = vadd.f32 0.0, %v2633
        %v2635 = vpop.f32.mrb[0].mxu0
        %2636 = vmatprep.mubr.f32.mxu0 0.0
        %2637 = vmatmul.mubr.f32.gmra.mrb[0].mxu0 %v2565
        %v2638 = vpop.f32.mrb[0].mxu0
        %v2639 = vadd.f32 0.0, %v2638
        %v2640 = vpop.f32.mrb[0].mxu0
        %2641 = vdwg.mxu0
        %v2642 = vadd.f32 %v2556, %v2634
        %v2643 = vadd.f32 %v2557, %v2639
        %s2644 = scalar_lea.vmem %s1, 368
        %v2645 = vld [vmem:[%s2644] sm:$0xff]
        %v2646 = vld [vmem:[%s2644 + $0x8] sm:$0xff]
        %v2648 = vsel %vm252, %v588, 0
        %v2651 = vsel %vm252, %v589, 0
        %2653 = vmatprep.subr.mxu0 0.0
        %2654 = vmatpush1.msra.mxu0 %v2645
        %2655 = vmatprep.subr.mxu0 0.0
        %2656 = vmatpush1.msra.mxu0 %v2646
        %2657 = vmatprep.subr.mxu0 0.0
        %2658 = vmatpush1.msra.mxu0 0.0
        %2659 = vmatprep.subr.mxu0 0.0
        %2660 = vmatpush1.msra.mxu0 0.0
        %2661 = vmatprep.subr.mxu0 0.0
        %2662 = vmatpush1.msra.mxu0 0.0
        %2663 = vmatprep.subr.mxu0 0.0
        %2664 = vmatpush1.msra.mxu0 0.0
        %2665 = vmatprep.subr.mxu0 0.0
        %2666 = vmatpush1.msra.mxu0 0.0
        %2667 = vmatprep.subr.mxu0 0.0
        %2668 = vmatpush1.msra.mxu0 0.0
        %2669 = vmatprep.subr.mxu0 0.0
        %2670 = vmatpush1.msra.mxu0 0.0
        %2671 = vmatprep.subr.mxu0 0.0
        %2672 = vmatpush1.msra.mxu0 0.0
        %2673 = vmatprep.subr.mxu0 0.0
        %2674 = vmatpush1.msra.mxu0 0.0
        %2675 = vmatprep.subr.mxu0 0.0
        %2676 = vmatpush1.msra.mxu0 0.0
        %2677 = vmatprep.subr.mxu0 0.0
        %2678 = vmatpush1.msra.mxu0 0.0
        %2679 = vmatprep.subr.mxu0 0.0
        %2680 = vmatpush1.msra.mxu0 0.0
        %2681 = vmatprep.subr.mxu0 0.0
        %2682 = vmatpush1.msra.mxu0 0.0
        %2683 = vmatprep.subr.mxu0 0.0
        %2684 = vmatpush1.msra.mxu0 0.0
        %2685 = vmatprep.subr.mxu0 0.0
        %2686 = vmatpush1.msra.mxu0 0.0
        %2687 = vmatprep.subr.mxu0 0.0
        %2688 = vmatpush1.msra.mxu0 0.0
        %2689 = vmatprep.subr.mxu0 0.0
        %2690 = vmatpush1.msra.mxu0 0.0
        %2691 = vmatprep.subr.mxu0 0.0
        %2692 = vmatpush1.msra.mxu0 0.0
        %2693 = vmatprep.subr.mxu0 0.0
        %2694 = vmatpush1.msra.mxu0 0.0
        %2695 = vmatprep.subr.mxu0 0.0
        %2696 = vmatpush1.msra.mxu0 0.0
        %2697 = vmatprep.subr.mxu0 0.0
        %2698 = vmatpush1.msra.mxu0 0.0
        %2699 = vmatprep.subr.mxu0 0.0
        %2700 = vmatpush1.msra.mxu0 0.0
        %2701 = vmatprep.subr.mxu0 0.0
        %2702 = vmatpush1.msra.mxu0 0.0
        %2703 = vmatprep.subr.mxu0 0.0
        %2704 = vmatpush1.msra.mxu0 0.0
        %2705 = vmatprep.subr.mxu0 0.0
        %2706 = vmatpush1.msra.mxu0 0.0
        %2707 = vmatprep.subr.mxu0 0.0
        %2708 = vmatpush1.msra.mxu0 0.0
        %2709 = vmatprep.subr.mxu0 0.0
        %2710 = vmatpush1.msra.mxu0 0.0
        %2711 = vmatprep.subr.mxu0 0.0
        %2712 = vmatpush1.msra.mxu0 0.0
        %2713 = vmatprep.subr.mxu0 0.0
        %2714 = vmatpush1.msra.mxu0 0.0
        %2715 = vmatprep.subr.mxu0 0.0
        %2716 = vmatpush1.msra.mxu0 0.0
        %2717 = vmatprep.mubr.f32.mxu0 0.0
        %2718 = vmatmul.mubr.f32.gmra.mrb[0].mxu0 %v2648
        %v2719 = vpop.f32.mrb[0].mxu0
        %v2720 = vadd.f32 0.0, %v2719
        %v2721 = vpop.f32.mrb[0].mxu0
        %2722 = vmatprep.mubr.f32.mxu0 0.0
        %2723 = vmatmul.mubr.f32.gmra.mrb[0].mxu0 %v2651
        %v2724 = vpop.f32.mrb[0].mxu0
        %v2725 = vadd.f32 0.0, %v2724
        %v2726 = vpop.f32.mrb[0].mxu0
        %2727 = vdwg.mxu0
        %v2728 = vadd.f32 %v2642, %v2720
        %v2729 = vadd.f32 %v2643, %v2725
        %s2730 = scalar_lea.vmem %s1, 384
        %v2731 = vld [vmem:[%s2730] sm:$0xff]
        %v2732 = vld [vmem:[%s2730 + $0x8] sm:$0xff]
        %v2734 = vsel %vm252, %v669, 0
        %v2737 = vsel %vm252, %v670, 0
        %2739 = vmatprep.subr.mxu0 0.0
        %2740 = vmatpush1.msra.mxu0 %v2731
        %2741 = vmatprep.subr.mxu0 0.0
        %2742 = vmatpush1.msra.mxu0 %v2732
        %2743 = vmatprep.subr.mxu0 0.0
        %2744 = vmatpush1.msra.mxu0 0.0
        %2745 = vmatprep.subr.mxu0 0.0
        %2746 = vmatpush1.msra.mxu0 0.0
        %2747 = vmatprep.subr.mxu0 0.0
        %2748 = vmatpush1.msra.mxu0 0.0
        %2749 = vmatprep.subr.mxu0 0.0
        %2750 = vmatpush1.msra.mxu0 0.0
        %2751 = vmatprep.subr.mxu0 0.0
        %2752 = vmatpush1.msra.mxu0 0.0
        %2753 = vmatprep.subr.mxu0 0.0
        %2754 = vmatpush1.msra.mxu0 0.0
        %2755 = vmatprep.subr.mxu0 0.0
        %2756 = vmatpush1.msra.mxu0 0.0
        %2757 = vmatprep.subr.mxu0 0.0
        %2758 = vmatpush1.msra.mxu0 0.0
        %2759 = vmatprep.subr.mxu0 0.0
        %2760 = vmatpush1.msra.mxu0 0.0
        %2761 = vmatprep.subr.mxu0 0.0
        %2762 = vmatpush1.msra.mxu0 0.0
        %2763 = vmatprep.subr.mxu0 0.0
        %2764 = vmatpush1.msra.mxu0 0.0
        %2765 = vmatprep.subr.mxu0 0.0
        %2766 = vmatpush1.msra.mxu0 0.0
        %2767 = vmatprep.subr.mxu0 0.0
        %2768 = vmatpush1.msra.mxu0 0.0
        %2769 = vmatprep.subr.mxu0 0.0
        %2770 = vmatpush1.msra.mxu0 0.0
        %2771 = vmatprep.subr.mxu0 0.0
        %2772 = vmatpush1.msra.mxu0 0.0
        %2773 = vmatprep.subr.mxu0 0.0
        %2774 = vmatpush1.msra.mxu0 0.0
        %2775 = vmatprep.subr.mxu0 0.0
        %2776 = vmatpush1.msra.mxu0 0.0
        %2777 = vmatprep.subr.mxu0 0.0
        %2778 = vmatpush1.msra.mxu0 0.0
        %2779 = vmatprep.subr.mxu0 0.0
        %2780 = vmatpush1.msra.mxu0 0.0
        %2781 = vmatprep.subr.mxu0 0.0
        %2782 = vmatpush1.msra.mxu0 0.0
        %2783 = vmatprep.subr.mxu0 0.0
        %2784 = vmatpush1.msra.mxu0 0.0
        %2785 = vmatprep.subr.mxu0 0.0
        %2786 = vmatpush1.msra.mxu0 0.0
        %2787 = vmatprep.subr.mxu0 0.0
        %2788 = vmatpush1.msra.mxu0 0.0
        %2789 = vmatprep.subr.mxu0 0.0
        %2790 = vmatpush1.msra.mxu0 0.0
        %2791 = vmatprep.subr.mxu0 0.0
        %2792 = vmatpush1.msra.mxu0 0.0
        %2793 = vmatprep.subr.mxu0 0.0
        %2794 = vmatpush1.msra.mxu0 0.0
        %2795 = vmatprep.subr.mxu0 0.0
        %2796 = vmatpush1.msra.mxu0 0.0
        %2797 = vmatprep.subr.mxu0 0.0
        %2798 = vmatpush1.msra.mxu0 0.0
        %2799 = vmatprep.subr.mxu0 0.0
        %2800 = vmatpush1.msra.mxu0 0.0
        %2801 = vmatprep.subr.mxu0 0.0
        %2802 = vmatpush1.msra.mxu0 0.0
        %2803 = vmatprep.mubr.f32.mxu0 0.0
        %2804 = vmatmul.mubr.f32.gmra.mrb[0].mxu0 %v2734
        %v2805 = vpop.f32.mrb[0].mxu0
        %v2806 = vadd.f32 0.0, %v2805
        %v2807 = vpop.f32.mrb[0].mxu0
        %2808 = vmatprep.mubr.f32.mxu0 0.0
        %2809 = vmatmul.mubr.f32.gmra.mrb[0].mxu0 %v2737
        %v2810 = vpop.f32.mrb[0].mxu0
        %v2811 = vadd.f32 0.0, %v2810
        %v2812 = vpop.f32.mrb[0].mxu0
        %2813 = vdwg.mxu0
        %v2814 = vadd.f32 %v2728, %v2806
        %v2815 = vadd.f32 %v2729, %v2811
        %v2816 = vld [vmem:[%s2] sm:$0x1]
        %v2818 = vlaneseq
        %v2819 = vshrl.u32 %v2818, 7
        %v2820 = vsub.s32 0, %v2819
        %v2821 = vrot.slane %v2816, %v2820
        %v2823 = vadd.f32 %v2814, %v2821
        %v2824 = vadd.f32 %v2815, %v2821
        %v2825 = vmul.f32 %v2823, 0.5
        %v2826 = vmul.f32 %v2824, 0.5
        %v2827 = vmul.f32 %v2823, 0.70710677
        %v2828 = vmul.f32 %v2824, 0.70710677
        %v2829 = vand.u32 2147483647, %v2827
        %v2830 = vand.u32 2147483647, %v2828
        %v2831 = vmul.f32 %v2829, 0.3275911
        %v2832 = vmul.f32 %v2830, 0.3275911
        %v2833 = vadd.f32 %v2831, 1.0
        %v2834 = vadd.f32 %v2832, 1.0
        %v2835 = vrcp.pop %v2833
        %v2836 = vmul.f32 1.0, %v2835
        %v2837 = vrcp.pop %v2834
        %v2838 = vmul.f32 1.0, %v2837
        %v2839 = vmul.f32 %v2836, 1.0614054
        %v2840 = vmul.f32 %v2838, 1.0614054
        %v2841 = vadd.f32 %v2839, -1.4531521
        %v2842 = vadd.f32 %v2840, -1.4531521
        %v2843 = vmul.f32 %v2836, %v2841
        %v2844 = vmul.f32 %v2838, %v2842
        %v2845 = vadd.f32 %v2843, 1.4214138
        %v2846 = vadd.f32 %v2844, 1.4214138
        %v2847 = vmul.f32 %v2836, %v2845
        %v2848 = vmul.f32 %v2838, %v2846
        %v2849 = vadd.f32 %v2847, -0.28449672
        %v2850 = vadd.f32 %v2848, -0.28449672
        %v2851 = vmul.f32 %v2836, %v2849
        %v2852 = vmul.f32 %v2838, %v2850
        %v2853 = vadd.f32 %v2851, 0.2548296
        %v2854 = vadd.f32 %v2852, 0.2548296
        %v2855 = vmul.f32 %v2836, %v2853
        %v2856 = vmul.f32 %v2838, %v2854
        %v2857 = vsub.f32 0.0, %v2829
        %v2858 = vsub.f32 0.0, %v2830
        %v2859 = vmul.f32 %v2857, %v2829
        %v2860 = vmul.f32 %v2858, %v2830
        %v2861 = vmul.f32 %v2859, 1.442695
        %v2862 = vpow.pop %v2861
        %v2863 = vmul.f32 %v2860, 1.442695
        %v2864 = vpow.pop %v2863
        %v2865 = vmul.f32 %v2855, %v2862
        %v2866 = vmul.f32 %v2856, %v2864
        %v2867 = vsub.f32 1.0, %v2865
        %v2868 = vsub.f32 1.0, %v2866
        %vm2869 = vcmp.lt.f32.partialorder %v2827, 0.0
        %vm2870 = vcmp.lt.f32.partialorder %v2828, 0.0
        %v2871 = vsub.f32 0.0, %v2867
        %v2872 = vsub.f32 0.0, %v2868
        %v2873 = vsel %vm2869, %v2871, %v2867
        %v2874 = vsel %vm2870, %v2872, %v2868
        %v2875 = vadd.f32 %v2873, 1.0
        %v2876 = vadd.f32 %v2874, 1.0
        %v2877 = vmul.f32 %v2825, %v2875
        %v2878 = vmul.f32 %v2826, %v2876
        %vm2879 = vcmask 261120
        %2880 = vst.msk [vmem:[#allocation3] sm:$0xff] %vm2879, 0.0
        %2881 = vst.msk [vmem:[#allocation3 + $0x8] sm:$0xff] %vm2879, 0.0
        %2882 = vst.msk [vmem:[#allocation3 + $0x10] sm:$0xff] %vm2879, 0.0
        %2883 = vst.msk [vmem:[#allocation3 + $0x18] sm:$0xff] %vm2879, 0.0
        %2884 = vst.msk [vmem:[#allocation3 + $0x20] sm:$0xff] %vm2879, 0.0
        %2885 = vst.msk [vmem:[#allocation3 + $0x28] sm:$0xff] %vm2879, 0.0
        %2886 = vst.msk [vmem:[#allocation3 + $0x30] sm:$0xff] %vm2879, 0.0
        %2887 = vst.msk [vmem:[#allocation3 + $0x38] sm:$0xff] %vm2879, 0.0
        %2888 = vst.msk [vmem:[#allocation3 + $0x40] sm:$0xff] %vm2879, 0.0
        %2889 = vst.msk [vmem:[#allocation3 + $0x48] sm:$0xff] %vm2879, 0.0
        %vm2890 = vcmask 257024
        %2891 = vst.msk [vmem:[#allocation3 + $0x50] sm:$0xf] %vm2890, 0.0
        %2892 = vst.msk [vmem:[#allocation3 + $0x22] sm:$0xff] %vm2879, %v2877
        %2893 = vst.msk [vmem:[#allocation3 + $0x2a] sm:$0xff] %vm2879, %v2878
        %v2894 = vld [vmem:[#allocation3] sm:$0xff]
        %v2895 = vld [vmem:[#allocation3 + $0x8] sm:$0xff]
        %v2896 = vld [vmem:[#allocation3 + $0x10] sm:$0xff]
        %v2897 = vld [vmem:[#allocation3 + $0x18] sm:$0xff]
        %v2898 = vld [vmem:[#allocation3 + $0x20] sm:$0xff]
        %v2899 = vld [vmem:[#allocation3 + $0x28] sm:$0xff]
        %v2900 = vld [vmem:[#allocation3 + $0x30] sm:$0xff]
        %v2901 = vld [vmem:[#allocation3 + $0x38] sm:$0xff]
        %v2902 = vld [vmem:[#allocation3 + $0x40] sm:$0xff]
        %v2903 = vld [vmem:[#allocation3 + $0x48] sm:$0xff]
        %v2904 = vld [vmem:[%s5] sm:$0xff]
        %v2905 = vld [vmem:[%s5 + $0x8] sm:$0xff]
        %v2906 = vld [vmem:[%s5 + $0x10] sm:$0xff]
        %v2907 = vld [vmem:[%s5 + $0x18] sm:$0xff]
        %v2908 = vld [vmem:[%s5 + $0x20] sm:$0xff]
        %v2909 = vld [vmem:[%s5 + $0x28] sm:$0xff]
        %v2910 = vld [vmem:[%s5 + $0x30] sm:$0xff]
        %v2911 = vld [vmem:[%s5 + $0x38] sm:$0xff]
        %v2912 = vld [vmem:[%s5 + $0x40] sm:$0xff]
        %v2913 = vld [vmem:[%s5 + $0x48] sm:$0xff]
        %2915 = vset.pattern.permute.xlu0 0
        %2916 = vperm.xlu0 %2915, %v2904
        %v2917 = vpop.permute.xlu0 %2916
        %2920 = vset.pattern.permute.xlu0 0
        %2921 = vperm.xlu0 %2920, %v2905
        %v2922 = vpop.permute.xlu0 %2921
        %2925 = vset.pattern.permute.xlu0 0
        %2926 = vperm.xlu0 %2925, %v2906
        %v2927 = vpop.permute.xlu0 %2926
        %2930 = vset.pattern.permute.xlu0 0
        %2931 = vperm.xlu0 %2930, %v2907
        %v2932 = vpop.permute.xlu0 %2931
        %2935 = vset.pattern.permute.xlu0 0
        %2936 = vperm.xlu0 %2935, %v2908
        %v2937 = vpop.permute.xlu0 %2936
        %2940 = vset.pattern.permute.xlu0 0
        %2941 = vperm.xlu0 %2940, %v2909
        %v2942 = vpop.permute.xlu0 %2941
        %2945 = vset.pattern.permute.xlu0 0
        %2946 = vperm.xlu0 %2945, %v2910
        %v2947 = vpop.permute.xlu0 %2946
        %2950 = vset.pattern.permute.xlu0 0
        %2951 = vperm.xlu0 %2950, %v2911
        %v2952 = vpop.permute.xlu0 %2951
        %2955 = vset.pattern.permute.xlu0 0
        %2956 = vperm.xlu0 %2955, %v2912
        %v2957 = vpop.permute.xlu0 %2956
        %2960 = vset.pattern.permute.xlu0 0
        %2961 = vperm.xlu0 %2960, %v2913
        %v2962 = vpop.permute.xlu0 %2961
        %v2964 = vmul.f32 %v2894, %v2917
        %v2965 = vmul.f32 %v2895, %v2922
        %v2966 = vmul.f32 %v2896, %v2927
        %v2967 = vmul.f32 %v2897, %v2932
        %v2968 = vmul.f32 %v2898, %v2937
        %v2969 = vmul.f32 %v2899, %v2942
        %v2970 = vmul.f32 %v2900, %v2947
        %v2971 = vmul.f32 %v2901, %v2952
        %v2972 = vmul.f32 %v2902, %v2957
        %v2973 = vmul.f32 %v2903, %v2962
        %v2974 = vld [vmem:[#allocation3 + $0x1] sm:$0xff]
        %v2975 = vld [vmem:[#allocation3 + $0x9] sm:$0xff]
        %v2976 = vld [vmem:[#allocation3 + $0x11] sm:$0xff]
        %v2977 = vld [vmem:[#allocation3 + $0x19] sm:$0xff]
        %v2978 = vld [vmem:[#allocation3 + $0x21] sm:$0xff]
        %v2979 = vld [vmem:[#allocation3 + $0x29] sm:$0xff]
        %v2980 = vld [vmem:[#allocation3 + $0x31] sm:$0xff]
        %v2981 = vld [vmem:[#allocation3 + $0x39] sm:$0xff]
        %v2982 = vld [vmem:[#allocation3 + $0x41] sm:$0xff]
        %v2983 = vld [vmem:[#allocation3 + $0x49] sm:$0xff]
        %v2984 = vld [vmem:[%s357] sm:$0xff]
        %v2985 = vld [vmem:[%s357 + $0x8] sm:$0xff]
        %v2986 = vld [vmem:[%s357 + $0x10] sm:$0xff]
        %v2987 = vld [vmem:[%s357 + $0x18] sm:$0xff]
        %v2988 = vld [vmem:[%s357 + $0x20] sm:$0xff]
        %v2989 = vld [vmem:[%s357 + $0x28] sm:$0xff]
        %v2990 = vld [vmem:[%s357 + $0x30] sm:$0xff]
        %v2991 = vld [vmem:[%s357 + $0x38] sm:$0xff]
        %v2992 = vld [vmem:[%s357 + $0x40] sm:$0xff]
        %v2993 = vld [vmem:[%s357 + $0x48] sm:$0xff]
        %2995 = vset.pattern.permute.xlu0 0
        %2996 = vperm.xlu0 %2995, %v2984
        %v2997 = vpop.permute.xlu0 %2996
        %3000 = vset.pattern.permute.xlu0 0
        %3001 = vperm.xlu0 %3000, %v2985
        %v3002 = vpop.permute.xlu0 %3001
        %3005 = vset.pattern.permute.xlu0 0
        %3006 = vperm.xlu0 %3005, %v2986
        %v3007 = vpop.permute.xlu0 %3006
        %3010 = vset.pattern.permute.xlu0 0
        %3011 = vperm.xlu0 %3010, %v2987
        %v3012 = vpop.permute.xlu0 %3011
        %3015 = vset.pattern.permute.xlu0 0
        %3016 = vperm.xlu0 %3015, %v2988
        %v3017 = vpop.permute.xlu0 %3016
        %3020 = vset.pattern.permute.xlu0 0
        %3021 = vperm.xlu0 %3020, %v2989
        %v3022 = vpop.permute.xlu0 %3021
        %3025 = vset.pattern.permute.xlu0 0
        %3026 = vperm.xlu0 %3025, %v2990
        %v3027 = vpop.permute.xlu0 %3026
        %3030 = vset.pattern.permute.xlu0 0
        %3031 = vperm.xlu0 %3030, %v2991
        %v3032 = vpop.permute.xlu0 %3031
        %3035 = vset.pattern.permute.xlu0 0
        %3036 = vperm.xlu0 %3035, %v2992
        %v3037 = vpop.permute.xlu0 %3036
        %3040 = vset.pattern.permute.xlu0 0
        %3041 = vperm.xlu0 %3040, %v2993
        %v3042 = vpop.permute.xlu0 %3041
        %v3044 = vmul.f32 %v2974, %v2997
        %v3045 = vmul.f32 %v2975, %v3002
        %v3046 = vmul.f32 %v2976, %v3007
        %v3047 = vmul.f32 %v2977, %v3012
        %v3048 = vmul.f32 %v2978, %v3017
        %v3049 = vmul.f32 %v2979, %v3022
        %v3050 = vmul.f32 %v2980, %v3027
        %v3051 = vmul.f32 %v2981, %v3032
        %v3052 = vmul.f32 %v2982, %v3037
        %v3053 = vmul.f32 %v2983, %v3042
        %v3054 = vld [vmem:[#allocation3 + $0x2] sm:$0xff]
        %v3055 = vld [vmem:[#allocation3 + $0xa] sm:$0xff]
        %v3056 = vld [vmem:[#allocation3 + $0x12] sm:$0xff]
        %v3057 = vld [vmem:[#allocation3 + $0x1a] sm:$0xff]
        %v3058 = vld [vmem:[#allocation3 + $0x22] sm:$0xff]
        %v3059 = vld [vmem:[#allocation3 + $0x2a] sm:$0xff]
        %v3060 = vld [vmem:[#allocation3 + $0x32] sm:$0xff]
        %v3061 = vld [vmem:[#allocation3 + $0x3a] sm:$0xff]
        %v3062 = vld [vmem:[#allocation3 + $0x42] sm:$0xff]
        %v3063 = vld [vmem:[#allocation3 + $0x4a] sm:$0xff]
        %v3064 = vld [vmem:[%s438] sm:$0xff]
        %v3065 = vld [vmem:[%s438 + $0x8] sm:$0xff]
        %v3066 = vld [vmem:[%s438 + $0x10] sm:$0xff]
        %v3067 = vld [vmem:[%s438 + $0x18] sm:$0xff]
        %v3068 = vld [vmem:[%s438 + $0x20] sm:$0xff]
        %v3069 = vld [vmem:[%s438 + $0x28] sm:$0xff]
        %v3070 = vld [vmem:[%s438 + $0x30] sm:$0xff]
        %v3071 = vld [vmem:[%s438 + $0x38] sm:$0xff]
        %v3072 = vld [vmem:[%s438 + $0x40] sm:$0xff]
        %v3073 = vld [vmem:[%s438 + $0x48] sm:$0xff]
        %3075 = vset.pattern.permute.xlu0 0
        %3076 = vperm.xlu0 %3075, %v3064
        %v3077 = vpop.permute.xlu0 %3076
        %3080 = vset.pattern.permute.xlu0 0
        %3081 = vperm.xlu0 %3080, %v3065
        %v3082 = vpop.permute.xlu0 %3081
        %3085 = vset.pattern.permute.xlu0 0
        %3086 = vperm.xlu0 %3085, %v3066
        %v3087 = vpop.permute.xlu0 %3086
        %3090 = vset.pattern.permute.xlu0 0
        %3091 = vperm.xlu0 %3090, %v3067
        %v3092 = vpop.permute.xlu0 %3091
        %3095 = vset.pattern.permute.xlu0 0
        %3096 = vperm.xlu0 %3095, %v3068
        %v3097 = vpop.permute.xlu0 %3096
        %3100 = vset.pattern.permute.xlu0 0
        %3101 = vperm.xlu0 %3100, %v3069
        %v3102 = vpop.permute.xlu0 %3101
        %3105 = vset.pattern.permute.xlu0 0
        %3106 = vperm.xlu0 %3105, %v3070
        %v3107 = vpop.permute.xlu0 %3106
        %3110 = vset.pattern.permute.xlu0 0
        %3111 = vperm.xlu0 %3110, %v3071
        %v3112 = vpop.permute.xlu0 %3111
        %3115 = vset.pattern.permute.xlu0 0
        %3116 = vperm.xlu0 %3115, %v3072
        %v3117 = vpop.permute.xlu0 %3116
        %3120 = vset.pattern.permute.xlu0 0
        %3121 = vperm.xlu0 %3120, %v3073
        %v3122 = vpop.permute.xlu0 %3121
        %v3124 = vmul.f32 %v3054, %v3077
        %v3125 = vmul.f32 %v3055, %v3082
        %v3126 = vmul.f32 %v3056, %v3087
        %v3127 = vmul.f32 %v3057, %v3092
        %v3128 = vmul.f32 %v3058, %v3097
        %v3129 = vmul.f32 %v3059, %v3102
        %v3130 = vmul.f32 %v3060, %v3107
        %v3131 = vmul.f32 %v3061, %v3112
        %v3132 = vmul.f32 %v3062, %v3117
        %v3133 = vmul.f32 %v3063, %v3122
        %v3134 = vld [vmem:[#allocation3 + $0x3] sm:$0xff]
        %v3135 = vld [vmem:[#allocation3 + $0xb] sm:$0xff]
        %v3136 = vld [vmem:[#allocation3 + $0x13] sm:$0xff]
        %v3137 = vld [vmem:[#allocation3 + $0x1b] sm:$0xff]
        %v3138 = vld [vmem:[#allocation3 + $0x23] sm:$0xff]
        %v3139 = vld [vmem:[#allocation3 + $0x2b] sm:$0xff]
        %v3140 = vld [vmem:[#allocation3 + $0x33] sm:$0xff]
        %v3141 = vld [vmem:[#allocation3 + $0x3b] sm:$0xff]
        %v3142 = vld [vmem:[#allocation3 + $0x43] sm:$0xff]
        %v3143 = vld [vmem:[#allocation3 + $0x4b] sm:$0xff]
        %v3144 = vld [vmem:[%s519] sm:$0xff]
        %v3145 = vld [vmem:[%s519 + $0x8] sm:$0xff]
        %v3146 = vld [vmem:[%s519 + $0x10] sm:$0xff]
        %v3147 = vld [vmem:[%s519 + $0x18] sm:$0xff]
        %v3148 = vld [vmem:[%s519 + $0x20] sm:$0xff]
        %v3149 = vld [vmem:[%s519 + $0x28] sm:$0xff]
        %v3150 = vld [vmem:[%s519 + $0x30] sm:$0xff]
        %v3151 = vld [vmem:[%s519 + $0x38] sm:$0xff]
        %v3152 = vld [vmem:[%s519 + $0x40] sm:$0xff]
        %v3153 = vld [vmem:[%s519 + $0x48] sm:$0xff]
        %3155 = vset.pattern.permute.xlu0 0
        %3156 = vperm.xlu0 %3155, %v3144
        %v3157 = vpop.permute.xlu0 %3156
        %3160 = vset.pattern.permute.xlu0 0
        %3161 = vperm.xlu0 %3160, %v3145
        %v3162 = vpop.permute.xlu0 %3161
        %3165 = vset.pattern.permute.xlu0 0
        %3166 = vperm.xlu0 %3165, %v3146
        %v3167 = vpop.permute.xlu0 %3166
        %3170 = vset.pattern.permute.xlu0 0
        %3171 = vperm.xlu0 %3170, %v3147
        %v3172 = vpop.permute.xlu0 %3171
        %3175 = vset.pattern.permute.xlu0 0
        %3176 = vperm.xlu0 %3175, %v3148
        %v3177 = vpop.permute.xlu0 %3176
        %3180 = vset.pattern.permute.xlu0 0
        %3181 = vperm.xlu0 %3180, %v3149
        %v3182 = vpop.permute.xlu0 %3181
        %3185 = vset.pattern.permute.xlu0 0
        %3186 = vperm.xlu0 %3185, %v3150
        %v3187 = vpop.permute.xlu0 %3186
        %3190 = vset.pattern.permute.xlu0 0
        %3191 = vperm.xlu0 %3190, %v3151
        %v3192 = vpop.permute.xlu0 %3191
        %3195 = vset.pattern.permute.xlu0 0
        %3196 = vperm.xlu0 %3195, %v3152
        %v3197 = vpop.permute.xlu0 %3196
        %3200 = vset.pattern.permute.xlu0 0
        %3201 = vperm.xlu0 %3200, %v3153
        %v3202 = vpop.permute.xlu0 %3201
        %v3204 = vmul.f32 %v3134, %v3157
        %v3205 = vmul.f32 %v3135, %v3162
        %v3206 = vmul.f32 %v3136, %v3167
        %v3207 = vmul.f32 %v3137, %v3172
        %v3208 = vmul.f32 %v3138, %v3177
        %v3209 = vmul.f32 %v3139, %v3182
        %v3210 = vmul.f32 %v3140, %v3187
        %v3211 = vmul.f32 %v3141, %v3192
        %v3212 = vmul.f32 %v3142, %v3197
        %v3213 = vmul.f32 %v3143, %v3202
        %v3214 = vld [vmem:[#allocation3 + $0x4] sm:$0xff]
        %v3215 = vld [vmem:[#allocation3 + $0xc] sm:$0xff]
        %v3216 = vld [vmem:[#allocation3 + $0x14] sm:$0xff]
        %v3217 = vld [vmem:[#allocation3 + $0x1c] sm:$0xff]
        %v3218 = vld [vmem:[#allocation3 + $0x24] sm:$0xff]
        %v3219 = vld [vmem:[#allocation3 + $0x2c] sm:$0xff]
        %v3220 = vld [vmem:[#allocation3 + $0x34] sm:$0xff]
        %v3221 = vld [vmem:[#allocation3 + $0x3c] sm:$0xff]
        %v3222 = vld [vmem:[#allocation3 + $0x44] sm:$0xff]
        %v3223 = vld [vmem:[#allocation3 + $0x4c] sm:$0xff]
        %v3224 = vld [vmem:[%s600] sm:$0xff]
        %v3225 = vld [vmem:[%s600 + $0x8] sm:$0xff]
        %v3226 = vld [vmem:[%s600 + $0x10] sm:$0xff]
        %v3227 = vld [vmem:[%s600 + $0x18] sm:$0xff]
        %v3228 = vld [vmem:[%s600 + $0x20] sm:$0xff]
        %v3229 = vld [vmem:[%s600 + $0x28] sm:$0xff]
        %v3230 = vld [vmem:[%s600 + $0x30] sm:$0xff]
        %v3231 = vld [vmem:[%s600 + $0x38] sm:$0xff]
        %v3232 = vld [vmem:[%s600 + $0x40] sm:$0xff]
        %v3233 = vld [vmem:[%s600 + $0x48] sm:$0xff]
        %3235 = vset.pattern.permute.xlu0 0
        %3236 = vperm.xlu0 %3235, %v3224
        %v3237 = vpop.permute.xlu0 %3236
        %3240 = vset.pattern.permute.xlu0 0
        %3241 = vperm.xlu0 %3240, %v3225
        %v3242 = vpop.permute.xlu0 %3241
        %3245 = vset.pattern.permute.xlu0 0
        %3246 = vperm.xlu0 %3245, %v3226
        %v3247 = vpop.permute.xlu0 %3246
        %3250 = vset.pattern.permute.xlu0 0
        %3251 = vperm.xlu0 %3250, %v3227
        %v3252 = vpop.permute.xlu0 %3251
        %3255 = vset.pattern.permute.xlu0 0
        %3256 = vperm.xlu0 %3255, %v3228
        %v3257 = vpop.permute.xlu0 %3256
        %3260 = vset.pattern.permute.xlu0 0
        %3261 = vperm.xlu0 %3260, %v3229
        %v3262 = vpop.permute.xlu0 %3261
        %3265 = vset.pattern.permute.xlu0 0
        %3266 = vperm.xlu0 %3265, %v3230
        %v3267 = vpop.permute.xlu0 %3266
        %3270 = vset.pattern.permute.xlu0 0
        %3271 = vperm.xlu0 %3270, %v3231
        %v3272 = vpop.permute.xlu0 %3271
        %3275 = vset.pattern.permute.xlu0 0
        %3276 = vperm.xlu0 %3275, %v3232
        %v3277 = vpop.permute.xlu0 %3276
        %3280 = vset.pattern.permute.xlu0 0
        %3281 = vperm.xlu0 %3280, %v3233
        %v3282 = vpop.permute.xlu0 %3281
        %v3284 = vmul.f32 %v3214, %v3237
        %v3285 = vmul.f32 %v3215, %v3242
        %v3286 = vmul.f32 %v3216, %v3247
        %v3287 = vmul.f32 %v3217, %v3252
        %v3288 = vmul.f32 %v3218, %v3257
        %v3289 = vmul.f32 %v3219, %v3262
        %v3290 = vmul.f32 %v3220, %v3267
        %v3291 = vmul.f32 %v3221, %v3272
        %v3292 = vmul.f32 %v3222, %v3277
        %v3293 = vmul.f32 %v3223, %v3282
        %v3294 = vld [vmem:[%s3] sm:$0xff]
        %v3295 = vld [vmem:[%s3 + $0x8] sm:$0xff]
        %v3296 = vld [vmem:[%s3 + $0x10] sm:$0xff]
        %v3297 = vld [vmem:[%s3 + $0x18] sm:$0xff]
        %s3298 = scalar_lea.vmem %s3, 32
        %v3299 = vld [vmem:[%s3298] sm:$0xff]
        %v3300 = vld [vmem:[%s3298 + $0x8] sm:$0xff]
        %v3301 = vld [vmem:[%s3298 + $0x10] sm:$0xff]
        %v3302 = vld [vmem:[%s3298 + $0x18] sm:$0xff]
        %v3304 = vsel %vm2879, %v3044, 0
        %v3307 = vsel %vm2879, %v3045, 0
        %3309 = vmatprep.subr.mxu0 0.0
        %3310 = vmatpush1.msra.mxu0 %v3299
        %3311 = vmatprep.subr.mxu0 0.0
        %3312 = vmatpush1.msra.mxu0 %v3300
        %3313 = vmatprep.subr.mxu0 0.0
        %3314 = vmatpush1.msra.mxu0 %v3301
        %3315 = vmatprep.subr.mxu0 0.0
        %3316 = vmatpush1.msra.mxu0 %v3302
        %3317 = vmatprep.subr.mxu0 0.0
        %3318 = vmatpush1.msra.mxu0 0.0
        %3319 = vmatprep.subr.mxu0 0.0
        %3320 = vmatpush1.msra.mxu0 0.0
        %3321 = vmatprep.subr.mxu0 0.0
        %3322 = vmatpush1.msra.mxu0 0.0
        %3323 = vmatprep.subr.mxu0 0.0
        %3324 = vmatpush1.msra.mxu0 0.0
        %3325 = vmatprep.subr.mxu0 0.0
        %3326 = vmatpush1.msra.mxu0 0.0
        %3327 = vmatprep.subr.mxu0 0.0
        %3328 = vmatpush1.msra.mxu0 0.0
        %3329 = vmatprep.subr.mxu0 0.0
        %3330 = vmatpush1.msra.mxu0 0.0
        %3331 = vmatprep.subr.mxu0 0.0
        %3332 = vmatpush1.msra.mxu0 0.0
        %3333 = vmatprep.subr.mxu0 0.0
        %3334 = vmatpush1.msra.mxu0 0.0
        %3335 = vmatprep.subr.mxu0 0.0
        %3336 = vmatpush1.msra.mxu0 0.0
        %3337 = vmatprep.subr.mxu0 0.0
        %3338 = vmatpush1.msra.mxu0 0.0
        %3339 = vmatprep.subr.mxu0 0.0
        %3340 = vmatpush1.msra.mxu0 0.0
        %3341 = vmatprep.subr.mxu0 0.0
        %3342 = vmatpush1.msra.mxu0 0.0
        %3343 = vmatprep.subr.mxu0 0.0
        %3344 = vmatpush1.msra.mxu0 0.0
        %3345 = vmatprep.subr.mxu0 0.0
        %3346 = vmatpush1.msra.mxu0 0.0
        %3347 = vmatprep.subr.mxu0 0.0
        %3348 = vmatpush1.msra.mxu0 0.0
        %3349 = vmatprep.subr.mxu0 0.0
        %3350 = vmatpush1.msra.mxu0 0.0
        %3351 = vmatprep.subr.mxu0 0.0
        %3352 = vmatpush1.msra.mxu0 0.0
        %3353 = vmatprep.subr.mxu0 0.0
        %3354 = vmatpush1.msra.mxu0 0.0
        %3355 = vmatprep.subr.mxu0 0.0
        %3356 = vmatpush1.msra.mxu0 0.0
        %3357 = vmatprep.subr.mxu0 0.0
        %3358 = vmatpush1.msra.mxu0 0.0
        %3359 = vmatprep.subr.mxu0 0.0
        %3360 = vmatpush1.msra.mxu0 0.0
        %3361 = vmatprep.subr.mxu0 0.0
        %3362 = vmatpush1.msra.mxu0 0.0
        %3363 = vmatprep.subr.mxu0 0.0
        %3364 = vmatpush1.msra.mxu0 0.0
        %3365 = vmatprep.subr.mxu0 0.0
        %3366 = vmatpush1.msra.mxu0 0.0
        %3367 = vmatprep.subr.mxu0 0.0
        %3368 = vmatpush1.msra.mxu0 0.0
        %3369 = vmatprep.subr.mxu0 0.0
        %3370 = vmatpush1.msra.mxu0 0.0
        %3371 = vmatprep.subr.mxu0 0.0
        %3372 = vmatpush1.msra.mxu0 0.0
        %3373 = vmatprep.mubr.f32.mxu0 0.0
        %3374 = vmatmul.mubr.f32.gmra.mrb[0].mxu0 %v3304
        %v3375 = vpop.f32.mrb[0].mxu0
        %v3376 = vadd.f32 0.0, %v3375
        %v3377 = vpop.f32.mrb[0].mxu0
        %3378 = vmatprep.mubr.f32.mxu0 0.0
        %3379 = vmatmul.mubr.f32.gmra.mrb[0].mxu0 %v3307
        %v3380 = vpop.f32.mrb[0].mxu0
        %v3381 = vadd.f32 0.0, %v3380
        %v3382 = vpop.f32.mrb[0].mxu0
        %3383 = vdwg.mxu0
        %v3385 = vsel %vm2879, %v2964, 0
        %v3388 = vsel %vm2879, %v2965, 0
        %3390 = vmatprep.subr.mxu0 0.0
        %3391 = vmatpush1.msra.mxu0 %v3294
        %3392 = vmatprep.subr.mxu0 0.0
        %3393 = vmatpush1.msra.mxu0 %v3295
        %3394 = vmatprep.subr.mxu0 0.0
        %3395 = vmatpush1.msra.mxu0 %v3296
        %3396 = vmatprep.subr.mxu0 0.0
        %3397 = vmatpush1.msra.mxu0 %v3297
        %3398 = vmatprep.subr.mxu0 0.0
        %3399 = vmatpush1.msra.mxu0 0.0
        %3400 = vmatprep.subr.mxu0 0.0
        %3401 = vmatpush1.msra.mxu0 0.0
        %3402 = vmatprep.subr.mxu0 0.0
        %3403 = vmatpush1.msra.mxu0 0.0
        %3404 = vmatprep.subr.mxu0 0.0
        %3405 = vmatpush1.msra.mxu0 0.0
        %3406 = vmatprep.subr.mxu0 0.0
        %3407 = vmatpush1.msra.mxu0 0.0
        %3408 = vmatprep.subr.mxu0 0.0
        %3409 = vmatpush1.msra.mxu0 0.0
        %3410 = vmatprep.subr.mxu0 0.0
        %3411 = vmatpush1.msra.mxu0 0.0
        %3412 = vmatprep.subr.mxu0 0.0
        %3413 = vmatpush1.msra.mxu0 0.0
        %3414 = vmatprep.subr.mxu0 0.0
        %3415 = vmatpush1.msra.mxu0 0.0
        %3416 = vmatprep.subr.mxu0 0.0
        %3417 = vmatpush1.msra.mxu0 0.0
        %3418 = vmatprep.subr.mxu0 0.0
        %3419 = vmatpush1.msra.mxu0 0.0
        %3420 = vmatprep.subr.mxu0 0.0
        %3421 = vmatpush1.msra.mxu0 0.0
        %3422 = vmatprep.subr.mxu0 0.0
        %3423 = vmatpush1.msra.mxu0 0.0
        %3424 = vmatprep.subr.mxu0 0.0
        %3425 = vmatpush1.msra.mxu0 0.0
        %3426 = vmatprep.subr.mxu0 0.0
        %3427 = vmatpush1.msra.mxu0 0.0
        %3428 = vmatprep.subr.mxu0 0.0
        %3429 = vmatpush1.msra.mxu0 0.0
        %3430 = vmatprep.subr.mxu0 0.0
        %3431 = vmatpush1.msra.mxu0 0.0
        %3432 = vmatprep.subr.mxu0 0.0
        %3433 = vmatpush1.msra.mxu0 0.0
        %3434 = vmatprep.subr.mxu0 0.0
        %3435 = vmatpush1.msra.mxu0 0.0
        %3436 = vmatprep.subr.mxu0 0.0
        %3437 = vmatpush1.msra.mxu0 0.0
        %3438 = vmatprep.subr.mxu0 0.0
        %3439 = vmatpush1.msra.mxu0 0.0
        %3440 = vmatprep.subr.mxu0 0.0
        %3441 = vmatpush1.msra.mxu0 0.0
        %3442 = vmatprep.subr.mxu0 0.0
        %3443 = vmatpush1.msra.mxu0 0.0
        %3444 = vmatprep.subr.mxu0 0.0
        %3445 = vmatpush1.msra.mxu0 0.0
        %3446 = vmatprep.subr.mxu0 0.0
        %3447 = vmatpush1.msra.mxu0 0.0
        %3448 = vmatprep.subr.mxu0 0.0
        %3449 = vmatpush1.msra.mxu0 0.0
        %3450 = vmatprep.subr.mxu0 0.0
        %3451 = vmatpush1.msra.mxu0 0.0
        %3452 = vmatprep.subr.mxu0 0.0
        %3453 = vmatpush1.msra.mxu0 0.0
        %3454 = vmatprep.mubr.f32.mxu0 0.0
        %3455 = vmatmul.mubr.f32.gmra.mrb[0].mxu0 %v3385
        %v3456 = vpop.f32.mrb[0].mxu0
        %v3457 = vadd.f32 %v3376, %v3456
        %v3458 = vpop.f32.mrb[0].mxu0
        %3459 = vmatprep.mubr.f32.mxu0 0.0
        %3460 = vmatmul.mubr.f32.gmra.mrb[0].mxu0 %v3388
        %v3461 = vpop.f32.mrb[0].mxu0
        %v3462 = vadd.f32 %v3381, %v3461
        %v3463 = vpop.f32.mrb[0].mxu0
        %3464 = vdwg.mxu0
        %s3465 = scalar_lea.vmem %s3, 64
        %v3466 = vld [vmem:[%s3465] sm:$0xff]
        %v3467 = vld [vmem:[%s3465 + $0x8] sm:$0xff]
        %v3468 = vld [vmem:[%s3465 + $0x10] sm:$0xff]
        %v3469 = vld [vmem:[%s3465 + $0x18] sm:$0xff]
        %v3471 = vsel %vm2879, %v3124, 0
        %v3474 = vsel %vm2879, %v3125, 0
        %3476 = vmatprep.subr.mxu0 0.0
        %3477 = vmatpush1.msra.mxu0 %v3466
        %3478 = vmatprep.subr.mxu0 0.0
        %3479 = vmatpush1.msra.mxu0 %v3467
        %3480 = vmatprep.subr.mxu0 0.0
        %3481 = vmatpush1.msra.mxu0 %v3468
        %3482 = vmatprep.subr.mxu0 0.0
        %3483 = vmatpush1.msra.mxu0 %v3469
        %3484 = vmatprep.subr.mxu0 0.0
        %3485 = vmatpush1.msra.mxu0 0.0
        %3486 = vmatprep.subr.mxu0 0.0
        %3487 = vmatpush1.msra.mxu0 0.0
        %3488 = vmatprep.subr.mxu0 0.0
        %3489 = vmatpush1.msra.mxu0 0.0
        %3490 = vmatprep.subr.mxu0 0.0
        %3491 = vmatpush1.msra.mxu0 0.0
        %3492 = vmatprep.subr.mxu0 0.0
        %3493 = vmatpush1.msra.mxu0 0.0
        %3494 = vmatprep.subr.mxu0 0.0
        %3495 = vmatpush1.msra.mxu0 0.0
        %3496 = vmatprep.subr.mxu0 0.0
        %3497 = vmatpush1.msra.mxu0 0.0
        %3498 = vmatprep.subr.mxu0 0.0
        %3499 = vmatpush1.msra.mxu0 0.0
        %3500 = vmatprep.subr.mxu0 0.0
        %3501 = vmatpush1.msra.mxu0 0.0
        %3502 = vmatprep.subr.mxu0 0.0
        %3503 = vmatpush1.msra.mxu0 0.0
        %3504 = vmatprep.subr.mxu0 0.0
        %3505 = vmatpush1.msra.mxu0 0.0
        %3506 = vmatprep.subr.mxu0 0.0
        %3507 = vmatpush1.msra.mxu0 0.0
        %3508 = vmatprep.subr.mxu0 0.0
        %3509 = vmatpush1.msra.mxu0 0.0
        %3510 = vmatprep.subr.mxu0 0.0
        %3511 = vmatpush1.msra.mxu0 0.0
        %3512 = vmatprep.subr.mxu0 0.0
        %3513 = vmatpush1.msra.mxu0 0.0
        %3514 = vmatprep.subr.mxu0 0.0
        %3515 = vmatpush1.msra.mxu0 0.0
        %3516 = vmatprep.subr.mxu0 0.0
        %3517 = vmatpush1.msra.mxu0 0.0
        %3518 = vmatprep.subr.mxu0 0.0
        %3519 = vmatpush1.msra.mxu0 0.0
        %3520 = vmatprep.subr.mxu0 0.0
        %3521 = vmatpush1.msra.mxu0 0.0
        %3522 = vmatprep.subr.mxu0 0.0
        %3523 = vmatpush1.msra.mxu0 0.0
        %3524 = vmatprep.subr.mxu0 0.0
        %3525 = vmatpush1.msra.mxu0 0.0
        %3526 = vmatprep.subr.mxu0 0.0
        %3527 = vmatpush1.msra.mxu0 0.0
        %3528 = vmatprep.subr.mxu0 0.0
        %3529 = vmatpush1.msra.mxu0 0.0
        %3530 = vmatprep.subr.mxu0 0.0
        %3531 = vmatpush1.msra.mxu0 0.0
        %3532 = vmatprep.subr.mxu0 0.0
        %3533 = vmatpush1.msra.mxu0 0.0
        %3534 = vmatprep.subr.mxu0 0.0
        %3535 = vmatpush1.msra.mxu0 0.0
        %3536 = vmatprep.subr.mxu0 0.0
        %3537 = vmatpush1.msra.mxu0 0.0
        %3538 = vmatprep.subr.mxu0 0.0
        %3539 = vmatpush1.msra.mxu0 0.0
        %3540 = vmatprep.mubr.f32.mxu0 0.0
        %3541 = vmatmul.mubr.f32.gmra.mrb[0].mxu0 %v3471
        %v3542 = vpop.f32.mrb[0].mxu0
        %v3543 = vadd.f32 0.0, %v3542
        %v3544 = vpop.f32.mrb[0].mxu0
        %3545 = vmatprep.mubr.f32.mxu0 0.0
        %3546 = vmatmul.mubr.f32.gmra.mrb[0].mxu0 %v3474
        %v3547 = vpop.f32.mrb[0].mxu0
        %v3548 = vadd.f32 0.0, %v3547
        %v3549 = vpop.f32.mrb[0].mxu0
        %3550 = vdwg.mxu0
        %v3551 = vadd.f32 %v3457, %v3543
        %v3552 = vadd.f32 %v3462, %v3548
        %s3553 = scalar_lea.vmem %s3, 96
        %v3554 = vld [vmem:[%s3553] sm:$0xff]
        %v3555 = vld [vmem:[%s3553 + $0x8] sm:$0xff]
        %v3556 = vld [vmem:[%s3553 + $0x10] sm:$0xff]
        %v3557 = vld [vmem:[%s3553 + $0x18] sm:$0xff]
        %v3559 = vsel %vm2879, %v3204, 0
        %v3562 = vsel %vm2879, %v3205, 0
        %3564 = vmatprep.subr.mxu0 0.0
        %3565 = vmatpush1.msra.mxu0 %v3554
        %3566 = vmatprep.subr.mxu0 0.0
        %3567 = vmatpush1.msra.mxu0 %v3555
        %3568 = vmatprep.subr.mxu0 0.0
        %3569 = vmatpush1.msra.mxu0 %v3556
        %3570 = vmatprep.subr.mxu0 0.0
        %3571 = vmatpush1.msra.mxu0 %v3557
        %3572 = vmatprep.subr.mxu0 0.0
        %3573 = vmatpush1.msra.mxu0 0.0
        %3574 = vmatprep.subr.mxu0 0.0
        %3575 = vmatpush1.msra.mxu0 0.0
        %3576 = vmatprep.subr.mxu0 0.0
        %3577 = vmatpush1.msra.mxu0 0.0
        %3578 = vmatprep.subr.mxu0 0.0
        %3579 = vmatpush1.msra.mxu0 0.0
        %3580 = vmatprep.subr.mxu0 0.0
        %3581 = vmatpush1.msra.mxu0 0.0
        %3582 = vmatprep.subr.mxu0 0.0
        %3583 = vmatpush1.msra.mxu0 0.0
        %3584 = vmatprep.subr.mxu0 0.0
        %3585 = vmatpush1.msra.mxu0 0.0
        %3586 = vmatprep.subr.mxu0 0.0
        %3587 = vmatpush1.msra.mxu0 0.0
        %3588 = vmatprep.subr.mxu0 0.0
        %3589 = vmatpush1.msra.mxu0 0.0
        %3590 = vmatprep.subr.mxu0 0.0
        %3591 = vmatpush1.msra.mxu0 0.0
        %3592 = vmatprep.subr.mxu0 0.0
        %3593 = vmatpush1.msra.mxu0 0.0
        %3594 = vmatprep.subr.mxu0 0.0
        %3595 = vmatpush1.msra.mxu0 0.0
        %3596 = vmatprep.subr.mxu0 0.0
        %3597 = vmatpush1.msra.mxu0 0.0
        %3598 = vmatprep.subr.mxu0 0.0
        %3599 = vmatpush1.msra.mxu0 0.0
        %3600 = vmatprep.subr.mxu0 0.0
        %3601 = vmatpush1.msra.mxu0 0.0
        %3602 = vmatprep.subr.mxu0 0.0
        %3603 = vmatpush1.msra.mxu0 0.0
        %3604 = vmatprep.subr.mxu0 0.0
        %3605 = vmatpush1.msra.mxu0 0.0
        %3606 = vmatprep.subr.mxu0 0.0
        %3607 = vmatpush1.msra.mxu0 0.0
        %3608 = vmatprep.subr.mxu0 0.0
        %3609 = vmatpush1.msra.mxu0 0.0
        %3610 = vmatprep.subr.mxu0 0.0
        %3611 = vmatpush1.msra.mxu0 0.0
        %3612 = vmatprep.subr.mxu0 0.0
        %3613 = vmatpush1.msra.mxu0 0.0
        %3614 = vmatprep.subr.mxu0 0.0
        %3615 = vmatpush1.msra.mxu0 0.0
        %3616 = vmatprep.subr.mxu0 0.0
        %3617 = vmatpush1.msra.mxu0 0.0
        %3618 = vmatprep.subr.mxu0 0.0
        %3619 = vmatpush1.msra.mxu0 0.0
        %3620 = vmatprep.subr.mxu0 0.0
        %3621 = vmatpush1.msra.mxu0 0.0
        %3622 = vmatprep.subr.mxu0 0.0
        %3623 = vmatpush1.msra.mxu0 0.0
        %3624 = vmatprep.subr.mxu0 0.0
        %3625 = vmatpush1.msra.mxu0 0.0
        %3626 = vmatprep.subr.mxu0 0.0
        %3627 = vmatpush1.msra.mxu0 0.0
        %3628 = vmatprep.mubr.f32.mxu0 0.0
        %3629 = vmatmul.mubr.f32.gmra.mrb[0].mxu0 %v3559
        %v3630 = vpop.f32.mrb[0].mxu0
        %v3631 = vadd.f32 0.0, %v3630
        %v3632 = vpop.f32.mrb[0].mxu0
        %3633 = vmatprep.mubr.f32.mxu0 0.0
        %3634 = vmatmul.mubr.f32.gmra.mrb[0].mxu0 %v3562
        %v3635 = vpop.f32.mrb[0].mxu0
        %v3636 = vadd.f32 0.0, %v3635
        %v3637 = vpop.f32.mrb[0].mxu0
        %3638 = vdwg.mxu0
        %v3639 = vadd.f32 %v3551, %v3631
        %v3640 = vadd.f32 %v3552, %v3636
        %s3641 = scalar_lea.vmem %s3, 128
        %v3642 = vld [vmem:[%s3641] sm:$0xff]
        %v3643 = vld [vmem:[%s3641 + $0x8] sm:$0xff]
        %v3644 = vld [vmem:[%s3641 + $0x10] sm:$0xff]
        %v3645 = vld [vmem:[%s3641 + $0x18] sm:$0xff]
        %v3647 = vsel %vm2879, %v3284, 0
        %v3650 = vsel %vm2879, %v3285, 0
        %3652 = vmatprep.subr.mxu0 0.0
        %3653 = vmatpush1.msra.mxu0 %v3642
        %3654 = vmatprep.subr.mxu0 0.0
        %3655 = vmatpush1.msra.mxu0 %v3643
        %3656 = vmatprep.subr.mxu0 0.0
        %3657 = vmatpush1.msra.mxu0 %v3644
        %3658 = vmatprep.subr.mxu0 0.0
        %3659 = vmatpush1.msra.mxu0 %v3645
        %3660 = vmatprep.subr.mxu0 0.0
        %3661 = vmatpush1.msra.mxu0 0.0
        %3662 = vmatprep.subr.mxu0 0.0
        %3663 = vmatpush1.msra.mxu0 0.0
        %3664 = vmatprep.subr.mxu0 0.0
        %3665 = vmatpush1.msra.mxu0 0.0
        %3666 = vmatprep.subr.mxu0 0.0
        %3667 = vmatpush1.msra.mxu0 0.0
        %3668 = vmatprep.subr.mxu0 0.0
        %3669 = vmatpush1.msra.mxu0 0.0
        %3670 = vmatprep.subr.mxu0 0.0
        %3671 = vmatpush1.msra.mxu0 0.0
        %3672 = vmatprep.subr.mxu0 0.0
        %3673 = vmatpush1.msra.mxu0 0.0
        %3674 = vmatprep.subr.mxu0 0.0
        %3675 = vmatpush1.msra.mxu0 0.0
        %3676 = vmatprep.subr.mxu0 0.0
        %3677 = vmatpush1.msra.mxu0 0.0
        %3678 = vmatprep.subr.mxu0 0.0
        %3679 = vmatpush1.msra.mxu0 0.0
        %3680 = vmatprep.subr.mxu0 0.0
        %3681 = vmatpush1.msra.mxu0 0.0
        %3682 = vmatprep.subr.mxu0 0.0
        %3683 = vmatpush1.msra.mxu0 0.0
        %3684 = vmatprep.subr.mxu0 0.0
        %3685 = vmatpush1.msra.mxu0 0.0
        %3686 = vmatprep.subr.mxu0 0.0
        %3687 = vmatpush1.msra.mxu0 0.0
        %3688 = vmatprep.subr.mxu0 0.0
        %3689 = vmatpush1.msra.mxu0 0.0
        %3690 = vmatprep.subr.mxu0 0.0
        %3691 = vmatpush1.msra.mxu0 0.0
        %3692 = vmatprep.subr.mxu0 0.0
        %3693 = vmatpush1.msra.mxu0 0.0
        %3694 = vmatprep.subr.mxu0 0.0
        %3695 = vmatpush1.msra.mxu0 0.0
        %3696 = vmatprep.subr.mxu0 0.0
        %3697 = vmatpush1.msra.mxu0 0.0
        %3698 = vmatprep.subr.mxu0 0.0
        %3699 = vmatpush1.msra.mxu0 0.0
        %3700 = vmatprep.subr.mxu0 0.0
        %3701 = vmatpush1.msra.mxu0 0.0
        %3702 = vmatprep.subr.mxu0 0.0
        %3703 = vmatpush1.msra.mxu0 0.0
        %3704 = vmatprep.subr.mxu0 0.0
        %3705 = vmatpush1.msra.mxu0 0.0
        %3706 = vmatprep.subr.mxu0 0.0
        %3707 = vmatpush1.msra.mxu0 0.0
        %3708 = vmatprep.subr.mxu0 0.0
        %3709 = vmatpush1.msra.mxu0 0.0
        %3710 = vmatprep.subr.mxu0 0.0
        %3711 = vmatpush1.msra.mxu0 0.0
        %3712 = vmatprep.subr.mxu0 0.0
        %3713 = vmatpush1.msra.mxu0 0.0
        %3714 = vmatprep.subr.mxu0 0.0
        %3715 = vmatpush1.msra.mxu0 0.0
        %3716 = vmatprep.mubr.f32.mxu0 0.0
        %3717 = vmatmul.mubr.f32.gmra.mrb[0].mxu0 %v3647
        %v3718 = vpop.f32.mrb[0].mxu0
        %v3719 = vadd.f32 0.0, %v3718
        %v3720 = vpop.f32.mrb[0].mxu0
        %3721 = vmatprep.mubr.f32.mxu0 0.0
        %3722 = vmatmul.mubr.f32.gmra.mrb[0].mxu0 %v3650
        %v3723 = vpop.f32.mrb[0].mxu0
        %v3724 = vadd.f32 0.0, %v3723
        %v3725 = vpop.f32.mrb[0].mxu0
        %3726 = vdwg.mxu0
        %v3727 = vadd.f32 %v3639, %v3719
        %v3728 = vadd.f32 %v3640, %v3724
        %s3729 = scalar_lea.vmem %s3, 160
        %v3730 = vld [vmem:[%s3729] sm:$0xff]
        %v3731 = vld [vmem:[%s3729 + $0x8] sm:$0xff]
        %v3732 = vld [vmem:[%s3729 + $0x10] sm:$0xff]
        %v3733 = vld [vmem:[%s3729 + $0x18] sm:$0xff]
        %v3735 = vsel %vm2879, %v2966, 0
        %v3738 = vsel %vm2879, %v2967, 0
        %3740 = vmatprep.subr.mxu0 0.0
        %3741 = vmatpush1.msra.mxu0 %v3730
        %3742 = vmatprep.subr.mxu0 0.0
        %3743 = vmatpush1.msra.mxu0 %v3731
        %3744 = vmatprep.subr.mxu0 0.0
        %3745 = vmatpush1.msra.mxu0 %v3732
        %3746 = vmatprep.subr.mxu0 0.0
        %3747 = vmatpush1.msra.mxu0 %v3733
        %3748 = vmatprep.subr.mxu0 0.0
        %3749 = vmatpush1.msra.mxu0 0.0
        %3750 = vmatprep.subr.mxu0 0.0
        %3751 = vmatpush1.msra.mxu0 0.0
        %3752 = vmatprep.subr.mxu0 0.0
        %3753 = vmatpush1.msra.mxu0 0.0
        %3754 = vmatprep.subr.mxu0 0.0
        %3755 = vmatpush1.msra.mxu0 0.0
        %3756 = vmatprep.subr.mxu0 0.0
        %3757 = vmatpush1.msra.mxu0 0.0
        %3758 = vmatprep.subr.mxu0 0.0
        %3759 = vmatpush1.msra.mxu0 0.0
        %3760 = vmatprep.subr.mxu0 0.0
        %3761 = vmatpush1.msra.mxu0 0.0
        %3762 = vmatprep.subr.mxu0 0.0
        %3763 = vmatpush1.msra.mxu0 0.0
        %3764 = vmatprep.subr.mxu0 0.0
        %3765 = vmatpush1.msra.mxu0 0.0
        %3766 = vmatprep.subr.mxu0 0.0
        %3767 = vmatpush1.msra.mxu0 0.0
        %3768 = vmatprep.subr.mxu0 0.0
        %3769 = vmatpush1.msra.mxu0 0.0
        %3770 = vmatprep.subr.mxu0 0.0
        %3771 = vmatpush1.msra.mxu0 0.0
        %3772 = vmatprep.subr.mxu0 0.0
        %3773 = vmatpush1.msra.mxu0 0.0
        %3774 = vmatprep.subr.mxu0 0.0
        %3775 = vmatpush1.msra.mxu0 0.0
        %3776 = vmatprep.subr.mxu0 0.0
        %3777 = vmatpush1.msra.mxu0 0.0
        %3778 = vmatprep.subr.mxu0 0.0
        %3779 = vmatpush1.msra.mxu0 0.0
        %3780 = vmatprep.subr.mxu0 0.0
        %3781 = vmatpush1.msra.mxu0 0.0
        %3782 = vmatprep.subr.mxu0 0.0
        %3783 = vmatpush1.msra.mxu0 0.0
        %3784 = vmatprep.subr.mxu0 0.0
        %3785 = vmatpush1.msra.mxu0 0.0
        %3786 = vmatprep.subr.mxu0 0.0
        %3787 = vmatpush1.msra.mxu0 0.0
        %3788 = vmatprep.subr.mxu0 0.0
        %3789 = vmatpush1.msra.mxu0 0.0
        %3790 = vmatprep.subr.mxu0 0.0
        %3791 = vmatpush1.msra.mxu0 0.0
        %3792 = vmatprep.subr.mxu0 0.0
        %3793 = vmatpush1.msra.mxu0 0.0
        %3794 = vmatprep.subr.mxu0 0.0
        %3795 = vmatpush1.msra.mxu0 0.0
        %3796 = vmatprep.subr.mxu0 0.0
        %3797 = vmatpush1.msra.mxu0 0.0
        %3798 = vmatprep.subr.mxu0 0.0
        %3799 = vmatpush1.msra.mxu0 0.0
        %3800 = vmatprep.subr.mxu0 0.0
        %3801 = vmatpush1.msra.mxu0 0.0
        %3802 = vmatprep.subr.mxu0 0.0
        %3803 = vmatpush1.msra.mxu0 0.0
        %3804 = vmatprep.mubr.f32.mxu0 0.0
        %3805 = vmatmul.mubr.f32.gmra.mrb[0].mxu0 %v3735
        %v3806 = vpop.f32.mrb[0].mxu0
        %v3807 = vadd.f32 0.0, %v3806
        %v3808 = vpop.f32.mrb[0].mxu0
        %3809 = vmatprep.mubr.f32.mxu0 0.0
        %3810 = vmatmul.mubr.f32.gmra.mrb[0].mxu0 %v3738
        %v3811 = vpop.f32.mrb[0].mxu0
        %v3812 = vadd.f32 0.0, %v3811
        %v3813 = vpop.f32.mrb[0].mxu0
        %3814 = vdwg.mxu0
        %v3815 = vadd.f32 %v3727, %v3807
        %v3816 = vadd.f32 %v3728, %v3812
        %s3817 = scalar_lea.vmem %s3, 192
        %v3818 = vld [vmem:[%s3817] sm:$0xff]
        %v3819 = vld [vmem:[%s3817 + $0x8] sm:$0xff]
        %v3820 = vld [vmem:[%s3817 + $0x10] sm:$0xff]
        %v3821 = vld [vmem:[%s3817 + $0x18] sm:$0xff]
        %v3823 = vsel %vm2879, %v3046, 0
        %v3826 = vsel %vm2879, %v3047, 0
        %3828 = vmatprep.subr.mxu0 0.0
        %3829 = vmatpush1.msra.mxu0 %v3818
        %3830 = vmatprep.subr.mxu0 0.0
        %3831 = vmatpush1.msra.mxu0 %v3819
        %3832 = vmatprep.subr.mxu0 0.0
        %3833 = vmatpush1.msra.mxu0 %v3820
        %3834 = vmatprep.subr.mxu0 0.0
        %3835 = vmatpush1.msra.mxu0 %v3821
        %3836 = vmatprep.subr.mxu0 0.0
        %3837 = vmatpush1.msra.mxu0 0.0
        %3838 = vmatprep.subr.mxu0 0.0
        %3839 = vmatpush1.msra.mxu0 0.0
        %3840 = vmatprep.subr.mxu0 0.0
        %3841 = vmatpush1.msra.mxu0 0.0
        %3842 = vmatprep.subr.mxu0 0.0
        %3843 = vmatpush1.msra.mxu0 0.0
        %3844 = vmatprep.subr.mxu0 0.0
        %3845 = vmatpush1.msra.mxu0 0.0
        %3846 = vmatprep.subr.mxu0 0.0
        %3847 = vmatpush1.msra.mxu0 0.0
        %3848 = vmatprep.subr.mxu0 0.0
        %3849 = vmatpush1.msra.mxu0 0.0
        %3850 = vmatprep.subr.mxu0 0.0
        %3851 = vmatpush1.msra.mxu0 0.0
        %3852 = vmatprep.subr.mxu0 0.0
        %3853 = vmatpush1.msra.mxu0 0.0
        %3854 = vmatprep.subr.mxu0 0.0
        %3855 = vmatpush1.msra.mxu0 0.0
        %3856 = vmatprep.subr.mxu0 0.0
        %3857 = vmatpush1.msra.mxu0 0.0
        %3858 = vmatprep.subr.mxu0 0.0
        %3859 = vmatpush1.msra.mxu0 0.0
        %3860 = vmatprep.subr.mxu0 0.0
        %3861 = vmatpush1.msra.mxu0 0.0
        %3862 = vmatprep.subr.mxu0 0.0
        %3863 = vmatpush1.msra.mxu0 0.0
        %3864 = vmatprep.subr.mxu0 0.0
        %3865 = vmatpush1.msra.mxu0 0.0
        %3866 = vmatprep.subr.mxu0 0.0
        %3867 = vmatpush1.msra.mxu0 0.0
        %3868 = vmatprep.subr.mxu0 0.0
        %3869 = vmatpush1.msra.mxu0 0.0
        %3870 = vmatprep.subr.mxu0 0.0
        %3871 = vmatpush1.msra.mxu0 0.0
        %3872 = vmatprep.subr.mxu0 0.0
        %3873 = vmatpush1.msra.mxu0 0.0
        %3874 = vmatprep.subr.mxu0 0.0
        %3875 = vmatpush1.msra.mxu0 0.0
        %3876 = vmatprep.subr.mxu0 0.0
        %3877 = vmatpush1.msra.mxu0 0.0
        %3878 = vmatprep.subr.mxu0 0.0
        %3879 = vmatpush1.msra.mxu0 0.0
        %3880 = vmatprep.subr.mxu0 0.0
        %3881 = vmatpush1.msra.mxu0 0.0
        %3882 = vmatprep.subr.mxu0 0.0
        %3883 = vmatpush1.msra.mxu0 0.0
        %3884 = vmatprep.subr.mxu0 0.0
        %3885 = vmatpush1.msra.mxu0 0.0
        %3886 = vmatprep.subr.mxu0 0.0
        %3887 = vmatpush1.msra.mxu0 0.0
        %3888 = vmatprep.subr.mxu0 0.0
        %3889 = vmatpush1.msra.mxu0 0.0
        %3890 = vmatprep.subr.mxu0 0.0
        %3891 = vmatpush1.msra.mxu0 0.0
        %3892 = vmatprep.mubr.f32.mxu0 0.0
        %3893 = vmatmul.mubr.f32.gmra.mrb[0].mxu0 %v3823
        %v3894 = vpop.f32.mrb[0].mxu0
        %v3895 = vadd.f32 0.0, %v3894
        %v3896 = vpop.f32.mrb[0].mxu0
        %3897 = vmatprep.mubr.f32.mxu0 0.0
        %3898 = vmatmul.mubr.f32.gmra.mrb[0].mxu0 %v3826
        %v3899 = vpop.f32.mrb[0].mxu0
        %v3900 = vadd.f32 0.0, %v3899
        %v3901 = vpop.f32.mrb[0].mxu0
        %3902 = vdwg.mxu0
        %v3903 = vadd.f32 %v3815, %v3895
        %v3904 = vadd.f32 %v3816, %v3900
        %s3905 = scalar_lea.vmem %s3, 224
        %v3906 = vld [vmem:[%s3905] sm:$0xff]
        %v3907 = vld [vmem:[%s3905 + $0x8] sm:$0xff]
        %v3908 = vld [vmem:[%s3905 + $0x10] sm:$0xff]
        %v3909 = vld [vmem:[%s3905 + $0x18] sm:$0xff]
        %v3911 = vsel %vm2879, %v3126, 0
        %v3914 = vsel %vm2879, %v3127, 0
        %3916 = vmatprep.subr.mxu0 0.0
        %3917 = vmatpush1.msra.mxu0 %v3906
        %3918 = vmatprep.subr.mxu0 0.0
        %3919 = vmatpush1.msra.mxu0 %v3907
        %3920 = vmatprep.subr.mxu0 0.0
        %3921 = vmatpush1.msra.mxu0 %v3908
        %3922 = vmatprep.subr.mxu0 0.0
        %3923 = vmatpush1.msra.mxu0 %v3909
        %3924 = vmatprep.subr.mxu0 0.0
        %3925 = vmatpush1.msra.mxu0 0.0
        %3926 = vmatprep.subr.mxu0 0.0
        %3927 = vmatpush1.msra.mxu0 0.0
        %3928 = vmatprep.subr.mxu0 0.0
        %3929 = vmatpush1.msra.mxu0 0.0
        %3930 = vmatprep.subr.mxu0 0.0
        %3931 = vmatpush1.msra.mxu0 0.0
        %3932 = vmatprep.subr.mxu0 0.0
        %3933 = vmatpush1.msra.mxu0 0.0
        %3934 = vmatprep.subr.mxu0 0.0
        %3935 = vmatpush1.msra.mxu0 0.0
        %3936 = vmatprep.subr.mxu0 0.0
        %3937 = vmatpush1.msra.mxu0 0.0
        %3938 = vmatprep.subr.mxu0 0.0
        %3939 = vmatpush1.msra.mxu0 0.0
        %3940 = vmatprep.subr.mxu0 0.0
        %3941 = vmatpush1.msra.mxu0 0.0
        %3942 = vmatprep.subr.mxu0 0.0
        %3943 = vmatpush1.msra.mxu0 0.0
        %3944 = vmatprep.subr.mxu0 0.0
        %3945 = vmatpush1.msra.mxu0 0.0
        %3946 = vmatprep.subr.mxu0 0.0
        %3947 = vmatpush1.msra.mxu0 0.0
        %3948 = vmatprep.subr.mxu0 0.0
        %3949 = vmatpush1.msra.mxu0 0.0
        %3950 = vmatprep.subr.mxu0 0.0
        %3951 = vmatpush1.msra.mxu0 0.0
        %3952 = vmatprep.subr.mxu0 0.0
        %3953 = vmatpush1.msra.mxu0 0.0
        %3954 = vmatprep.subr.mxu0 0.0
        %3955 = vmatpush1.msra.mxu0 0.0
        %3956 = vmatprep.subr.mxu0 0.0
        %3957 = vmatpush1.msra.mxu0 0.0
        %3958 = vmatprep.subr.mxu0 0.0
        %3959 = vmatpush1.msra.mxu0 0.0
        %3960 = vmatprep.subr.mxu0 0.0
        %3961 = vmatpush1.msra.mxu0 0.0
        %3962 = vmatprep.subr.mxu0 0.0
        %3963 = vmatpush1.msra.mxu0 0.0
        %3964 = vmatprep.subr.mxu0 0.0
        %3965 = vmatpush1.msra.mxu0 0.0
        %3966 = vmatprep.subr.mxu0 0.0
        %3967 = vmatpush1.msra.mxu0 0.0
        %3968 = vmatprep.subr.mxu0 0.0
        %3969 = vmatpush1.msra.mxu0 0.0
        %3970 = vmatprep.subr.mxu0 0.0
        %3971 = vmatpush1.msra.mxu0 0.0
        %3972 = vmatprep.subr.mxu0 0.0
        %3973 = vmatpush1.msra.mxu0 0.0
        %3974 = vmatprep.subr.mxu0 0.0
        %3975 = vmatpush1.msra.mxu0 0.0
        %3976 = vmatprep.subr.mxu0 0.0
        %3977 = vmatpush1.msra.mxu0 0.0
        %3978 = vmatprep.subr.mxu0 0.0
        %3979 = vmatpush1.msra.mxu0 0.0
        %3980 = vmatprep.mubr.f32.mxu0 0.0
        %3981 = vmatmul.mubr.f32.gmra.mrb[0].mxu0 %v3911
        %v3982 = vpop.f32.mrb[0].mxu0
        %v3983 = vadd.f32 0.0, %v3982
        %v3984 = vpop.f32.mrb[0].mxu0
        %3985 = vmatprep.mubr.f32.mxu0 0.0
        %3986 = vmatmul.mubr.f32.gmra.mrb[0].mxu0 %v3914
        %v3987 = vpop.f32.mrb[0].mxu0
        %v3988 = vadd.f32 0.0, %v3987
        %v3989 = vpop.f32.mrb[0].mxu0
        %3990 = vdwg.mxu0
        %v3991 = vadd.f32 %v3903, %v3983
        %v3992 = vadd.f32 %v3904, %v3988
        %s3993 = scalar_lea.vmem %s3, 256
        %v3994 = vld [vmem:[%s3993] sm:$0xff]
        %v3995 = vld [vmem:[%s3993 + $0x8] sm:$0xff]
        %v3996 = vld [vmem:[%s3993 + $0x10] sm:$0xff]
        %v3997 = vld [vmem:[%s3993 + $0x18] sm:$0xff]
        %v3999 = vsel %vm2879, %v3206, 0
        %v4002 = vsel %vm2879, %v3207, 0
        %4004 = vmatprep.subr.mxu0 0.0
        %4005 = vmatpush1.msra.mxu0 %v3994
        %4006 = vmatprep.subr.mxu0 0.0
        %4007 = vmatpush1.msra.mxu0 %v3995
        %4008 = vmatprep.subr.mxu0 0.0
        %4009 = vmatpush1.msra.mxu0 %v3996
        %4010 = vmatprep.subr.mxu0 0.0
        %4011 = vmatpush1.msra.mxu0 %v3997
        %4012 = vmatprep.subr.mxu0 0.0
        %4013 = vmatpush1.msra.mxu0 0.0
        %4014 = vmatprep.subr.mxu0 0.0
        %4015 = vmatpush1.msra.mxu0 0.0
        %4016 = vmatprep.subr.mxu0 0.0
        %4017 = vmatpush1.msra.mxu0 0.0
        %4018 = vmatprep.subr.mxu0 0.0
        %4019 = vmatpush1.msra.mxu0 0.0
        %4020 = vmatprep.subr.mxu0 0.0
        %4021 = vmatpush1.msra.mxu0 0.0
        %4022 = vmatprep.subr.mxu0 0.0
        %4023 = vmatpush1.msra.mxu0 0.0
        %4024 = vmatprep.subr.mxu0 0.0
        %4025 = vmatpush1.msra.mxu0 0.0
        %4026 = vmatprep.subr.mxu0 0.0
        %4027 = vmatpush1.msra.mxu0 0.0
        %4028 = vmatprep.subr.mxu0 0.0
        %4029 = vmatpush1.msra.mxu0 0.0
        %4030 = vmatprep.subr.mxu0 0.0
        %4031 = vmatpush1.msra.mxu0 0.0
        %4032 = vmatprep.subr.mxu0 0.0
        %4033 = vmatpush1.msra.mxu0 0.0
        %4034 = vmatprep.subr.mxu0 0.0
        %4035 = vmatpush1.msra.mxu0 0.0
        %4036 = vmatprep.subr.mxu0 0.0
        %4037 = vmatpush1.msra.mxu0 0.0
        %4038 = vmatprep.subr.mxu0 0.0
        %4039 = vmatpush1.msra.mxu0 0.0
        %4040 = vmatprep.subr.mxu0 0.0
        %4041 = vmatpush1.msra.mxu0 0.0
        %4042 = vmatprep.subr.mxu0 0.0
        %4043 = vmatpush1.msra.mxu0 0.0
        %4044 = vmatprep.subr.mxu0 0.0
        %4045 = vmatpush1.msra.mxu0 0.0
        %4046 = vmatprep.subr.mxu0 0.0
        %4047 = vmatpush1.msra.mxu0 0.0
        %4048 = vmatprep.subr.mxu0 0.0
        %4049 = vmatpush1.msra.mxu0 0.0
        %4050 = vmatprep.subr.mxu0 0.0
        %4051 = vmatpush1.msra.mxu0 0.0
        %4052 = vmatprep.subr.mxu0 0.0
        %4053 = vmatpush1.msra.mxu0 0.0
        %4054 = vmatprep.subr.mxu0 0.0
        %4055 = vmatpush1.msra.mxu0 0.0
        %4056 = vmatprep.subr.mxu0 0.0
        %4057 = vmatpush1.msra.mxu0 0.0
        %4058 = vmatprep.subr.mxu0 0.0
        %4059 = vmatpush1.msra.mxu0 0.0
        %4060 = vmatprep.subr.mxu0 0.0
        %4061 = vmatpush1.msra.mxu0 0.0
        %4062 = vmatprep.subr.mxu0 0.0
        %4063 = vmatpush1.msra.mxu0 0.0
        %4064 = vmatprep.subr.mxu0 0.0
        %4065 = vmatpush1.msra.mxu0 0.0
        %4066 = vmatprep.subr.mxu0 0.0
        %4067 = vmatpush1.msra.mxu0 0.0
        %4068 = vmatprep.mubr.f32.mxu0 0.0
        %4069 = vmatmul.mubr.f32.gmra.mrb[0].mxu0 %v3999
        %v4070 = vpop.f32.mrb[0].mxu0
        %v4071 = vadd.f32 0.0, %v4070
        %v4072 = vpop.f32.mrb[0].mxu0
        %4073 = vmatprep.mubr.f32.mxu0 0.0
        %4074 = vmatmul.mubr.f32.gmra.mrb[0].mxu0 %v4002
        %v4075 = vpop.f32.mrb[0].mxu0
        %v4076 = vadd.f32 0.0, %v4075
        %v4077 = vpop.f32.mrb[0].mxu0
        %4078 = vdwg.mxu0
        %v4079 = vadd.f32 %v3991, %v4071
        %v4080 = vadd.f32 %v3992, %v4076
        %s4081 = scalar_lea.vmem %s3, 288
        %v4082 = vld [vmem:[%s4081] sm:$0xff]
        %v4083 = vld [vmem:[%s4081 + $0x8] sm:$0xff]
        %v4084 = vld [vmem:[%s4081 + $0x10] sm:$0xff]
        %v4085 = vld [vmem:[%s4081 + $0x18] sm:$0xff]
        %v4087 = vsel %vm2879, %v3286, 0
        %v4090 = vsel %vm2879, %v3287, 0
        %4092 = vmatprep.subr.mxu0 0.0
        %4093 = vmatpush1.msra.mxu0 %v4082
        %4094 = vmatprep.subr.mxu0 0.0
        %4095 = vmatpush1.msra.mxu0 %v4083
        %4096 = vmatprep.subr.mxu0 0.0
        %4097 = vmatpush1.msra.mxu0 %v4084
        %4098 = vmatprep.subr.mxu0 0.0
        %4099 = vmatpush1.msra.mxu0 %v4085
        %4100 = vmatprep.subr.mxu0 0.0
        %4101 = vmatpush1.msra.mxu0 0.0
        %4102 = vmatprep.subr.mxu0 0.0
        %4103 = vmatpush1.msra.mxu0 0.0
        %4104 = vmatprep.subr.mxu0 0.0
        %4105 = vmatpush1.msra.mxu0 0.0
        %4106 = vmatprep.subr.mxu0 0.0
        %4107 = vmatpush1.msra.mxu0 0.0
        %4108 = vmatprep.subr.mxu0 0.0
        %4109 = vmatpush1.msra.mxu0 0.0
        %4110 = vmatprep.subr.mxu0 0.0
        %4111 = vmatpush1.msra.mxu0 0.0
        %4112 = vmatprep.subr.mxu0 0.0
        %4113 = vmatpush1.msra.mxu0 0.0
        %4114 = vmatprep.subr.mxu0 0.0
        %4115 = vmatpush1.msra.mxu0 0.0
        %4116 = vmatprep.subr.mxu0 0.0
        %4117 = vmatpush1.msra.mxu0 0.0
        %4118 = vmatprep.subr.mxu0 0.0
        %4119 = vmatpush1.msra.mxu0 0.0
        %4120 = vmatprep.subr.mxu0 0.0
        %4121 = vmatpush1.msra.mxu0 0.0
        %4122 = vmatprep.subr.mxu0 0.0
        %4123 = vmatpush1.msra.mxu0 0.0
        %4124 = vmatprep.subr.mxu0 0.0
        %4125 = vmatpush1.msra.mxu0 0.0
        %4126 = vmatprep.subr.mxu0 0.0
        %4127 = vmatpush1.msra.mxu0 0.0
        %4128 = vmatprep.subr.mxu0 0.0
        %4129 = vmatpush1.msra.mxu0 0.0
        %4130 = vmatprep.subr.mxu0 0.0
        %4131 = vmatpush1.msra.mxu0 0.0
        %4132 = vmatprep.subr.mxu0 0.0
        %4133 = vmatpush1.msra.mxu0 0.0
        %4134 = vmatprep.subr.mxu0 0.0
        %4135 = vmatpush1.msra.mxu0 0.0
        %4136 = vmatprep.subr.mxu0 0.0
        %4137 = vmatpush1.msra.mxu0 0.0
        %4138 = vmatprep.subr.mxu0 0.0
        %4139 = vmatpush1.msra.mxu0 0.0
        %4140 = vmatprep.subr.mxu0 0.0
        %4141 = vmatpush1.msra.mxu0 0.0
        %4142 = vmatprep.subr.mxu0 0.0
        %4143 = vmatpush1.msra.mxu0 0.0
        %4144 = vmatprep.subr.mxu0 0.0
        %4145 = vmatpush1.msra.mxu0 0.0
        %4146 = vmatprep.subr.mxu0 0.0
        %4147 = vmatpush1.msra.mxu0 0.0
        %4148 = vmatprep.subr.mxu0 0.0
        %4149 = vmatpush1.msra.mxu0 0.0
        %4150 = vmatprep.subr.mxu0 0.0
        %4151 = vmatpush1.msra.mxu0 0.0
        %4152 = vmatprep.subr.mxu0 0.0
        %4153 = vmatpush1.msra.mxu0 0.0
        %4154 = vmatprep.subr.mxu0 0.0
        %4155 = vmatpush1.msra.mxu0 0.0
        %4156 = vmatprep.mubr.f32.mxu0 0.0
        %4157 = vmatmul.mubr.f32.gmra.mrb[0].mxu0 %v4087
        %v4158 = vpop.f32.mrb[0].mxu0
        %v4159 = vadd.f32 0.0, %v4158
        %v4160 = vpop.f32.mrb[0].mxu0
        %4161 = vmatprep.mubr.f32.mxu0 0.0
        %4162 = vmatmul.mubr.f32.gmra.mrb[0].mxu0 %v4090
        %v4163 = vpop.f32.mrb[0].mxu0
        %v4164 = vadd.f32 0.0, %v4163
        %v4165 = vpop.f32.mrb[0].mxu0
        %4166 = vdwg.mxu0
        %v4167 = vadd.f32 %v4079, %v4159
        %v4168 = vadd.f32 %v4080, %v4164
        %s4169 = scalar_lea.vmem %s3, 320
        %v4170 = vld [vmem:[%s4169] sm:$0xff]
        %v4171 = vld [vmem:[%s4169 + $0x8] sm:$0xff]
        %v4172 = vld [vmem:[%s4169 + $0x10] sm:$0xff]
        %v4173 = vld [vmem:[%s4169 + $0x18] sm:$0xff]
        %v4175 = vsel %vm2879, %v2968, 0
        %v4178 = vsel %vm2879, %v2969, 0
        %4180 = vmatprep.subr.mxu0 0.0
        %4181 = vmatpush1.msra.mxu0 %v4170
        %4182 = vmatprep.subr.mxu0 0.0
        %4183 = vmatpush1.msra.mxu0 %v4171
        %4184 = vmatprep.subr.mxu0 0.0
        %4185 = vmatpush1.msra.mxu0 %v4172
        %4186 = vmatprep.subr.mxu0 0.0
        %4187 = vmatpush1.msra.mxu0 %v4173
        %4188 = vmatprep.subr.mxu0 0.0
        %4189 = vmatpush1.msra.mxu0 0.0
        %4190 = vmatprep.subr.mxu0 0.0
        %4191 = vmatpush1.msra.mxu0 0.0
        %4192 = vmatprep.subr.mxu0 0.0
        %4193 = vmatpush1.msra.mxu0 0.0
        %4194 = vmatprep.subr.mxu0 0.0
        %4195 = vmatpush1.msra.mxu0 0.0
        %4196 = vmatprep.subr.mxu0 0.0
        %4197 = vmatpush1.msra.mxu0 0.0
        %4198 = vmatprep.subr.mxu0 0.0
        %4199 = vmatpush1.msra.mxu0 0.0
        %4200 = vmatprep.subr.mxu0 0.0
        %4201 = vmatpush1.msra.mxu0 0.0
        %4202 = vmatprep.subr.mxu0 0.0
        %4203 = vmatpush1.msra.mxu0 0.0
        %4204 = vmatprep.subr.mxu0 0.0
        %4205 = vmatpush1.msra.mxu0 0.0
        %4206 = vmatprep.subr.mxu0 0.0
        %4207 = vmatpush1.msra.mxu0 0.0
        %4208 = vmatprep.subr.mxu0 0.0
        %4209 = vmatpush1.msra.mxu0 0.0
        %4210 = vmatprep.subr.mxu0 0.0
        %4211 = vmatpush1.msra.mxu0 0.0
        %4212 = vmatprep.subr.mxu0 0.0
        %4213 = vmatpush1.msra.mxu0 0.0
        %4214 = vmatprep.subr.mxu0 0.0
        %4215 = vmatpush1.msra.mxu0 0.0
        %4216 = vmatprep.subr.mxu0 0.0
        %4217 = vmatpush1.msra.mxu0 0.0
        %4218 = vmatprep.subr.mxu0 0.0
        %4219 = vmatpush1.msra.mxu0 0.0
        %4220 = vmatprep.subr.mxu0 0.0
        %4221 = vmatpush1.msra.mxu0 0.0
        %4222 = vmatprep.subr.mxu0 0.0
        %4223 = vmatpush1.msra.mxu0 0.0
        %4224 = vmatprep.subr.mxu0 0.0
        %4225 = vmatpush1.msra.mxu0 0.0
        %4226 = vmatprep.subr.mxu0 0.0
        %4227 = vmatpush1.msra.mxu0 0.0
        %4228 = vmatprep.subr.mxu0 0.0
        %4229 = vmatpush1.msra.mxu0 0.0
        %4230 = vmatprep.subr.mxu0 0.0
        %4231 = vmatpush1.msra.mxu0 0.0
        %4232 = vmatprep.subr.mxu0 0.0
        %4233 = vmatpush1.msra.mxu0 0.0
        %4234 = vmatprep.subr.mxu0 0.0
        %4235 = vmatpush1.msra.mxu0 0.0
        %4236 = vmatprep.subr.mxu0 0.0
        %4237 = vmatpush1.msra.mxu0 0.0
        %4238 = vmatprep.subr.mxu0 0.0
        %4239 = vmatpush1.msra.mxu0 0.0
        %4240 = vmatprep.subr.mxu0 0.0
        %4241 = vmatpush1.msra.mxu0 0.0
        %4242 = vmatprep.subr.mxu0 0.0
        %4243 = vmatpush1.msra.mxu0 0.0
        %4244 = vmatprep.mubr.f32.mxu0 0.0
        %4245 = vmatmul.mubr.f32.gmra.mrb[0].mxu0 %v4175
        %v4246 = vpop.f32.mrb[0].mxu0
        %v4247 = vadd.f32 0.0, %v4246
        %v4248 = vpop.f32.mrb[0].mxu0
        %4249 = vmatprep.mubr.f32.mxu0 0.0
        %4250 = vmatmul.mubr.f32.gmra.mrb[0].mxu0 %v4178
        %v4251 = vpop.f32.mrb[0].mxu0
        %v4252 = vadd.f32 0.0, %v4251
        %v4253 = vpop.f32.mrb[0].mxu0
        %4254 = vdwg.mxu0
        %v4255 = vadd.f32 %v4167, %v4247
        %v4256 = vadd.f32 %v4168, %v4252
        %s4257 = scalar_lea.vmem %s3, 352
        %v4258 = vld [vmem:[%s4257] sm:$0xff]
        %v4259 = vld [vmem:[%s4257 + $0x8] sm:$0xff]
        %v4260 = vld [vmem:[%s4257 + $0x10] sm:$0xff]
        %v4261 = vld [vmem:[%s4257 + $0x18] sm:$0xff]
        %v4263 = vsel %vm2879, %v3048, 0
        %v4266 = vsel %vm2879, %v3049, 0
        %4268 = vmatprep.subr.mxu0 0.0
        %4269 = vmatpush1.msra.mxu0 %v4258
        %4270 = vmatprep.subr.mxu0 0.0
        %4271 = vmatpush1.msra.mxu0 %v4259
        %4272 = vmatprep.subr.mxu0 0.0
        %4273 = vmatpush1.msra.mxu0 %v4260
        %4274 = vmatprep.subr.mxu0 0.0
        %4275 = vmatpush1.msra.mxu0 %v4261
        %4276 = vmatprep.subr.mxu0 0.0
        %4277 = vmatpush1.msra.mxu0 0.0
        %4278 = vmatprep.subr.mxu0 0.0
        %4279 = vmatpush1.msra.mxu0 0.0
        %4280 = vmatprep.subr.mxu0 0.0
        %4281 = vmatpush1.msra.mxu0 0.0
        %4282 = vmatprep.subr.mxu0 0.0
        %4283 = vmatpush1.msra.mxu0 0.0
        %4284 = vmatprep.subr.mxu0 0.0
        %4285 = vmatpush1.msra.mxu0 0.0
        %4286 = vmatprep.subr.mxu0 0.0
        %4287 = vmatpush1.msra.mxu0 0.0
        %4288 = vmatprep.subr.mxu0 0.0
        %4289 = vmatpush1.msra.mxu0 0.0
        %4290 = vmatprep.subr.mxu0 0.0
        %4291 = vmatpush1.msra.mxu0 0.0
        %4292 = vmatprep.subr.mxu0 0.0
        %4293 = vmatpush1.msra.mxu0 0.0
        %4294 = vmatprep.subr.mxu0 0.0
        %4295 = vmatpush1.msra.mxu0 0.0
        %4296 = vmatprep.subr.mxu0 0.0
        %4297 = vmatpush1.msra.mxu0 0.0
        %4298 = vmatprep.subr.mxu0 0.0
        %4299 = vmatpush1.msra.mxu0 0.0
        %4300 = vmatprep.subr.mxu0 0.0
        %4301 = vmatpush1.msra.mxu0 0.0
        %4302 = vmatprep.subr.mxu0 0.0
        %4303 = vmatpush1.msra.mxu0 0.0
        %4304 = vmatprep.subr.mxu0 0.0
        %4305 = vmatpush1.msra.mxu0 0.0
        %4306 = vmatprep.subr.mxu0 0.0
        %4307 = vmatpush1.msra.mxu0 0.0
        %4308 = vmatprep.subr.mxu0 0.0
        %4309 = vmatpush1.msra.mxu0 0.0
        %4310 = vmatprep.subr.mxu0 0.0
        %4311 = vmatpush1.msra.mxu0 0.0
        %4312 = vmatprep.subr.mxu0 0.0
        %4313 = vmatpush1.msra.mxu0 0.0
        %4314 = vmatprep.subr.mxu0 0.0
        %4315 = vmatpush1.msra.mxu0 0.0
        %4316 = vmatprep.subr.mxu0 0.0
        %4317 = vmatpush1.msra.mxu0 0.0
        %4318 = vmatprep.subr.mxu0 0.0
        %4319 = vmatpush1.msra.mxu0 0.0
        %4320 = vmatprep.subr.mxu0 0.0
        %4321 = vmatpush1.msra.mxu0 0.0
        %4322 = vmatprep.subr.mxu0 0.0
        %4323 = vmatpush1.msra.mxu0 0.0
        %4324 = vmatprep.subr.mxu0 0.0
        %4325 = vmatpush1.msra.mxu0 0.0
        %4326 = vmatprep.subr.mxu0 0.0
        %4327 = vmatpush1.msra.mxu0 0.0
        %4328 = vmatprep.subr.mxu0 0.0
        %4329 = vmatpush1.msra.mxu0 0.0
        %4330 = vmatprep.subr.mxu0 0.0
        %4331 = vmatpush1.msra.mxu0 0.0
        %4332 = vmatprep.mubr.f32.mxu0 0.0
        %4333 = vmatmul.mubr.f32.gmra.mrb[0].mxu0 %v4263
        %v4334 = vpop.f32.mrb[0].mxu0
        %v4335 = vadd.f32 0.0, %v4334
        %v4336 = vpop.f32.mrb[0].mxu0
        %4337 = vmatprep.mubr.f32.mxu0 0.0
        %4338 = vmatmul.mubr.f32.gmra.mrb[0].mxu0 %v4266
        %v4339 = vpop.f32.mrb[0].mxu0
        %v4340 = vadd.f32 0.0, %v4339
        %v4341 = vpop.f32.mrb[0].mxu0
        %4342 = vdwg.mxu0
        %v4343 = vadd.f32 %v4255, %v4335
        %v4344 = vadd.f32 %v4256, %v4340
        %s4345 = scalar_lea.vmem %s3, 384
        %v4346 = vld [vmem:[%s4345] sm:$0xff]
        %v4347 = vld [vmem:[%s4345 + $0x8] sm:$0xff]
        %v4348 = vld [vmem:[%s4345 + $0x10] sm:$0xff]
        %v4349 = vld [vmem:[%s4345 + $0x18] sm:$0xff]
        %v4351 = vsel %vm2879, %v3128, 0
        %v4354 = vsel %vm2879, %v3129, 0
        %4356 = vmatprep.subr.mxu0 0.0
        %4357 = vmatpush1.msra.mxu0 %v4346
        %4358 = vmatprep.subr.mxu0 0.0
        %4359 = vmatpush1.msra.mxu0 %v4347
        %4360 = vmatprep.subr.mxu0 0.0
        %4361 = vmatpush1.msra.mxu0 %v4348
        %4362 = vmatprep.subr.mxu0 0.0
        %4363 = vmatpush1.msra.mxu0 %v4349
        %4364 = vmatprep.subr.mxu0 0.0
        %4365 = vmatpush1.msra.mxu0 0.0
        %4366 = vmatprep.subr.mxu0 0.0
        %4367 = vmatpush1.msra.mxu0 0.0
        %4368 = vmatprep.subr.mxu0 0.0
        %4369 = vmatpush1.msra.mxu0 0.0
        %4370 = vmatprep.subr.mxu0 0.0
        %4371 = vmatpush1.msra.mxu0 0.0
        %4372 = vmatprep.subr.mxu0 0.0
        %4373 = vmatpush1.msra.mxu0 0.0
        %4374 = vmatprep.subr.mxu0 0.0
        %4375 = vmatpush1.msra.mxu0 0.0
        %4376 = vmatprep.subr.mxu0 0.0
        %4377 = vmatpush1.msra.mxu0 0.0
        %4378 = vmatprep.subr.mxu0 0.0
        %4379 = vmatpush1.msra.mxu0 0.0
        %4380 = vmatprep.subr.mxu0 0.0
        %4381 = vmatpush1.msra.mxu0 0.0
        %4382 = vmatprep.subr.mxu0 0.0
        %4383 = vmatpush1.msra.mxu0 0.0
        %4384 = vmatprep.subr.mxu0 0.0
        %4385 = vmatpush1.msra.mxu0 0.0
        %4386 = vmatprep.subr.mxu0 0.0
        %4387 = vmatpush1.msra.mxu0 0.0
        %4388 = vmatprep.subr.mxu0 0.0
        %4389 = vmatpush1.msra.mxu0 0.0
        %4390 = vmatprep.subr.mxu0 0.0
        %4391 = vmatpush1.msra.mxu0 0.0
        %4392 = vmatprep.subr.mxu0 0.0
        %4393 = vmatpush1.msra.mxu0 0.0
        %4394 = vmatprep.subr.mxu0 0.0
        %4395 = vmatpush1.msra.mxu0 0.0
        %4396 = vmatprep.subr.mxu0 0.0
        %4397 = vmatpush1.msra.mxu0 0.0
        %4398 = vmatprep.subr.mxu0 0.0
        %4399 = vmatpush1.msra.mxu0 0.0
        %4400 = vmatprep.subr.mxu0 0.0
        %4401 = vmatpush1.msra.mxu0 0.0
        %4402 = vmatprep.subr.mxu0 0.0
        %4403 = vmatpush1.msra.mxu0 0.0
        %4404 = vmatprep.subr.mxu0 0.0
        %4405 = vmatpush1.msra.mxu0 0.0
        %4406 = vmatprep.subr.mxu0 0.0
        %4407 = vmatpush1.msra.mxu0 0.0
        %4408 = vmatprep.subr.mxu0 0.0
        %4409 = vmatpush1.msra.mxu0 0.0
        %4410 = vmatprep.subr.mxu0 0.0
        %4411 = vmatpush1.msra.mxu0 0.0
        %4412 = vmatprep.subr.mxu0 0.0
        %4413 = vmatpush1.msra.mxu0 0.0
        %4414 = vmatprep.subr.mxu0 0.0
        %4415 = vmatpush1.msra.mxu0 0.0
        %4416 = vmatprep.subr.mxu0 0.0
        %4417 = vmatpush1.msra.mxu0 0.0
        %4418 = vmatprep.subr.mxu0 0.0
        %4419 = vmatpush1.msra.mxu0 0.0
        %4420 = vmatprep.mubr.f32.mxu0 0.0
        %4421 = vmatmul.mubr.f32.gmra.mrb[0].mxu0 %v4351
        %v4422 = vpop.f32.mrb[0].mxu0
        %v4423 = vadd.f32 0.0, %v4422
        %v4424 = vpop.f32.mrb[0].mxu0
        %4425 = vmatprep.mubr.f32.mxu0 0.0
        %4426 = vmatmul.mubr.f32.gmra.mrb[0].mxu0 %v4354
        %v4427 = vpop.f32.mrb[0].mxu0
        %v4428 = vadd.f32 0.0, %v4427
        %v4429 = vpop.f32.mrb[0].mxu0
        %4430 = vdwg.mxu0
        %v4431 = vadd.f32 %v4343, %v4423
        %v4432 = vadd.f32 %v4344, %v4428
        %s4433 = scalar_lea.vmem %s3, 416
        %v4434 = vld [vmem:[%s4433] sm:$0xff]
        %v4435 = vld [vmem:[%s4433 + $0x8] sm:$0xff]
        %v4436 = vld [vmem:[%s4433 + $0x10] sm:$0xff]
        %v4437 = vld [vmem:[%s4433 + $0x18] sm:$0xff]
        %v4439 = vsel %vm2879, %v3208, 0
        %v4442 = vsel %vm2879, %v3209, 0
        %4444 = vmatprep.subr.mxu0 0.0
        %4445 = vmatpush1.msra.mxu0 %v4434
        %4446 = vmatprep.subr.mxu0 0.0
        %4447 = vmatpush1.msra.mxu0 %v4435
        %4448 = vmatprep.subr.mxu0 0.0
        %4449 = vmatpush1.msra.mxu0 %v4436
        %4450 = vmatprep.subr.mxu0 0.0
        %4451 = vmatpush1.msra.mxu0 %v4437
        %4452 = vmatprep.subr.mxu0 0.0
        %4453 = vmatpush1.msra.mxu0 0.0
        %4454 = vmatprep.subr.mxu0 0.0
        %4455 = vmatpush1.msra.mxu0 0.0
        %4456 = vmatprep.subr.mxu0 0.0
        %4457 = vmatpush1.msra.mxu0 0.0
        %4458 = vmatprep.subr.mxu0 0.0
        %4459 = vmatpush1.msra.mxu0 0.0
        %4460 = vmatprep.subr.mxu0 0.0
        %4461 = vmatpush1.msra.mxu0 0.0
        %4462 = vmatprep.subr.mxu0 0.0
        %4463 = vmatpush1.msra.mxu0 0.0
        %4464 = vmatprep.subr.mxu0 0.0
        %4465 = vmatpush1.msra.mxu0 0.0
        %4466 = vmatprep.subr.mxu0 0.0
        %4467 = vmatpush1.msra.mxu0 0.0
        %4468 = vmatprep.subr.mxu0 0.0
        %4469 = vmatpush1.msra.mxu0 0.0
        %4470 = vmatprep.subr.mxu0 0.0
        %4471 = vmatpush1.msra.mxu0 0.0
        %4472 = vmatprep.subr.mxu0 0.0
        %4473 = vmatpush1.msra.mxu0 0.0
        %4474 = vmatprep.subr.mxu0 0.0
        %4475 = vmatpush1.msra.mxu0 0.0
        %4476 = vmatprep.subr.mxu0 0.0
        %4477 = vmatpush1.msra.mxu0 0.0
        %4478 = vmatprep.subr.mxu0 0.0
        %4479 = vmatpush1.msra.mxu0 0.0
        %4480 = vmatprep.subr.mxu0 0.0
        %4481 = vmatpush1.msra.mxu0 0.0
        %4482 = vmatprep.subr.mxu0 0.0
        %4483 = vmatpush1.msra.mxu0 0.0
        %4484 = vmatprep.subr.mxu0 0.0
        %4485 = vmatpush1.msra.mxu0 0.0
        %4486 = vmatprep.subr.mxu0 0.0
        %4487 = vmatpush1.msra.mxu0 0.0
        %4488 = vmatprep.subr.mxu0 0.0
        %4489 = vmatpush1.msra.mxu0 0.0
        %4490 = vmatprep.subr.mxu0 0.0
        %4491 = vmatpush1.msra.mxu0 0.0
        %4492 = vmatprep.subr.mxu0 0.0
        %4493 = vmatpush1.msra.mxu0 0.0
        %4494 = vmatprep.subr.mxu0 0.0
        %4495 = vmatpush1.msra.mxu0 0.0
        %4496 = vmatprep.subr.mxu0 0.0
        %4497 = vmatpush1.msra.mxu0 0.0
        %4498 = vmatprep.subr.mxu0 0.0
        %4499 = vmatpush1.msra.mxu0 0.0
        %4500 = vmatprep.subr.mxu0 0.0
        %4501 = vmatpush1.msra.mxu0 0.0
        %4502 = vmatprep.subr.mxu0 0.0
        %4503 = vmatpush1.msra.mxu0 0.0
        %4504 = vmatprep.subr.mxu0 0.0
        %4505 = vmatpush1.msra.mxu0 0.0
        %4506 = vmatprep.subr.mxu0 0.0
        %4507 = vmatpush1.msra.mxu0 0.0
        %4508 = vmatprep.mubr.f32.mxu0 0.0
        %4509 = vmatmul.mubr.f32.gmra.mrb[0].mxu0 %v4439
        %v4510 = vpop.f32.mrb[0].mxu0
        %v4511 = vadd.f32 0.0, %v4510
        %v4512 = vpop.f32.mrb[0].mxu0
        %4513 = vmatprep.mubr.f32.mxu0 0.0
        %4514 = vmatmul.mubr.f32.gmra.mrb[0].mxu0 %v4442
        %v4515 = vpop.f32.mrb[0].mxu0
        %v4516 = vadd.f32 0.0, %v4515
        %v4517 = vpop.f32.mrb[0].mxu0
        %4518 = vdwg.mxu0
        %v4519 = vadd.f32 %v4431, %v4511
        %v4520 = vadd.f32 %v4432, %v4516
        %s4521 = scalar_lea.vmem %s3, 448
        %v4522 = vld [vmem:[%s4521] sm:$0xff]
        %v4523 = vld [vmem:[%s4521 + $0x8] sm:$0xff]
        %v4524 = vld [vmem:[%s4521 + $0x10] sm:$0xff]
        %v4525 = vld [vmem:[%s4521 + $0x18] sm:$0xff]
        %v4527 = vsel %vm2879, %v3288, 0
        %v4530 = vsel %vm2879, %v3289, 0
        %4532 = vmatprep.subr.mxu0 0.0
        %4533 = vmatpush1.msra.mxu0 %v4522
        %4534 = vmatprep.subr.mxu0 0.0
        %4535 = vmatpush1.msra.mxu0 %v4523
        %4536 = vmatprep.subr.mxu0 0.0
        %4537 = vmatpush1.msra.mxu0 %v4524
        %4538 = vmatprep.subr.mxu0 0.0
        %4539 = vmatpush1.msra.mxu0 %v4525
        %4540 = vmatprep.subr.mxu0 0.0
        %4541 = vmatpush1.msra.mxu0 0.0
        %4542 = vmatprep.subr.mxu0 0.0
        %4543 = vmatpush1.msra.mxu0 0.0
        %4544 = vmatprep.subr.mxu0 0.0
        %4545 = vmatpush1.msra.mxu0 0.0
        %4546 = vmatprep.subr.mxu0 0.0
        %4547 = vmatpush1.msra.mxu0 0.0
        %4548 = vmatprep.subr.mxu0 0.0
        %4549 = vmatpush1.msra.mxu0 0.0
        %4550 = vmatprep.subr.mxu0 0.0
        %4551 = vmatpush1.msra.mxu0 0.0
        %4552 = vmatprep.subr.mxu0 0.0
        %4553 = vmatpush1.msra.mxu0 0.0
        %4554 = vmatprep.subr.mxu0 0.0
        %4555 = vmatpush1.msra.mxu0 0.0
        %4556 = vmatprep.subr.mxu0 0.0
        %4557 = vmatpush1.msra.mxu0 0.0
        %4558 = vmatprep.subr.mxu0 0.0
        %4559 = vmatpush1.msra.mxu0 0.0
        %4560 = vmatprep.subr.mxu0 0.0
        %4561 = vmatpush1.msra.mxu0 0.0
        %4562 = vmatprep.subr.mxu0 0.0
        %4563 = vmatpush1.msra.mxu0 0.0
        %4564 = vmatprep.subr.mxu0 0.0
        %4565 = vmatpush1.msra.mxu0 0.0
        %4566 = vmatprep.subr.mxu0 0.0
        %4567 = vmatpush1.msra.mxu0 0.0
        %4568 = vmatprep.subr.mxu0 0.0
        %4569 = vmatpush1.msra.mxu0 0.0
        %4570 = vmatprep.subr.mxu0 0.0
        %4571 = vmatpush1.msra.mxu0 0.0
        %4572 = vmatprep.subr.mxu0 0.0
        %4573 = vmatpush1.msra.mxu0 0.0
        %4574 = vmatprep.subr.mxu0 0.0
        %4575 = vmatpush1.msra.mxu0 0.0
        %4576 = vmatprep.subr.mxu0 0.0
        %4577 = vmatpush1.msra.mxu0 0.0
        %4578 = vmatprep.subr.mxu0 0.0
        %4579 = vmatpush1.msra.mxu0 0.0
        %4580 = vmatprep.subr.mxu0 0.0
        %4581 = vmatpush1.msra.mxu0 0.0
        %4582 = vmatprep.subr.mxu0 0.0
        %4583 = vmatpush1.msra.mxu0 0.0
        %4584 = vmatprep.subr.mxu0 0.0
        %4585 = vmatpush1.msra.mxu0 0.0
        %4586 = vmatprep.subr.mxu0 0.0
        %4587 = vmatpush1.msra.mxu0 0.0
        %4588 = vmatprep.subr.mxu0 0.0
        %4589 = vmatpush1.msra.mxu0 0.0
        %4590 = vmatprep.subr.mxu0 0.0
        %4591 = vmatpush1.msra.mxu0 0.0
        %4592 = vmatprep.subr.mxu0 0.0
        %4593 = vmatpush1.msra.mxu0 0.0
        %4594 = vmatprep.subr.mxu0 0.0
        %4595 = vmatpush1.msra.mxu0 0.0
        %4596 = vmatprep.mubr.f32.mxu0 0.0
        %4597 = vmatmul.mubr.f32.gmra.mrb[0].mxu0 %v4527
        %v4598 = vpop.f32.mrb[0].mxu0
        %v4599 = vadd.f32 0.0, %v4598
        %v4600 = vpop.f32.mrb[0].mxu0
        %4601 = vmatprep.mubr.f32.mxu0 0.0
        %4602 = vmatmul.mubr.f32.gmra.mrb[0].mxu0 %v4530
        %v4603 = vpop.f32.mrb[0].mxu0
        %v4604 = vadd.f32 0.0, %v4603
        %v4605 = vpop.f32.mrb[0].mxu0
        %4606 = vdwg.mxu0
        %v4607 = vadd.f32 %v4519, %v4599
        %v4608 = vadd.f32 %v4520, %v4604
        %s4609 = scalar_lea.vmem %s3, 480
        %v4610 = vld [vmem:[%s4609] sm:$0xff]
        %v4611 = vld [vmem:[%s4609 + $0x8] sm:$0xff]
        %v4612 = vld [vmem:[%s4609 + $0x10] sm:$0xff]
        %v4613 = vld [vmem:[%s4609 + $0x18] sm:$0xff]
        %v4615 = vsel %vm2879, %v2970, 0
        %v4618 = vsel %vm2879, %v2971, 0
        %4620 = vmatprep.subr.mxu0 0.0
        %4621 = vmatpush1.msra.mxu0 %v4610
        %4622 = vmatprep.subr.mxu0 0.0
        %4623 = vmatpush1.msra.mxu0 %v4611
        %4624 = vmatprep.subr.mxu0 0.0
        %4625 = vmatpush1.msra.mxu0 %v4612
        %4626 = vmatprep.subr.mxu0 0.0
        %4627 = vmatpush1.msra.mxu0 %v4613
        %4628 = vmatprep.subr.mxu0 0.0
        %4629 = vmatpush1.msra.mxu0 0.0
        %4630 = vmatprep.subr.mxu0 0.0
        %4631 = vmatpush1.msra.mxu0 0.0
        %4632 = vmatprep.subr.mxu0 0.0
        %4633 = vmatpush1.msra.mxu0 0.0
        %4634 = vmatprep.subr.mxu0 0.0
        %4635 = vmatpush1.msra.mxu0 0.0
        %4636 = vmatprep.subr.mxu0 0.0
        %4637 = vmatpush1.msra.mxu0 0.0
        %4638 = vmatprep.subr.mxu0 0.0
        %4639 = vmatpush1.msra.mxu0 0.0
        %4640 = vmatprep.subr.mxu0 0.0
        %4641 = vmatpush1.msra.mxu0 0.0
        %4642 = vmatprep.subr.mxu0 0.0
        %4643 = vmatpush1.msra.mxu0 0.0
        %4644 = vmatprep.subr.mxu0 0.0
        %4645 = vmatpush1.msra.mxu0 0.0
        %4646 = vmatprep.subr.mxu0 0.0
        %4647 = vmatpush1.msra.mxu0 0.0
        %4648 = vmatprep.subr.mxu0 0.0
        %4649 = vmatpush1.msra.mxu0 0.0
        %4650 = vmatprep.subr.mxu0 0.0
        %4651 = vmatpush1.msra.mxu0 0.0
        %4652 = vmatprep.subr.mxu0 0.0
        %4653 = vmatpush1.msra.mxu0 0.0
        %4654 = vmatprep.subr.mxu0 0.0
        %4655 = vmatpush1.msra.mxu0 0.0
        %4656 = vmatprep.subr.mxu0 0.0
        %4657 = vmatpush1.msra.mxu0 0.0
        %4658 = vmatprep.subr.mxu0 0.0
        %4659 = vmatpush1.msra.mxu0 0.0
        %4660 = vmatprep.subr.mxu0 0.0
        %4661 = vmatpush1.msra.mxu0 0.0
        %4662 = vmatprep.subr.mxu0 0.0
        %4663 = vmatpush1.msra.mxu0 0.0
        %4664 = vmatprep.subr.mxu0 0.0
        %4665 = vmatpush1.msra.mxu0 0.0
        %4666 = vmatprep.subr.mxu0 0.0
        %4667 = vmatpush1.msra.mxu0 0.0
        %4668 = vmatprep.subr.mxu0 0.0
        %4669 = vmatpush1.msra.mxu0 0.0
        %4670 = vmatprep.subr.mxu0 0.0
        %4671 = vmatpush1.msra.mxu0 0.0
        %4672 = vmatprep.subr.mxu0 0.0
        %4673 = vmatpush1.msra.mxu0 0.0
        %4674 = vmatprep.subr.mxu0 0.0
        %4675 = vmatpush1.msra.mxu0 0.0
        %4676 = vmatprep.subr.mxu0 0.0
        %4677 = vmatpush1.msra.mxu0 0.0
        %4678 = vmatprep.subr.mxu0 0.0
        %4679 = vmatpush1.msra.mxu0 0.0
        %4680 = vmatprep.subr.mxu0 0.0
        %4681 = vmatpush1.msra.mxu0 0.0
        %4682 = vmatprep.subr.mxu0 0.0
        %4683 = vmatpush1.msra.mxu0 0.0
        %4684 = vmatprep.mubr.f32.mxu0 0.0
        %4685 = vmatmul.mubr.f32.gmra.mrb[0].mxu0 %v4615
        %v4686 = vpop.f32.mrb[0].mxu0
        %v4687 = vadd.f32 0.0, %v4686
        %v4688 = vpop.f32.mrb[0].mxu0
        %4689 = vmatprep.mubr.f32.mxu0 0.0
        %4690 = vmatmul.mubr.f32.gmra.mrb[0].mxu0 %v4618
        %v4691 = vpop.f32.mrb[0].mxu0
        %v4692 = vadd.f32 0.0, %v4691
        %v4693 = vpop.f32.mrb[0].mxu0
        %4694 = vdwg.mxu0
        %v4695 = vadd.f32 %v4607, %v4687
        %v4696 = vadd.f32 %v4608, %v4692
        %s4697 = scalar_lea.vmem %s3, 512
        %v4698 = vld [vmem:[%s4697] sm:$0xff]
        %v4699 = vld [vmem:[%s4697 + $0x8] sm:$0xff]
        %v4700 = vld [vmem:[%s4697 + $0x10] sm:$0xff]
        %v4701 = vld [vmem:[%s4697 + $0x18] sm:$0xff]
        %v4703 = vsel %vm2879, %v3050, 0
        %v4706 = vsel %vm2879, %v3051, 0
        %4708 = vmatprep.subr.mxu0 0.0
        %4709 = vmatpush1.msra.mxu0 %v4698
        %4710 = vmatprep.subr.mxu0 0.0
        %4711 = vmatpush1.msra.mxu0 %v4699
        %4712 = vmatprep.subr.mxu0 0.0
        %4713 = vmatpush1.msra.mxu0 %v4700
        %4714 = vmatprep.subr.mxu0 0.0
        %4715 = vmatpush1.msra.mxu0 %v4701
        %4716 = vmatprep.subr.mxu0 0.0
        %4717 = vmatpush1.msra.mxu0 0.0
        %4718 = vmatprep.subr.mxu0 0.0
        %4719 = vmatpush1.msra.mxu0 0.0
        %4720 = vmatprep.subr.mxu0 0.0
        %4721 = vmatpush1.msra.mxu0 0.0
        %4722 = vmatprep.subr.mxu0 0.0
        %4723 = vmatpush1.msra.mxu0 0.0
        %4724 = vmatprep.subr.mxu0 0.0
        %4725 = vmatpush1.msra.mxu0 0.0
        %4726 = vmatprep.subr.mxu0 0.0
        %4727 = vmatpush1.msra.mxu0 0.0
        %4728 = vmatprep.subr.mxu0 0.0
        %4729 = vmatpush1.msra.mxu0 0.0
        %4730 = vmatprep.subr.mxu0 0.0
        %4731 = vmatpush1.msra.mxu0 0.0
        %4732 = vmatprep.subr.mxu0 0.0
        %4733 = vmatpush1.msra.mxu0 0.0
        %4734 = vmatprep.subr.mxu0 0.0
        %4735 = vmatpush1.msra.mxu0 0.0
        %4736 = vmatprep.subr.mxu0 0.0
        %4737 = vmatpush1.msra.mxu0 0.0
        %4738 = vmatprep.subr.mxu0 0.0
        %4739 = vmatpush1.msra.mxu0 0.0
        %4740 = vmatprep.subr.mxu0 0.0
        %4741 = vmatpush1.msra.mxu0 0.0
        %4742 = vmatprep.subr.mxu0 0.0
        %4743 = vmatpush1.msra.mxu0 0.0
        %4744 = vmatprep.subr.mxu0 0.0
        %4745 = vmatpush1.msra.mxu0 0.0
        %4746 = vmatprep.subr.mxu0 0.0
        %4747 = vmatpush1.msra.mxu0 0.0
        %4748 = vmatprep.subr.mxu0 0.0
        %4749 = vmatpush1.msra.mxu0 0.0
        %4750 = vmatprep.subr.mxu0 0.0
        %4751 = vmatpush1.msra.mxu0 0.0
        %4752 = vmatprep.subr.mxu0 0.0
        %4753 = vmatpush1.msra.mxu0 0.0
        %4754 = vmatprep.subr.mxu0 0.0
        %4755 = vmatpush1.msra.mxu0 0.0
        %4756 = vmatprep.subr.mxu0 0.0
        %4757 = vmatpush1.msra.mxu0 0.0
        %4758 = vmatprep.subr.mxu0 0.0
        %4759 = vmatpush1.msra.mxu0 0.0
        %4760 = vmatprep.subr.mxu0 0.0
        %4761 = vmatpush1.msra.mxu0 0.0
        %4762 = vmatprep.subr.mxu0 0.0
        %4763 = vmatpush1.msra.mxu0 0.0
        %4764 = vmatprep.subr.mxu0 0.0
        %4765 = vmatpush1.msra.mxu0 0.0
        %4766 = vmatprep.subr.mxu0 0.0
        %4767 = vmatpush1.msra.mxu0 0.0
        %4768 = vmatprep.subr.mxu0 0.0
        %4769 = vmatpush1.msra.mxu0 0.0
        %4770 = vmatprep.subr.mxu0 0.0
        %4771 = vmatpush1.msra.mxu0 0.0
        %4772 = vmatprep.mubr.f32.mxu0 0.0
        %4773 = vmatmul.mubr.f32.gmra.mrb[0].mxu0 %v4703
        %v4774 = vpop.f32.mrb[0].mxu0
        %v4775 = vadd.f32 0.0, %v4774
        %v4776 = vpop.f32.mrb[0].mxu0
        %4777 = vmatprep.mubr.f32.mxu0 0.0
        %4778 = vmatmul.mubr.f32.gmra.mrb[0].mxu0 %v4706
        %v4779 = vpop.f32.mrb[0].mxu0
        %v4780 = vadd.f32 0.0, %v4779
        %v4781 = vpop.f32.mrb[0].mxu0
        %4782 = vdwg.mxu0
        %v4783 = vadd.f32 %v4695, %v4775
        %v4784 = vadd.f32 %v4696, %v4780
        %s4785 = scalar_lea.vmem %s3, 544
        %v4786 = vld [vmem:[%s4785] sm:$0xff]
        %v4787 = vld [vmem:[%s4785 + $0x8] sm:$0xff]
        %v4788 = vld [vmem:[%s4785 + $0x10] sm:$0xff]
        %v4789 = vld [vmem:[%s4785 + $0x18] sm:$0xff]
        %v4791 = vsel %vm2879, %v3130, 0
        %v4794 = vsel %vm2879, %v3131, 0
        %4796 = vmatprep.subr.mxu0 0.0
        %4797 = vmatpush1.msra.mxu0 %v4786
        %4798 = vmatprep.subr.mxu0 0.0
        %4799 = vmatpush1.msra.mxu0 %v4787
        %4800 = vmatprep.subr.mxu0 0.0
        %4801 = vmatpush1.msra.mxu0 %v4788
        %4802 = vmatprep.subr.mxu0 0.0
        %4803 = vmatpush1.msra.mxu0 %v4789
        %4804 = vmatprep.subr.mxu0 0.0
        %4805 = vmatpush1.msra.mxu0 0.0
        %4806 = vmatprep.subr.mxu0 0.0
        %4807 = vmatpush1.msra.mxu0 0.0
        %4808 = vmatprep.subr.mxu0 0.0
        %4809 = vmatpush1.msra.mxu0 0.0
        %4810 = vmatprep.subr.mxu0 0.0
        %4811 = vmatpush1.msra.mxu0 0.0
        %4812 = vmatprep.subr.mxu0 0.0
        %4813 = vmatpush1.msra.mxu0 0.0
        %4814 = vmatprep.subr.mxu0 0.0
        %4815 = vmatpush1.msra.mxu0 0.0
        %4816 = vmatprep.subr.mxu0 0.0
        %4817 = vmatpush1.msra.mxu0 0.0
        %4818 = vmatprep.subr.mxu0 0.0
        %4819 = vmatpush1.msra.mxu0 0.0
        %4820 = vmatprep.subr.mxu0 0.0
        %4821 = vmatpush1.msra.mxu0 0.0
        %4822 = vmatprep.subr.mxu0 0.0
        %4823 = vmatpush1.msra.mxu0 0.0
        %4824 = vmatprep.subr.mxu0 0.0
        %4825 = vmatpush1.msra.mxu0 0.0
        %4826 = vmatprep.subr.mxu0 0.0
        %4827 = vmatpush1.msra.mxu0 0.0
        %4828 = vmatprep.subr.mxu0 0.0
        %4829 = vmatpush1.msra.mxu0 0.0
        %4830 = vmatprep.subr.mxu0 0.0
        %4831 = vmatpush1.msra.mxu0 0.0
        %4832 = vmatprep.subr.mxu0 0.0
        %4833 = vmatpush1.msra.mxu0 0.0
        %4834 = vmatprep.subr.mxu0 0.0
        %4835 = vmatpush1.msra.mxu0 0.0
        %4836 = vmatprep.subr.mxu0 0.0
        %4837 = vmatpush1.msra.mxu0 0.0
        %4838 = vmatprep.subr.mxu0 0.0
        %4839 = vmatpush1.msra.mxu0 0.0
        %4840 = vmatprep.subr.mxu0 0.0
        %4841 = vmatpush1.msra.mxu0 0.0
        %4842 = vmatprep.subr.mxu0 0.0
        %4843 = vmatpush1.msra.mxu0 0.0
        %4844 = vmatprep.subr.mxu0 0.0
        %4845 = vmatpush1.msra.mxu0 0.0
        %4846 = vmatprep.subr.mxu0 0.0
        %4847 = vmatpush1.msra.mxu0 0.0
        %4848 = vmatprep.subr.mxu0 0.0
        %4849 = vmatpush1.msra.mxu0 0.0
        %4850 = vmatprep.subr.mxu0 0.0
        %4851 = vmatpush1.msra.mxu0 0.0
        %4852 = vmatprep.subr.mxu0 0.0
        %4853 = vmatpush1.msra.mxu0 0.0
        %4854 = vmatprep.subr.mxu0 0.0
        %4855 = vmatpush1.msra.mxu0 0.0
        %4856 = vmatprep.subr.mxu0 0.0
        %4857 = vmatpush1.msra.mxu0 0.0
        %4858 = vmatprep.subr.mxu0 0.0
        %4859 = vmatpush1.msra.mxu0 0.0
        %4860 = vmatprep.mubr.f32.mxu0 0.0
        %4861 = vmatmul.mubr.f32.gmra.mrb[0].mxu0 %v4791
        %v4862 = vpop.f32.mrb[0].mxu0
        %v4863 = vadd.f32 0.0, %v4862
        %v4864 = vpop.f32.mrb[0].mxu0
        %4865 = vmatprep.mubr.f32.mxu0 0.0
        %4866 = vmatmul.mubr.f32.gmra.mrb[0].mxu0 %v4794
        %v4867 = vpop.f32.mrb[0].mxu0
        %v4868 = vadd.f32 0.0, %v4867
        %v4869 = vpop.f32.mrb[0].mxu0
        %4870 = vdwg.mxu0
        %v4871 = vadd.f32 %v4783, %v4863
        %v4872 = vadd.f32 %v4784, %v4868
        %s4873 = scalar_lea.vmem %s3, 576
        %v4874 = vld [vmem:[%s4873] sm:$0xff]
        %v4875 = vld [vmem:[%s4873 + $0x8] sm:$0xff]
        %v4876 = vld [vmem:[%s4873 + $0x10] sm:$0xff]
        %v4877 = vld [vmem:[%s4873 + $0x18] sm:$0xff]
        %v4879 = vsel %vm2879, %v3210, 0
        %v4882 = vsel %vm2879, %v3211, 0
        %4884 = vmatprep.subr.mxu0 0.0
        %4885 = vmatpush1.msra.mxu0 %v4874
        %4886 = vmatprep.subr.mxu0 0.0
        %4887 = vmatpush1.msra.mxu0 %v4875
        %4888 = vmatprep.subr.mxu0 0.0
        %4889 = vmatpush1.msra.mxu0 %v4876
        %4890 = vmatprep.subr.mxu0 0.0
        %4891 = vmatpush1.msra.mxu0 %v4877
        %4892 = vmatprep.subr.mxu0 0.0
        %4893 = vmatpush1.msra.mxu0 0.0
        %4894 = vmatprep.subr.mxu0 0.0
        %4895 = vmatpush1.msra.mxu0 0.0
        %4896 = vmatprep.subr.mxu0 0.0
        %4897 = vmatpush1.msra.mxu0 0.0
        %4898 = vmatprep.subr.mxu0 0.0
        %4899 = vmatpush1.msra.mxu0 0.0
        %4900 = vmatprep.subr.mxu0 0.0
        %4901 = vmatpush1.msra.mxu0 0.0
        %4902 = vmatprep.subr.mxu0 0.0
        %4903 = vmatpush1.msra.mxu0 0.0
        %4904 = vmatprep.subr.mxu0 0.0
        %4905 = vmatpush1.msra.mxu0 0.0
        %4906 = vmatprep.subr.mxu0 0.0
        %4907 = vmatpush1.msra.mxu0 0.0
        %4908 = vmatprep.subr.mxu0 0.0
        %4909 = vmatpush1.msra.mxu0 0.0
        %4910 = vmatprep.subr.mxu0 0.0
        %4911 = vmatpush1.msra.mxu0 0.0
        %4912 = vmatprep.subr.mxu0 0.0
        %4913 = vmatpush1.msra.mxu0 0.0
        %4914 = vmatprep.subr.mxu0 0.0
        %4915 = vmatpush1.msra.mxu0 0.0
        %4916 = vmatprep.subr.mxu0 0.0
        %4917 = vmatpush1.msra.mxu0 0.0
        %4918 = vmatprep.subr.mxu0 0.0
        %4919 = vmatpush1.msra.mxu0 0.0
        %4920 = vmatprep.subr.mxu0 0.0
        %4921 = vmatpush1.msra.mxu0 0.0
        %4922 = vmatprep.subr.mxu0 0.0
        %4923 = vmatpush1.msra.mxu0 0.0
        %4924 = vmatprep.subr.mxu0 0.0
        %4925 = vmatpush1.msra.mxu0 0.0
        %4926 = vmatprep.subr.mxu0 0.0
        %4927 = vmatpush1.msra.mxu0 0.0
        %4928 = vmatprep.subr.mxu0 0.0
        %4929 = vmatpush1.msra.mxu0 0.0
        %4930 = vmatprep.subr.mxu0 0.0
        %4931 = vmatpush1.msra.mxu0 0.0
        %4932 = vmatprep.subr.mxu0 0.0
        %4933 = vmatpush1.msra.mxu0 0.0
        %4934 = vmatprep.subr.mxu0 0.0
        %4935 = vmatpush1.msra.mxu0 0.0
        %4936 = vmatprep.subr.mxu0 0.0
        %4937 = vmatpush1.msra.mxu0 0.0
        %4938 = vmatprep.subr.mxu0 0.0
        %4939 = vmatpush1.msra.mxu0 0.0
        %4940 = vmatprep.subr.mxu0 0.0
        %4941 = vmatpush1.msra.mxu0 0.0
        %4942 = vmatprep.subr.mxu0 0.0
        %4943 = vmatpush1.msra.mxu0 0.0
        %4944 = vmatprep.subr.mxu0 0.0
        %4945 = vmatpush1.msra.mxu0 0.0
        %4946 = vmatprep.subr.mxu0 0.0
        %4947 = vmatpush1.msra.mxu0 0.0
        %4948 = vmatprep.mubr.f32.mxu0 0.0
        %4949 = vmatmul.mubr.f32.gmra.mrb[0].mxu0 %v4879
        %v4950 = vpop.f32.mrb[0].mxu0
        %v4951 = vadd.f32 0.0, %v4950
        %v4952 = vpop.f32.mrb[0].mxu0
        %4953 = vmatprep.mubr.f32.mxu0 0.0
        %4954 = vmatmul.mubr.f32.gmra.mrb[0].mxu0 %v4882
        %v4955 = vpop.f32.mrb[0].mxu0
        %v4956 = vadd.f32 0.0, %v4955
        %v4957 = vpop.f32.mrb[0].mxu0
        %4958 = vdwg.mxu0
        %v4959 = vadd.f32 %v4871, %v4951
        %v4960 = vadd.f32 %v4872, %v4956
        %s4961 = scalar_lea.vmem %s3, 608
        %v4962 = vld [vmem:[%s4961] sm:$0xff]
        %v4963 = vld [vmem:[%s4961 + $0x8] sm:$0xff]
        %v4964 = vld [vmem:[%s4961 + $0x10] sm:$0xff]
        %v4965 = vld [vmem:[%s4961 + $0x18] sm:$0xff]
        %v4967 = vsel %vm2879, %v3290, 0
        %v4970 = vsel %vm2879, %v3291, 0
        %4972 = vmatprep.subr.mxu0 0.0
        %4973 = vmatpush1.msra.mxu0 %v4962
        %4974 = vmatprep.subr.mxu0 0.0
        %4975 = vmatpush1.msra.mxu0 %v4963
        %4976 = vmatprep.subr.mxu0 0.0
        %4977 = vmatpush1.msra.mxu0 %v4964
        %4978 = vmatprep.subr.mxu0 0.0
        %4979 = vmatpush1.msra.mxu0 %v4965
        %4980 = vmatprep.subr.mxu0 0.0
        %4981 = vmatpush1.msra.mxu0 0.0
        %4982 = vmatprep.subr.mxu0 0.0
        %4983 = vmatpush1.msra.mxu0 0.0
        %4984 = vmatprep.subr.mxu0 0.0
        %4985 = vmatpush1.msra.mxu0 0.0
        %4986 = vmatprep.subr.mxu0 0.0
        %4987 = vmatpush1.msra.mxu0 0.0
        %4988 = vmatprep.subr.mxu0 0.0
        %4989 = vmatpush1.msra.mxu0 0.0
        %4990 = vmatprep.subr.mxu0 0.0
        %4991 = vmatpush1.msra.mxu0 0.0
        %4992 = vmatprep.subr.mxu0 0.0
        %4993 = vmatpush1.msra.mxu0 0.0
        %4994 = vmatprep.subr.mxu0 0.0
        %4995 = vmatpush1.msra.mxu0 0.0
        %4996 = vmatprep.subr.mxu0 0.0
        %4997 = vmatpush1.msra.mxu0 0.0
        %4998 = vmatprep.subr.mxu0 0.0
        %4999 = vmatpush1.msra.mxu0 0.0
        %5000 = vmatprep.subr.mxu0 0.0
        %5001 = vmatpush1.msra.mxu0 0.0
        %5002 = vmatprep.subr.mxu0 0.0
        %5003 = vmatpush1.msra.mxu0 0.0
        %5004 = vmatprep.subr.mxu0 0.0
        %5005 = vmatpush1.msra.mxu0 0.0
        %5006 = vmatprep.subr.mxu0 0.0
        %5007 = vmatpush1.msra.mxu0 0.0
        %5008 = vmatprep.subr.mxu0 0.0
        %5009 = vmatpush1.msra.mxu0 0.0
        %5010 = vmatprep.subr.mxu0 0.0
        %5011 = vmatpush1.msra.mxu0 0.0
        %5012 = vmatprep.subr.mxu0 0.0
        %5013 = vmatpush1.msra.mxu0 0.0
        %5014 = vmatprep.subr.mxu0 0.0
        %5015 = vmatpush1.msra.mxu0 0.0
        %5016 = vmatprep.subr.mxu0 0.0
        %5017 = vmatpush1.msra.mxu0 0.0
        %5018 = vmatprep.subr.mxu0 0.0
        %5019 = vmatpush1.msra.mxu0 0.0
        %5020 = vmatprep.subr.mxu0 0.0
        %5021 = vmatpush1.msra.mxu0 0.0
        %5022 = vmatprep.subr.mxu0 0.0
        %5023 = vmatpush1.msra.mxu0 0.0
        %5024 = vmatprep.subr.mxu0 0.0
        %5025 = vmatpush1.msra.mxu0 0.0
        %5026 = vmatprep.subr.mxu0 0.0
        %5027 = vmatpush1.msra.mxu0 0.0
        %5028 = vmatprep.subr.mxu0 0.0
        %5029 = vmatpush1.msra.mxu0 0.0
        %5030 = vmatprep.subr.mxu0 0.0
        %5031 = vmatpush1.msra.mxu0 0.0
        %5032 = vmatprep.subr.mxu0 0.0
        %5033 = vmatpush1.msra.mxu0 0.0
        %5034 = vmatprep.subr.mxu0 0.0
        %5035 = vmatpush1.msra.mxu0 0.0
        %5036 = vmatprep.mubr.f32.mxu0 0.0
        %5037 = vmatmul.mubr.f32.gmra.mrb[0].mxu0 %v4967
        %v5038 = vpop.f32.mrb[0].mxu0
        %v5039 = vadd.f32 0.0, %v5038
        %v5040 = vpop.f32.mrb[0].mxu0
        %5041 = vmatprep.mubr.f32.mxu0 0.0
        %5042 = vmatmul.mubr.f32.gmra.mrb[0].mxu0 %v4970
        %v5043 = vpop.f32.mrb[0].mxu0
        %v5044 = vadd.f32 0.0, %v5043
        %v5045 = vpop.f32.mrb[0].mxu0
        %5046 = vdwg.mxu0
        %v5047 = vadd.f32 %v4959, %v5039
        %v5048 = vadd.f32 %v4960, %v5044
        %s5049 = scalar_lea.vmem %s3, 640
        %v5050 = vld [vmem:[%s5049] sm:$0xff]
        %v5051 = vld [vmem:[%s5049 + $0x8] sm:$0xff]
        %v5052 = vld [vmem:[%s5049 + $0x10] sm:$0xff]
        %v5053 = vld [vmem:[%s5049 + $0x18] sm:$0xff]
        %v5055 = vsel %vm2879, %v2972, 0
        %v5058 = vsel %vm2879, %v2973, 0
        %5060 = vmatprep.subr.mxu0 0.0
        %5061 = vmatpush1.msra.mxu0 %v5050
        %5062 = vmatprep.subr.mxu0 0.0
        %5063 = vmatpush1.msra.mxu0 %v5051
        %5064 = vmatprep.subr.mxu0 0.0
        %5065 = vmatpush1.msra.mxu0 %v5052
        %5066 = vmatprep.subr.mxu0 0.0
        %5067 = vmatpush1.msra.mxu0 %v5053
        %5068 = vmatprep.subr.mxu0 0.0
        %5069 = vmatpush1.msra.mxu0 0.0
        %5070 = vmatprep.subr.mxu0 0.0
        %5071 = vmatpush1.msra.mxu0 0.0
        %5072 = vmatprep.subr.mxu0 0.0
        %5073 = vmatpush1.msra.mxu0 0.0
        %5074 = vmatprep.subr.mxu0 0.0
        %5075 = vmatpush1.msra.mxu0 0.0
        %5076 = vmatprep.subr.mxu0 0.0
        %5077 = vmatpush1.msra.mxu0 0.0
        %5078 = vmatprep.subr.mxu0 0.0
        %5079 = vmatpush1.msra.mxu0 0.0
        %5080 = vmatprep.subr.mxu0 0.0
        %5081 = vmatpush1.msra.mxu0 0.0
        %5082 = vmatprep.subr.mxu0 0.0
        %5083 = vmatpush1.msra.mxu0 0.0
        %5084 = vmatprep.subr.mxu0 0.0
        %5085 = vmatpush1.msra.mxu0 0.0
        %5086 = vmatprep.subr.mxu0 0.0
        %5087 = vmatpush1.msra.mxu0 0.0
        %5088 = vmatprep.subr.mxu0 0.0
        %5089 = vmatpush1.msra.mxu0 0.0
        %5090 = vmatprep.subr.mxu0 0.0
        %5091 = vmatpush1.msra.mxu0 0.0
        %5092 = vmatprep.subr.mxu0 0.0
        %5093 = vmatpush1.msra.mxu0 0.0
        %5094 = vmatprep.subr.mxu0 0.0
        %5095 = vmatpush1.msra.mxu0 0.0
        %5096 = vmatprep.subr.mxu0 0.0
        %5097 = vmatpush1.msra.mxu0 0.0
        %5098 = vmatprep.subr.mxu0 0.0
        %5099 = vmatpush1.msra.mxu0 0.0
        %5100 = vmatprep.subr.mxu0 0.0
        %5101 = vmatpush1.msra.mxu0 0.0
        %5102 = vmatprep.subr.mxu0 0.0
        %5103 = vmatpush1.msra.mxu0 0.0
        %5104 = vmatprep.subr.mxu0 0.0
        %5105 = vmatpush1.msra.mxu0 0.0
        %5106 = vmatprep.subr.mxu0 0.0
        %5107 = vmatpush1.msra.mxu0 0.0
        %5108 = vmatprep.subr.mxu0 0.0
        %5109 = vmatpush1.msra.mxu0 0.0
        %5110 = vmatprep.subr.mxu0 0.0
        %5111 = vmatpush1.msra.mxu0 0.0
        %5112 = vmatprep.subr.mxu0 0.0
        %5113 = vmatpush1.msra.mxu0 0.0
        %5114 = vmatprep.subr.mxu0 0.0
        %5115 = vmatpush1.msra.mxu0 0.0
        %5116 = vmatprep.subr.mxu0 0.0
        %5117 = vmatpush1.msra.mxu0 0.0
        %5118 = vmatprep.subr.mxu0 0.0
        %5119 = vmatpush1.msra.mxu0 0.0
        %5120 = vmatprep.subr.mxu0 0.0
        %5121 = vmatpush1.msra.mxu0 0.0
        %5122 = vmatprep.subr.mxu0 0.0
        %5123 = vmatpush1.msra.mxu0 0.0
        %5124 = vmatprep.mubr.f32.mxu0 0.0
        %5125 = vmatmul.mubr.f32.gmra.mrb[0].mxu0 %v5055
        %v5126 = vpop.f32.mrb[0].mxu0
        %v5127 = vadd.f32 0.0, %v5126
        %v5128 = vpop.f32.mrb[0].mxu0
        %5129 = vmatprep.mubr.f32.mxu0 0.0
        %5130 = vmatmul.mubr.f32.gmra.mrb[0].mxu0 %v5058
        %v5131 = vpop.f32.mrb[0].mxu0
        %v5132 = vadd.f32 0.0, %v5131
        %v5133 = vpop.f32.mrb[0].mxu0
        %5134 = vdwg.mxu0
        %v5135 = vadd.f32 %v5047, %v5127
        %v5136 = vadd.f32 %v5048, %v5132
        %s5137 = scalar_lea.vmem %s3, 672
        %v5138 = vld [vmem:[%s5137] sm:$0xff]
        %v5139 = vld [vmem:[%s5137 + $0x8] sm:$0xff]
        %v5140 = vld [vmem:[%s5137 + $0x10] sm:$0xff]
        %v5141 = vld [vmem:[%s5137 + $0x18] sm:$0xff]
        %v5143 = vsel %vm2879, %v3052, 0
        %v5146 = vsel %vm2879, %v3053, 0
        %5148 = vmatprep.subr.mxu0 0.0
        %5149 = vmatpush1.msra.mxu0 %v5138
        %5150 = vmatprep.subr.mxu0 0.0
        %5151 = vmatpush1.msra.mxu0 %v5139
        %5152 = vmatprep.subr.mxu0 0.0
        %5153 = vmatpush1.msra.mxu0 %v5140
        %5154 = vmatprep.subr.mxu0 0.0
        %5155 = vmatpush1.msra.mxu0 %v5141
        %5156 = vmatprep.subr.mxu0 0.0
        %5157 = vmatpush1.msra.mxu0 0.0
        %5158 = vmatprep.subr.mxu0 0.0
        %5159 = vmatpush1.msra.mxu0 0.0
        %5160 = vmatprep.subr.mxu0 0.0
        %5161 = vmatpush1.msra.mxu0 0.0
        %5162 = vmatprep.subr.mxu0 0.0
        %5163 = vmatpush1.msra.mxu0 0.0
        %5164 = vmatprep.subr.mxu0 0.0
        %5165 = vmatpush1.msra.mxu0 0.0
        %5166 = vmatprep.subr.mxu0 0.0
        %5167 = vmatpush1.msra.mxu0 0.0
        %5168 = vmatprep.subr.mxu0 0.0
        %5169 = vmatpush1.msra.mxu0 0.0
        %5170 = vmatprep.subr.mxu0 0.0
        %5171 = vmatpush1.msra.mxu0 0.0
        %5172 = vmatprep.subr.mxu0 0.0
        %5173 = vmatpush1.msra.mxu0 0.0
        %5174 = vmatprep.subr.mxu0 0.0
        %5175 = vmatpush1.msra.mxu0 0.0
        %5176 = vmatprep.subr.mxu0 0.0
        %5177 = vmatpush1.msra.mxu0 0.0
        %5178 = vmatprep.subr.mxu0 0.0
        %5179 = vmatpush1.msra.mxu0 0.0
        %5180 = vmatprep.subr.mxu0 0.0
        %5181 = vmatpush1.msra.mxu0 0.0
        %5182 = vmatprep.subr.mxu0 0.0
        %5183 = vmatpush1.msra.mxu0 0.0
        %5184 = vmatprep.subr.mxu0 0.0
        %5185 = vmatpush1.msra.mxu0 0.0
        %5186 = vmatprep.subr.mxu0 0.0
        %5187 = vmatpush1.msra.mxu0 0.0
        %5188 = vmatprep.subr.mxu0 0.0
        %5189 = vmatpush1.msra.mxu0 0.0
        %5190 = vmatprep.subr.mxu0 0.0
        %5191 = vmatpush1.msra.mxu0 0.0
        %5192 = vmatprep.subr.mxu0 0.0
        %5193 = vmatpush1.msra.mxu0 0.0
        %5194 = vmatprep.subr.mxu0 0.0
        %5195 = vmatpush1.msra.mxu0 0.0
        %5196 = vmatprep.subr.mxu0 0.0
        %5197 = vmatpush1.msra.mxu0 0.0
        %5198 = vmatprep.subr.mxu0 0.0
        %5199 = vmatpush1.msra.mxu0 0.0
        %5200 = vmatprep.subr.mxu0 0.0
        %5201 = vmatpush1.msra.mxu0 0.0
        %5202 = vmatprep.subr.mxu0 0.0
        %5203 = vmatpush1.msra.mxu0 0.0
        %5204 = vmatprep.subr.mxu0 0.0
        %5205 = vmatpush1.msra.mxu0 0.0
        %5206 = vmatprep.subr.mxu0 0.0
        %5207 = vmatpush1.msra.mxu0 0.0
        %5208 = vmatprep.subr.mxu0 0.0
        %5209 = vmatpush1.msra.mxu0 0.0
        %5210 = vmatprep.subr.mxu0 0.0
        %5211 = vmatpush1.msra.mxu0 0.0
        %5212 = vmatprep.mubr.f32.mxu0 0.0
        %5213 = vmatmul.mubr.f32.gmra.mrb[0].mxu0 %v5143
        %v5214 = vpop.f32.mrb[0].mxu0
        %v5215 = vadd.f32 0.0, %v5214
        %v5216 = vpop.f32.mrb[0].mxu0
        %5217 = vmatprep.mubr.f32.mxu0 0.0
        %5218 = vmatmul.mubr.f32.gmra.mrb[0].mxu0 %v5146
        %v5219 = vpop.f32.mrb[0].mxu0
        %v5220 = vadd.f32 0.0, %v5219
        %v5221 = vpop.f32.mrb[0].mxu0
        %5222 = vdwg.mxu0
        %v5223 = vadd.f32 %v5135, %v5215
        %v5224 = vadd.f32 %v5136, %v5220
        %s5225 = scalar_lea.vmem %s3, 704
        %v5226 = vld [vmem:[%s5225] sm:$0xff]
        %v5227 = vld [vmem:[%s5225 + $0x8] sm:$0xff]
        %v5228 = vld [vmem:[%s5225 + $0x10] sm:$0xff]
        %v5229 = vld [vmem:[%s5225 + $0x18] sm:$0xff]
        %v5231 = vsel %vm2879, %v3132, 0
        %v5234 = vsel %vm2879, %v3133, 0
        %5236 = vmatprep.subr.mxu0 0.0
        %5237 = vmatpush1.msra.mxu0 %v5226
        %5238 = vmatprep.subr.mxu0 0.0
        %5239 = vmatpush1.msra.mxu0 %v5227
        %5240 = vmatprep.subr.mxu0 0.0
        %5241 = vmatpush1.msra.mxu0 %v5228
        %5242 = vmatprep.subr.mxu0 0.0
        %5243 = vmatpush1.msra.mxu0 %v5229
        %5244 = vmatprep.subr.mxu0 0.0
        %5245 = vmatpush1.msra.mxu0 0.0
        %5246 = vmatprep.subr.mxu0 0.0
        %5247 = vmatpush1.msra.mxu0 0.0
        %5248 = vmatprep.subr.mxu0 0.0
        %5249 = vmatpush1.msra.mxu0 0.0
        %5250 = vmatprep.subr.mxu0 0.0
        %5251 = vmatpush1.msra.mxu0 0.0
        %5252 = vmatprep.subr.mxu0 0.0
        %5253 = vmatpush1.msra.mxu0 0.0
        %5254 = vmatprep.subr.mxu0 0.0
        %5255 = vmatpush1.msra.mxu0 0.0
        %5256 = vmatprep.subr.mxu0 0.0
        %5257 = vmatpush1.msra.mxu0 0.0
        %5258 = vmatprep.subr.mxu0 0.0
        %5259 = vmatpush1.msra.mxu0 0.0
        %5260 = vmatprep.subr.mxu0 0.0
        %5261 = vmatpush1.msra.mxu0 0.0
        %5262 = vmatprep.subr.mxu0 0.0
        %5263 = vmatpush1.msra.mxu0 0.0
        %5264 = vmatprep.subr.mxu0 0.0
        %5265 = vmatpush1.msra.mxu0 0.0
        %5266 = vmatprep.subr.mxu0 0.0
        %5267 = vmatpush1.msra.mxu0 0.0
        %5268 = vmatprep.subr.mxu0 0.0
        %5269 = vmatpush1.msra.mxu0 0.0
        %5270 = vmatprep.subr.mxu0 0.0
        %5271 = vmatpush1.msra.mxu0 0.0
        %5272 = vmatprep.subr.mxu0 0.0
        %5273 = vmatpush1.msra.mxu0 0.0
        %5274 = vmatprep.subr.mxu0 0.0
        %5275 = vmatpush1.msra.mxu0 0.0
        %5276 = vmatprep.subr.mxu0 0.0
        %5277 = vmatpush1.msra.mxu0 0.0
        %5278 = vmatprep.subr.mxu0 0.0
        %5279 = vmatpush1.msra.mxu0 0.0
        %5280 = vmatprep.subr.mxu0 0.0
        %5281 = vmatpush1.msra.mxu0 0.0
        %5282 = vmatprep.subr.mxu0 0.0
        %5283 = vmatpush1.msra.mxu0 0.0
        %5284 = vmatprep.subr.mxu0 0.0
        %5285 = vmatpush1.msra.mxu0 0.0
        %5286 = vmatprep.subr.mxu0 0.0
        %5287 = vmatpush1.msra.mxu0 0.0
        %5288 = vmatprep.subr.mxu0 0.0
        %5289 = vmatpush1.msra.mxu0 0.0
        %5290 = vmatprep.subr.mxu0 0.0
        %5291 = vmatpush1.msra.mxu0 0.0
        %5292 = vmatprep.subr.mxu0 0.0
        %5293 = vmatpush1.msra.mxu0 0.0
        %5294 = vmatprep.subr.mxu0 0.0
        %5295 = vmatpush1.msra.mxu0 0.0
        %5296 = vmatprep.subr.mxu0 0.0
        %5297 = vmatpush1.msra.mxu0 0.0
        %5298 = vmatprep.subr.mxu0 0.0
        %5299 = vmatpush1.msra.mxu0 0.0
        %5300 = vmatprep.mubr.f32.mxu0 0.0
        %5301 = vmatmul.mubr.f32.gmra.mrb[0].mxu0 %v5231
        %v5302 = vpop.f32.mrb[0].mxu0
        %v5303 = vadd.f32 0.0, %v5302
        %v5304 = vpop.f32.mrb[0].mxu0
        %5305 = vmatprep.mubr.f32.mxu0 0.0
        %5306 = vmatmul.mubr.f32.gmra.mrb[0].mxu0 %v5234
        %v5307 = vpop.f32.mrb[0].mxu0
        %v5308 = vadd.f32 0.0, %v5307
        %v5309 = vpop.f32.mrb[0].mxu0
        %5310 = vdwg.mxu0
        %v5311 = vadd.f32 %v5223, %v5303
        %v5312 = vadd.f32 %v5224, %v5308
        %s5313 = scalar_lea.vmem %s3, 736
        %v5314 = vld [vmem:[%s5313] sm:$0xff]
        %v5315 = vld [vmem:[%s5313 + $0x8] sm:$0xff]
        %v5316 = vld [vmem:[%s5313 + $0x10] sm:$0xff]
        %v5317 = vld [vmem:[%s5313 + $0x18] sm:$0xff]
        %v5319 = vsel %vm2879, %v3212, 0
        %v5322 = vsel %vm2879, %v3213, 0
        %5324 = vmatprep.subr.mxu0 0.0
        %5325 = vmatpush1.msra.mxu0 %v5314
        %5326 = vmatprep.subr.mxu0 0.0
        %5327 = vmatpush1.msra.mxu0 %v5315
        %5328 = vmatprep.subr.mxu0 0.0
        %5329 = vmatpush1.msra.mxu0 %v5316
        %5330 = vmatprep.subr.mxu0 0.0
        %5331 = vmatpush1.msra.mxu0 %v5317
        %5332 = vmatprep.subr.mxu0 0.0
        %5333 = vmatpush1.msra.mxu0 0.0
        %5334 = vmatprep.subr.mxu0 0.0
        %5335 = vmatpush1.msra.mxu0 0.0
        %5336 = vmatprep.subr.mxu0 0.0
        %5337 = vmatpush1.msra.mxu0 0.0
        %5338 = vmatprep.subr.mxu0 0.0
        %5339 = vmatpush1.msra.mxu0 0.0
        %5340 = vmatprep.subr.mxu0 0.0
        %5341 = vmatpush1.msra.mxu0 0.0
        %5342 = vmatprep.subr.mxu0 0.0
        %5343 = vmatpush1.msra.mxu0 0.0
        %5344 = vmatprep.subr.mxu0 0.0
        %5345 = vmatpush1.msra.mxu0 0.0
        %5346 = vmatprep.subr.mxu0 0.0
        %5347 = vmatpush1.msra.mxu0 0.0
        %5348 = vmatprep.subr.mxu0 0.0
        %5349 = vmatpush1.msra.mxu0 0.0
        %5350 = vmatprep.subr.mxu0 0.0
        %5351 = vmatpush1.msra.mxu0 0.0
        %5352 = vmatprep.subr.mxu0 0.0
        %5353 = vmatpush1.msra.mxu0 0.0
        %5354 = vmatprep.subr.mxu0 0.0
        %5355 = vmatpush1.msra.mxu0 0.0
        %5356 = vmatprep.subr.mxu0 0.0
        %5357 = vmatpush1.msra.mxu0 0.0
        %5358 = vmatprep.subr.mxu0 0.0
        %5359 = vmatpush1.msra.mxu0 0.0
        %5360 = vmatprep.subr.mxu0 0.0
        %5361 = vmatpush1.msra.mxu0 0.0
        %5362 = vmatprep.subr.mxu0 0.0
        %5363 = vmatpush1.msra.mxu0 0.0
        %5364 = vmatprep.subr.mxu0 0.0
        %5365 = vmatpush1.msra.mxu0 0.0
        %5366 = vmatprep.subr.mxu0 0.0
        %5367 = vmatpush1.msra.mxu0 0.0
        %5368 = vmatprep.subr.mxu0 0.0
        %5369 = vmatpush1.msra.mxu0 0.0
        %5370 = vmatprep.subr.mxu0 0.0
        %5371 = vmatpush1.msra.mxu0 0.0
        %5372 = vmatprep.subr.mxu0 0.0
        %5373 = vmatpush1.msra.mxu0 0.0
        %5374 = vmatprep.subr.mxu0 0.0
        %5375 = vmatpush1.msra.mxu0 0.0
        %5376 = vmatprep.subr.mxu0 0.0
        %5377 = vmatpush1.msra.mxu0 0.0
        %5378 = vmatprep.subr.mxu0 0.0
        %5379 = vmatpush1.msra.mxu0 0.0
        %5380 = vmatprep.subr.mxu0 0.0
        %5381 = vmatpush1.msra.mxu0 0.0
        %5382 = vmatprep.subr.mxu0 0.0
        %5383 = vmatpush1.msra.mxu0 0.0
        %5384 = vmatprep.subr.mxu0 0.0
        %5385 = vmatpush1.msra.mxu0 0.0
        %5386 = vmatprep.subr.mxu0 0.0
        %5387 = vmatpush1.msra.mxu0 0.0
        %5388 = vmatprep.mubr.f32.mxu0 0.0
        %5389 = vmatmul.mubr.f32.gmra.mrb[0].mxu0 %v5319
        %v5390 = vpop.f32.mrb[0].mxu0
        %v5391 = vadd.f32 0.0, %v5390
        %v5392 = vpop.f32.mrb[0].mxu0
        %5393 = vmatprep.mubr.f32.mxu0 0.0
        %5394 = vmatmul.mubr.f32.gmra.mrb[0].mxu0 %v5322
        %v5395 = vpop.f32.mrb[0].mxu0
        %v5396 = vadd.f32 0.0, %v5395
        %v5397 = vpop.f32.mrb[0].mxu0
        %5398 = vdwg.mxu0
        %v5399 = vadd.f32 %v5311, %v5391
        %v5400 = vadd.f32 %v5312, %v5396
        %s5401 = scalar_lea.vmem %s3, 768
        %v5402 = vld [vmem:[%s5401] sm:$0xff]
        %v5403 = vld [vmem:[%s5401 + $0x8] sm:$0xff]
        %v5404 = vld [vmem:[%s5401 + $0x10] sm:$0xff]
        %v5405 = vld [vmem:[%s5401 + $0x18] sm:$0xff]
        %v5407 = vsel %vm2879, %v3292, 0
        %v5410 = vsel %vm2879, %v3293, 0
        %5412 = vmatprep.subr.mxu0 0.0
        %5413 = vmatpush1.msra.mxu0 %v5402
        %5414 = vmatprep.subr.mxu0 0.0
        %5415 = vmatpush1.msra.mxu0 %v5403
        %5416 = vmatprep.subr.mxu0 0.0
        %5417 = vmatpush1.msra.mxu0 %v5404
        %5418 = vmatprep.subr.mxu0 0.0
        %5419 = vmatpush1.msra.mxu0 %v5405
        %5420 = vmatprep.subr.mxu0 0.0
        %5421 = vmatpush1.msra.mxu0 0.0
        %5422 = vmatprep.subr.mxu0 0.0
        %5423 = vmatpush1.msra.mxu0 0.0
        %5424 = vmatprep.subr.mxu0 0.0
        %5425 = vmatpush1.msra.mxu0 0.0
        %5426 = vmatprep.subr.mxu0 0.0
        %5427 = vmatpush1.msra.mxu0 0.0
        %5428 = vmatprep.subr.mxu0 0.0
        %5429 = vmatpush1.msra.mxu0 0.0
        %5430 = vmatprep.subr.mxu0 0.0
        %5431 = vmatpush1.msra.mxu0 0.0
        %5432 = vmatprep.subr.mxu0 0.0
        %5433 = vmatpush1.msra.mxu0 0.0
        %5434 = vmatprep.subr.mxu0 0.0
        %5435 = vmatpush1.msra.mxu0 0.0
        %5436 = vmatprep.subr.mxu0 0.0
        %5437 = vmatpush1.msra.mxu0 0.0
        %5438 = vmatprep.subr.mxu0 0.0
        %5439 = vmatpush1.msra.mxu0 0.0
        %5440 = vmatprep.subr.mxu0 0.0
        %5441 = vmatpush1.msra.mxu0 0.0
        %5442 = vmatprep.subr.mxu0 0.0
        %5443 = vmatpush1.msra.mxu0 0.0
        %5444 = vmatprep.subr.mxu0 0.0
        %5445 = vmatpush1.msra.mxu0 0.0
        %5446 = vmatprep.subr.mxu0 0.0
        %5447 = vmatpush1.msra.mxu0 0.0
        %5448 = vmatprep.subr.mxu0 0.0
        %5449 = vmatpush1.msra.mxu0 0.0
        %5450 = vmatprep.subr.mxu0 0.0
        %5451 = vmatpush1.msra.mxu0 0.0
        %5452 = vmatprep.subr.mxu0 0.0
        %5453 = vmatpush1.msra.mxu0 0.0
        %5454 = vmatprep.subr.mxu0 0.0
        %5455 = vmatpush1.msra.mxu0 0.0
        %5456 = vmatprep.subr.mxu0 0.0
        %5457 = vmatpush1.msra.mxu0 0.0
        %5458 = vmatprep.subr.mxu0 0.0
        %5459 = vmatpush1.msra.mxu0 0.0
        %5460 = vmatprep.subr.mxu0 0.0
        %5461 = vmatpush1.msra.mxu0 0.0
        %5462 = vmatprep.subr.mxu0 0.0
        %5463 = vmatpush1.msra.mxu0 0.0
        %5464 = vmatprep.subr.mxu0 0.0
        %5465 = vmatpush1.msra.mxu0 0.0
        %5466 = vmatprep.subr.mxu0 0.0
        %5467 = vmatpush1.msra.mxu0 0.0
        %5468 = vmatprep.subr.mxu0 0.0
        %5469 = vmatpush1.msra.mxu0 0.0
        %5470 = vmatprep.subr.mxu0 0.0
        %5471 = vmatpush1.msra.mxu0 0.0
        %5472 = vmatprep.subr.mxu0 0.0
        %5473 = vmatpush1.msra.mxu0 0.0
        %5474 = vmatprep.subr.mxu0 0.0
        %5475 = vmatpush1.msra.mxu0 0.0
        %5476 = vmatprep.mubr.f32.mxu0 0.0
        %5477 = vmatmul.mubr.f32.gmra.mrb[0].mxu0 %v5407
        %v5478 = vpop.f32.mrb[0].mxu0
        %v5479 = vadd.f32 0.0, %v5478
        %v5480 = vpop.f32.mrb[0].mxu0
        %5481 = vmatprep.mubr.f32.mxu0 0.0
        %5482 = vmatmul.mubr.f32.gmra.mrb[0].mxu0 %v5410
        %v5483 = vpop.f32.mrb[0].mxu0
        %v5484 = vadd.f32 0.0, %v5483
        %v5485 = vpop.f32.mrb[0].mxu0
        %5486 = vdwg.mxu0
        %v5487 = vadd.f32 %v5399, %v5479
        %v5488 = vadd.f32 %v5400, %v5484
        %v5489 = vld [vmem:[%s4] sm:$0x1]
        %v5491 = vlaneseq
        %v5492 = vshrl.u32 %v5491, 7
        %v5493 = vsub.s32 0, %v5492
        %v5494 = vrot.slane %v5489, %v5493
        %v5496 = vadd.f32 %v5487, %v5494
        %v5497 = vadd.f32 %v5488, %v5494
        %5498 = vst.msk [vmem:[%s244] sm:$0xff] %vm252, %v5496
        %5499 = vst.msk [vmem:[%s244 + $0x8] sm:$0xff] %vm252, %v5497
        %s5500 = sand.u32 %s159, 1
        %s5501 = scalar_lea.sflag [#allocation5], %s5500
        %s5502 = sand.u32 %s159, 1
        %s5503 = smul.addr %s5502, 16
        %s5504 = scalar_lea.vmem [#allocation4], %s5503
        // Predicated region
        $region45: #{tpu_custom_call.1} parent=43 // pred_check
          %p5505 = pneg %p169
        $region46: #{tpu_custom_call.1} parent=43 // pred_check_branch
          %5507 = sbr.rel (%p5505) target = $region48
        $region47: #{tpu_custom_call.1} parent=43 // pred_region
          %s5509 = ssub.s32 256, 256
          %5510 = vsyncadd %s5501, %s5509
          %s5511 = smul.addr %s20, 2
          %s5512 = smul.addr %s5511, 128
          %s5513 = scalar_lea.hbm %s6, %s5512
          %s5514 = sshll.u32 %s5504, 4
          %s5515 = int_to_ptr.vmem [resolvable:$true] %s5514
          %5520 = dma.vmem_to_hbm [thread:$0]  %s5515, 256, %s5513, %s5501, 128, 128, 8
        $region48: #{tpu_custom_call.1} parent=43 // pred_fallthru
          _
      $region44: #{tpu_custom_call.1} parent=5 // pred_fallthru
        _
      %p5521 = scmp.le.s32.totalorder 2, %s15
      // Predicated region
      $region49: #{tpu_custom_call.1} parent=5 // pred_check
        %p5522 = pneg %p5521
      $region50: #{tpu_custom_call.1} parent=5 // pred_check_branch
        %5524 = sbr.rel (%p5522) target = $region52
      $region51: #{tpu_custom_call.1} parent=5 // pred_region
        %s5525 = ssub.s32 %s15, 2
        // Predicated region
        $region53: #{tpu_custom_call.1} parent=51 // pred_check
          %p5526 = pneg %p175
        $region54: #{tpu_custom_call.1} parent=51 // pred_check_branch
          %5528 = sbr.rel (%p5526) target = $region56
        $region55: #{tpu_custom_call.1} parent=51 // pred_region
          %s5529 = sand.u32 %s160, 1
          %s5530 = scalar_lea.sflag [#allocation5], %s5529
          %s5531 = sand.u32 %s160, 1
          %s5532 = smul.addr %s5531, 16
          %s5533 = scalar_lea.vmem [#allocation4], %s5532
          %5534 = dma.done %s5530, 256
        $region56: #{tpu_custom_call.1} parent=51 // pred_fallthru
          _
      $region52: #{tpu_custom_call.1} parent=5 // pred_fallthru
        _
    $region6: #{tpu_custom_call.1} parent=1 // loop_footer
      %s19 = sadd.s32 1, %s15
    $region7: #{tpu_custom_call.1} parent=1 // loop_footer_branch
      %14 = sbr.rel target = $region3
    $region8: #{tpu_custom_call.1} parent=1 // loop_exit
      _
    %5535 = vsyncpa [#allocation5], 1
    %s5536 = scalar_lea.sflag [#allocation5], 1
    %5537 = vsyncpa %s5536, 1

</llo_original>
